<compile_context>
chip_gen: v7x
topology: tpu7x:2x2x1
jax: 0.10.0
libtpu: 0.0.40
codegen_flags: <defaults>
</compile_context>

<pallas_src>
import jax
import jax.numpy as jnp
from jax import lax
from jax.experimental import pallas as pl
from jax.experimental.pallas import tpu as pltpu


def _down_double_conv_kernel(x_ref, w1_ref, b1_ref, w2_ref, b2_ref, o_ref,
                             x1_ref, h1_ref):
    """One grid step = one batch element; all intermediates stay in VMEM.

    x_ref:  (1, 4, H, W, Cin)   four 2x2 max-pool quadrants of the input
    w1_ref: (3, 3, Cin, Cmid)   stage-1 conv weights with BN scale folded in
    b1_ref: (1, Cmid)           stage-1 folded bias (conv bias + BN)
    w2_ref: (3, 3, Cmid, Cout)  stage-2 conv weights with BN scale folded in
    b2_ref: (1, Cout)           stage-2 folded bias
    o_ref:  (1, H, W, Cout)     output tile
    x1_ref: (H+2, W+2, Cin)     VMEM scratch: pooled input + zero halo
    h1_ref: (H+2, W+2, Cmid)    VMEM scratch: stage-1 activations + zero halo
    """
    H = o_ref.shape[1]
    W = o_ref.shape[2]

    def zero_halo(ref):
        hp, wp, c = ref.shape
        ref[0:1, :, :] = jnp.zeros((1, wp, c), ref.dtype)
        ref[hp - 1:hp, :, :] = jnp.zeros((1, wp, c), ref.dtype)
        ref[:, 0:1, :] = jnp.zeros((hp, 1, c), ref.dtype)
        ref[:, wp - 1:wp, :] = jnp.zeros((hp, 1, c), ref.dtype)

    # Cheap border zeroing every step; the interior is fully rewritten below.
    zero_halo(x1_ref)
    zero_halo(h1_ref)

    # ---- MaxPool2d(2): elementwise max of the four pre-split quadrants ----
    pooled = jnp.maximum(jnp.maximum(x_ref[0, 0], x_ref[0, 1]),
                         jnp.maximum(x_ref[0, 2], x_ref[0, 3]))  # (H, W, Cin)
    x1_ref[1:H + 1, 1:W + 1, :] = pooled

    def conv3x3_bias_relu(src_ref, w_ref, b_ref):
        """3x3 conv (1-px zero halo already in src_ref) + folded-BN bias + ReLU."""
        cout = w_ref.shape[-1]
        x = src_ref[...]                                  # (H+2, W+2, C)
        acc = jnp.zeros((H, W, cout), jnp.float32)
        for kx in range(3):
            # Hoisted sublane-shifting W slice: one materialization per kx.
            xk = x[:, kx:kx + W, :]                       # (H+2, W, C)
            for ky in range(3):
                acc = acc + jnp.dot(
                    xk[ky:ky + H],                        # free leading-dim slice
                    w_ref[ky, kx],
                    preferred_element_type=jnp.float32)
        return jnp.maximum(acc + b_ref[0], 0.0)           # bias (conv + BN) + ReLU

    a1 = conv3x3_bias_relu(x1_ref, w1_ref, b1_ref)        # (H, W, Cmid), stays in VMEM
    h1_ref[1:H + 1, 1:W + 1, :] = a1.astype(h1_ref.dtype)

    a2 = conv3x3_bias_relu(h1_ref, w2_ref, b2_ref)        # (H, W, Cout)
    o_ref[0] = a2.astype(o_ref.dtype)


def _fold_bn(conv_b, gamma, beta, mean, var, eps=1e-5):
    """Eval-mode BatchNorm folded to a per-channel (scale, bias)."""
    scale = gamma / jnp.sqrt(var + eps)
    bias = (conv_b - mean) * scale + beta
    return scale, bias


@jax.jit
def down_forward(x_nchw, params):
    """Matches Down.forward (MaxPool2d(2) + DoubleConv, eval-mode BN). NCHW i/o."""
    N, Cin, H2, W2 = x_nchw.shape
    H, W = H2 // 2, W2 // 2
    Cmid = params["w1"].shape[-1]
    Cout = params["w2"].shape[-1]

    # Single XLA transpose: NCHW -> (N, quadrant, H, W, C).  Quadrant q = 2*dy+dx
    # holds x[..., 2i+dy, 2j+dx]; the kernel max-reduces the four quadrants.
    xq = x_nchw.reshape(N, Cin, H, 2, W, 2)
    xq = jnp.transpose(xq, (0, 3, 5, 2, 4, 1)).reshape(N, 4, H, W, Cin)

    # Fold eval-mode BN: scale into the conv weights, the rest into a bias.
    s1, b1 = _fold_bn(params["b1"], **params["bn1"])
    s2, b2 = _fold_bn(params["b2"], **params["bn2"])
    w1 = params["w1"] * s1          # (3, 3, Cin, Cmid) * (Cmid,)
    w2 = params["w2"] * s2          # (3, 3, Cmid, Cout) * (Cout,)

    out_nhwc = pl.pallas_call(
        _down_double_conv_kernel,
        out_shape=jax.ShapeDtypeStruct((N, H, W, Cout), x_nchw.dtype),
        grid=(N,),
        in_specs=[
            pl.BlockSpec((1, 4, H, W, Cin), lambda n: (n, 0, 0, 0, 0)),
            pl.BlockSpec((3, 3, Cin, Cmid), lambda n: (0, 0, 0, 0)),
            pl.BlockSpec((1, Cmid), lambda n: (0, 0)),
            pl.BlockSpec((3, 3, Cmid, Cout), lambda n: (0, 0, 0, 0)),
            pl.BlockSpec((1, Cout), lambda n: (0, 0)),
        ],
        out_specs=pl.BlockSpec((1, H, W, Cout), lambda n: (n, 0, 0, 0)),
        scratch_shapes=[
            pltpu.VMEM((H + 2, W + 2, Cin), jnp.float32),
            pltpu.VMEM((H + 2, W + 2, Cmid), jnp.float32),
        ],
        compiler_params=pltpu.CompilerParams(
            dimension_semantics=("parallel",)),
    )(xq, w1, b1.reshape(1, Cmid), w2, b2.reshape(1, Cout))

    # TODO(synk): drop the NCHW<->NHWC transposes if the surrounding model is NHWC.
    return jnp.transpose(out_nhwc, (0, 3, 1, 2))


def init_down_params(key, in_channels, out_channels, mid_channels=None):
    """Down(in_channels, out_channels): MaxPool2d(2) + DoubleConv(in, out)."""
    if not mid_channels:
        mid_channels = out_channels
    k = jax.random.split(key, 6)
    # Conv weights in HWIO layout (3, 3, Cin, Cout); deterministic synthetic init.
    w1 = jax.random.normal(k[0], (3, 3, in_channels, mid_channels), jnp.float32)
    w1 = w1 / jnp.sqrt(9.0 * in_channels)
    b1 = 0.01 * jax.random.normal(k[1], (mid_channels,), jnp.float32)
    w2 = jax.random.normal(k[2], (3, 3, mid_channels, out_channels), jnp.float32)
    w2 = w2 / jnp.sqrt(9.0 * mid_channels)
    b2 = 0.01 * jax.random.normal(k[3], (out_channels,), jnp.float32)

    def bn_params(kk, c):
        kg, kb, km, kv = jax.random.split(kk, 4)
        return dict(
            gamma=1.0 + 0.1 * jax.random.normal(kg, (c,), jnp.float32),
            beta=0.1 * jax.random.normal(kb, (c,), jnp.float32),
            mean=0.1 * jax.random.normal(km, (c,), jnp.float32),
            var=jax.random.uniform(kv, (c,), jnp.float32, minval=0.5, maxval=1.5))

    return dict(w1=w1, b1=b1, bn1=bn_params(k[4], mid_channels),
                w2=w2, b2=b2, bn2=bn_params(k[5], out_channels))


def _reference_forward(x_nchw, params):
    """Pure-JAX reference (reshape-max pooling + lax.conv) for correctness."""
    N, C, H2, W2 = x_nchw.shape
    xp = x_nchw.reshape(N, C, H2 // 2, 2, W2 // 2, 2).max(axis=(3, 5))
    x = jnp.transpose(xp, (0, 2, 3, 1))  # NHWC

    def step(x_nhwc, w, b, bn):
        y = lax.conv_general_dilated(
            x_nhwc, w, window_strides=(1, 1), padding="SAME",
            dimension_numbers=("NHWC", "HWIO", "NHWC"))
        y = y + b
        y = (y - bn["mean"]) / jnp.sqrt(bn["var"] + 1e-5) * bn["gamma"] + bn["beta"]
        return jnp.maximum(y, 0.0)

    y = step(x, params["w1"], params["b1"], params["bn1"])
    y = step(y, params["w2"], params["b2"], params["bn2"])
    return jnp.transpose(y, (0, 3, 1, 2))


if __name__ == "__main__":
    key = jax.random.PRNGKey(0)
    k_x, k_p = jax.random.split(key)

    N, Cin, H, W = 2, 4, 16, 16
    Cout = 8

    x = jax.random.normal(k_x, (N, Cin, H, W), jnp.float32)
    params = init_down_params(k_p, Cin, Cout)

    out = jax.block_until_ready(down_forward(x, params))
    ref = _reference_forward(x, params)

    assert out.shape == (N, Cout, H // 2, W // 2), out.shape
    err = float(jnp.max(jnp.abs(out - ref)))
    assert jnp.allclose(out, ref, atol=2e-4, rtol=2e-4), err

    print("KERNEL_OK")
</pallas_src>

<mosaic_0001>
module attributes {stable_mosaic.version = 11 : i64} {
  func.func @_down_double_conv_kernel(%arg0: i32, %arg1: memref<1x4x8x8x4xf32, #tpu.memory_space<vmem>>, %arg2: memref<3x3x4x8xf32, #tpu.memory_space<vmem>>, %arg3: memref<1x8xf32, #tpu.memory_space<vmem>>, %arg4: memref<3x3x8x8xf32, #tpu.memory_space<vmem>>, %arg5: memref<1x8xf32, #tpu.memory_space<vmem>>, %arg6: memref<1x8x8x8xf32, #tpu.memory_space<vmem>>, %arg7: memref<10x10x4xf32, #tpu.memory_space<vmem>>, %arg8: memref<10x10x8xf32, #tpu.memory_space<vmem>>) attributes {dimension_semantics = [#tpu.dimension_semantics<parallel>], iteration_bounds = array<i64: 2>, scalar_prefetch = 0 : i64, scratch_operands = 2 : i64, tpu.core_type = #tpu.core_type<tc>, window_params = [{transform_indices = @transform_0, window_bounds = array<i64: 1, 4, 8, 8, 4>}, {pipeline_mode = #tpu.pipeline_mode<synchronous>, transform_indices = @transform_1, window_bounds = array<i64: 3, 3, 4, 8>}, {pipeline_mode = #tpu.pipeline_mode<synchronous>, transform_indices = @transform_2, window_bounds = array<i64: 1, 8>}, {pipeline_mode = #tpu.pipeline_mode<synchronous>, transform_indices = @transform_3, window_bounds = array<i64: 3, 3, 8, 8>}, {pipeline_mode = #tpu.pipeline_mode<synchronous>, transform_indices = @transform_4, window_bounds = array<i64: 1, 8>}, {transform_indices = @transform_5, window_bounds = array<i64: 1, 8, 8, 8>}]} {
    %cst = arith.constant 0.000000e+00 : f32
    %0 = vector.broadcast %cst : f32 to vector<1x10x4xf32>
    %c0 = arith.constant 0 : index
    %c0_0 = arith.constant 0 : index
    %c0_1 = arith.constant 0 : index
    %1 = vector.load %arg7[%c0, %c0_0, %c0_1] : memref<10x10x4xf32, #tpu.memory_space<vmem>>, vector<1x10x4xf32>
    tpu.vector_store %arg7[%c0, %c0_0, %c0_1], %0 {strides = array<i32>} : memref<10x10x4xf32, #tpu.memory_space<vmem>>, vector<1x10x4xf32>,
    %cst_2 = arith.constant 0.000000e+00 : f32
    %2 = vector.broadcast %cst_2 : f32 to vector<1x10x4xf32>
    %c9 = arith.constant 9 : index
    %c0_3 = arith.constant 0 : index
    %c0_4 = arith.constant 0 : index
    %3 = vector.load %arg7[%c9, %c0_3, %c0_4] : memref<10x10x4xf32, #tpu.memory_space<vmem>>, vector<1x10x4xf32>
    tpu.vector_store %arg7[%c9, %c0_3, %c0_4], %2 {strides = array<i32>} : memref<10x10x4xf32, #tpu.memory_space<vmem>>, vector<1x10x4xf32>,
    %cst_5 = arith.constant 0.000000e+00 : f32
    %4 = vector.broadcast %cst_5 : f32 to vector<10x1x4xf32>
    %c0_6 = arith.constant 0 : index
    %c0_7 = arith.constant 0 : index
    %c0_8 = arith.constant 0 : index
    %5 = vector.load %arg7[%c0_6, %c0_7, %c0_8] : memref<10x10x4xf32, #tpu.memory_space<vmem>>, vector<10x1x4xf32>
    tpu.vector_store %arg7[%c0_6, %c0_7, %c0_8], %4 {strides = array<i32>} : memref<10x10x4xf32, #tpu.memory_space<vmem>>, vector<10x1x4xf32>,
    %cst_9 = arith.constant 0.000000e+00 : f32
    %6 = vector.broadcast %cst_9 : f32 to vector<10x1x4xf32>
    %c0_10 = arith.constant 0 : index
    %c9_11 = arith.constant 9 : index
    %c0_12 = arith.constant 0 : index
    %7 = vector.load %arg7[%c0_10, %c9_11, %c0_12] : memref<10x10x4xf32, #tpu.memory_space<vmem>>, vector<10x1x4xf32>
    tpu.vector_store %arg7[%c0_10, %c9_11, %c0_12], %6 {strides = array<i32>} : memref<10x10x4xf32, #tpu.memory_space<vmem>>, vector<10x1x4xf32>,
    %cst_13 = arith.constant 0.000000e+00 : f32
    %8 = vector.broadcast %cst_13 : f32 to vector<1x10x8xf32>
    %c0_14 = arith.constant 0 : index
    %c0_15 = arith.constant 0 : index
    %c0_16 = arith.constant 0 : index
    %9 = vector.load %arg8[%c0_14, %c0_15, %c0_16] : memref<10x10x8xf32, #tpu.memory_space<vmem>>, vector<1x10x8xf32>
    tpu.vector_store %arg8[%c0_14, %c0_15, %c0_16], %8 {strides = array<i32>} : memref<10x10x8xf32, #tpu.memory_space<vmem>>, vector<1x10x8xf32>,
    %cst_17 = arith.constant 0.000000e+00 : f32
    %10 = vector.broadcast %cst_17 : f32 to vector<1x10x8xf32>
    %c9_18 = arith.constant 9 : index
    %c0_19 = arith.constant 0 : index
    %c0_20 = arith.constant 0 : index
    %11 = vector.load %arg8[%c9_18, %c0_19, %c0_20] : memref<10x10x8xf32, #tpu.memory_space<vmem>>, vector<1x10x8xf32>
    tpu.vector_store %arg8[%c9_18, %c0_19, %c0_20], %10 {strides = array<i32>} : memref<10x10x8xf32, #tpu.memory_space<vmem>>, vector<1x10x8xf32>,
    %cst_21 = arith.constant 0.000000e+00 : f32
    %12 = vector.broadcast %cst_21 : f32 to vector<10x1x8xf32>
    %c0_22 = arith.constant 0 : index
    %c0_23 = arith.constant 0 : index
    %c0_24 = arith.constant 0 : index
    %13 = vector.load %arg8[%c0_22, %c0_23, %c0_24] : memref<10x10x8xf32, #tpu.memory_space<vmem>>, vector<10x1x8xf32>
    tpu.vector_store %arg8[%c0_22, %c0_23, %c0_24], %12 {strides = array<i32>} : memref<10x10x8xf32, #tpu.memory_space<vmem>>, vector<10x1x8xf32>,
    %cst_25 = arith.constant 0.000000e+00 : f32
    %14 = vector.broadcast %cst_25 : f32 to vector<10x1x8xf32>
    %c0_26 = arith.constant 0 : index
    %c9_27 = arith.constant 9 : index
    %c0_28 = arith.constant 0 : index
    %15 = vector.load %arg8[%c0_26, %c9_27, %c0_28] : memref<10x10x8xf32, #tpu.memory_space<vmem>>, vector<10x1x8xf32>
    tpu.vector_store %arg8[%c0_26, %c9_27, %c0_28], %14 {strides = array<i32>} : memref<10x10x8xf32, #tpu.memory_space<vmem>>, vector<10x1x8xf32>,
    %c0_29 = arith.constant 0 : index
    %c0_30 = arith.constant 0 : index
    %c0_31 = arith.constant 0 : index
    %c0_32 = arith.constant 0 : index
    %c0_33 = arith.constant 0 : index
    %16 = vector.load %arg1[%c0_29, %c0_30, %c0_31, %c0_32, %c0_33] : memref<1x4x8x8x4xf32, #tpu.memory_space<vmem>>, vector<1x1x8x8x4xf32>
    %17 = vector.shape_cast %16 : vector<1x1x8x8x4xf32> to vector<8x8x4xf32>
    %c0_34 = arith.constant 0 : index
    %c1 = arith.constant 1 : index
    %c0_35 = arith.constant 0 : index
    %c0_36 = arith.constant 0 : index
    %c0_37 = arith.constant 0 : index
    %18 = vector.load %arg1[%c0_34, %c1, %c0_35, %c0_36, %c0_37] : memref<1x4x8x8x4xf32, #tpu.memory_space<vmem>>, vector<1x1x8x8x4xf32>
    %19 = vector.shape_cast %18 : vector<1x1x8x8x4xf32> to vector<8x8x4xf32>
    %20 = arith.maximumf %17, %19 : vector<8x8x4xf32>
    %c0_38 = arith.constant 0 : index
    %c2 = arith.constant 2 : index
    %c0_39 = arith.constant 0 : index
    %c0_40 = arith.constant 0 : index
    %c0_41 = arith.constant 0 : index
    %21 = vector.load %arg1[%c0_38, %c2, %c0_39, %c0_40, %c0_41] : memref<1x4x8x8x4xf32, #tpu.memory_space<vmem>>, vector<1x1x8x8x4xf32>
    %22 = vector.shape_cast %21 : vector<1x1x8x8x4xf32> to vector<8x8x4xf32>
    %c0_42 = arith.constant 0 : index
    %c3 = arith.constant 3 : index
    %c0_43 = arith.constant 0 : index
    %c0_44 = arith.constant 0 : index
    %c0_45 = arith.constant 0 : index
    %23 = vector.load %arg1[%c0_42, %c3, %c0_43, %c0_44, %c0_45] : memref<1x4x8x8x4xf32, #tpu.memory_space<vmem>>, vector<1x1x8x8x4xf32>
    %24 = vector.shape_cast %23 : vector<1x1x8x8x4xf32> to vector<8x8x4xf32>
    %25 = arith.maximumf %22, %24 : vector<8x8x4xf32>
    %26 = arith.maximumf %20, %25 : vector<8x8x4xf32>
    %c1_46 = arith.constant 1 : index
    %c1_47 = arith.constant 1 : index
    %c0_48 = arith.constant 0 : index
    %27 = vector.load %arg7[%c1_46, %c1_47, %c0_48] : memref<10x10x4xf32, #tpu.memory_space<vmem>>, vector<8x8x4xf32>
    tpu.vector_store %arg7[%c1_46, %c1_47, %c0_48], %26 {strides = array<i32>} : memref<10x10x4xf32, #tpu.memory_space<vmem>>, vector<8x8x4xf32>,
    %c0_49 = arith.constant 0 : index
    %c0_50 = arith.constant 0 : index
    %c0_51 = arith.constant 0 : index
    %28 = vector.load %arg7[%c0_49, %c0_50, %c0_51] : memref<10x10x4xf32, #tpu.memory_space<vmem>>, vector<10x10x4xf32>
    %cst_52 = arith.constant 0.000000e+00 : f32
    %29 = vector.broadcast %cst_52 : f32 to vector<8x8x8xf32>
    %30 = vector.extract_strided_slice %28 {offsets = [0, 0, 0], sizes = [10, 8, 4], strides = [1, 1, 1]} : vector<10x10x4xf32> to vector<10x8x4xf32>
    %31 = vector.extract_strided_slice %30 {offsets = [0, 0, 0], sizes = [8, 8, 4], strides = [1, 1, 1]} : vector<10x8x4xf32> to vector<8x8x4xf32>
    %c0_53 = arith.constant 0 : index
    %c0_54 = arith.constant 0 : index
    %c0_55 = arith.constant 0 : index
    %c0_56 = arith.constant 0 : index
    %32 = vector.load %arg2[%c0_53, %c0_54, %c0_55, %c0_56] : memref<3x3x4x8xf32, #tpu.memory_space<vmem>>, vector<1x1x4x8xf32>
    %33 = vector.shape_cast %32 : vector<1x1x4x8xf32> to vector<4x8xf32>
    %cst_57 = arith.constant dense<0.000000e+00> : vector<8x8x8xf32>
    %34 = tpu.matmul %31, %33, %cst_57 {dimension_numbers = #tpu.dot_dimension_numbers<[2], [0], [0, 1], [1], [0, 0, 0, 1, 1, 1], [], []>} : vector<8x8x4xf32>, vector<4x8xf32>, vector<8x8x8xf32> -> vector<8x8x8xf32>
    %35 = arith.addf %29, %34 : vector<8x8x8xf32>
    %36 = vector.extract_strided_slice %30 {offsets = [1, 0, 0], sizes = [8, 8, 4], strides = [1, 1, 1]} : vector<10x8x4xf32> to vector<8x8x4xf32>
    %c1_58 = arith.constant 1 : index
    %c0_59 = arith.constant 0 : index
    %c0_60 = arith.constant 0 : index
    %c0_61 = arith.constant 0 : index
    %37 = vector.load %arg2[%c1_58, %c0_59, %c0_60, %c0_61] : memref<3x3x4x8xf32, #tpu.memory_space<vmem>>, vector<1x1x4x8xf32>
    %38 = vector.shape_cast %37 : vector<1x1x4x8xf32> to vector<4x8xf32>
    %cst_62 = arith.constant dense<0.000000e+00> : vector<8x8x8xf32>
    %39 = tpu.matmul %36, %38, %cst_62 {dimension_numbers = #tpu.dot_dimension_numbers<[2], [0], [0, 1], [1], [0, 0, 0, 1, 1, 1], [], []>} : vector<8x8x4xf32>, vector<4x8xf32>, vector<8x8x8xf32> -> vector<8x8x8xf32>
    %40 = arith.addf %35, %39 : vector<8x8x8xf32>
    %41 = vector.extract_strided_slice %30 {offsets = [2, 0, 0], sizes = [8, 8, 4], strides = [1, 1, 1]} : vector<10x8x4xf32> to vector<8x8x4xf32>
    %c2_63 = arith.constant 2 : index
    %c0_64 = arith.constant 0 : index
    %c0_65 = arith.constant 0 : index
    %c0_66 = arith.constant 0 : index
    %42 = vector.load %arg2[%c2_63, %c0_64, %c0_65, %c0_66] : memref<3x3x4x8xf32, #tpu.memory_space<vmem>>, vector<1x1x4x8xf32>
    %43 = vector.shape_cast %42 : vector<1x1x4x8xf32> to vector<4x8xf32>
    %cst_67 = arith.constant dense<0.000000e+00> : vector<8x8x8xf32>
    %44 = tpu.matmul %41, %43, %cst_67 {dimension_numbers = #tpu.dot_dimension_numbers<[2], [0], [0, 1], [1], [0, 0, 0, 1, 1, 1], [], []>} : vector<8x8x4xf32>, vector<4x8xf32>, vector<8x8x8xf32> -> vector<8x8x8xf32>
    %45 = arith.addf %40, %44 : vector<8x8x8xf32>
    %46 = vector.extract_strided_slice %28 {offsets = [0, 1, 0], sizes = [10, 8, 4], strides = [1, 1, 1]} : vector<10x10x4xf32> to vector<10x8x4xf32>
    %47 = vector.extract_strided_slice %46 {offsets = [0, 0, 0], sizes = [8, 8, 4], strides = [1, 1, 1]} : vector<10x8x4xf32> to vector<8x8x4xf32>
    %c0_68 = arith.constant 0 : index
    %c1_69 = arith.constant 1 : index
    %c0_70 = arith.constant 0 : index
    %c0_71 = arith.constant 0 : index
    %48 = vector.load %arg2[%c0_68, %c1_69, %c0_70, %c0_71] : memref<3x3x4x8xf32, #tpu.memory_space<vmem>>, vector<1x1x4x8xf32>
    %49 = vector.shape_cast %48 : vector<1x1x4x8xf32> to vector<4x8xf32>
    %cst_72 = arith.constant dense<0.000000e+00> : vector<8x8x8xf32>
    %50 = tpu.matmul %47, %49, %cst_72 {dimension_numbers = #tpu.dot_dimension_numbers<[2], [0], [0, 1], [1], [0, 0, 0, 1, 1, 1], [], []>} : vector<8x8x4xf32>, vector<4x8xf32>, vector<8x8x8xf32> -> vector<8x8x8xf32>
    %51 = arith.addf %45, %50 : vector<8x8x8xf32>
    %52 = vector.extract_strided_slice %46 {offsets = [1, 0, 0], sizes = [8, 8, 4], strides = [1, 1, 1]} : vector<10x8x4xf32> to vector<8x8x4xf32>
    %c1_73 = arith.constant 1 : index
    %c1_74 = arith.constant 1 : index
    %c0_75 = arith.constant 0 : index
    %c0_76 = arith.constant 0 : index
    %53 = vector.load %arg2[%c1_73, %c1_74, %c0_75, %c0_76] : memref<3x3x4x8xf32, #tpu.memory_space<vmem>>, vector<1x1x4x8xf32>
    %54 = vector.shape_cast %53 : vector<1x1x4x8xf32> to vector<4x8xf32>
    %cst_77 = arith.constant dense<0.000000e+00> : vector<8x8x8xf32>
    %55 = tpu.matmul %52, %54, %cst_77 {dimension_numbers = #tpu.dot_dimension_numbers<[2], [0], [0, 1], [1], [0, 0, 0, 1, 1, 1], [], []>} : vector<8x8x4xf32>, vector<4x8xf32>, vector<8x8x8xf32> -> vector<8x8x8xf32>
    %56 = arith.addf %51, %55 : vector<8x8x8xf32>
    %57 = vector.extract_strided_slice %46 {offsets = [2, 0, 0], sizes = [8, 8, 4], strides = [1, 1, 1]} : vector<10x8x4xf32> to vector<8x8x4xf32>
    %c2_78 = arith.constant 2 : index
    %c1_79 = arith.constant 1 : index
    %c0_80 = arith.constant 0 : index
    %c0_81 = arith.constant 0 : index
    %58 = vector.load %arg2[%c2_78, %c1_79, %c0_80, %c0_81] : memref<3x3x4x8xf32, #tpu.memory_space<vmem>>, vector<1x1x4x8xf32>
    %59 = vector.shape_cast %58 : vector<1x1x4x8xf32> to vector<4x8xf32>
    %cst_82 = arith.constant dense<0.000000e+00> : vector<8x8x8xf32>
    %60 = tpu.matmul %57, %59, %cst_82 {dimension_numbers = #tpu.dot_dimension_numbers<[2], [0], [0, 1], [1], [0, 0, 0, 1, 1, 1], [], []>} : vector<8x8x4xf32>, vector<4x8xf32>, vector<8x8x8xf32> -> vector<8x8x8xf32>
    %61 = arith.addf %56, %60 : vector<8x8x8xf32>
    %62 = vector.extract_strided_slice %28 {offsets = [0, 2, 0], sizes = [10, 8, 4], strides = [1, 1, 1]} : vector<10x10x4xf32> to vector<10x8x4xf32>
    %63 = vector.extract_strided_slice %62 {offsets = [0, 0, 0], sizes = [8, 8, 4], strides = [1, 1, 1]} : vector<10x8x4xf32> to vector<8x8x4xf32>
    %c0_83 = arith.constant 0 : index
    %c2_84 = arith.constant 2 : index
    %c0_85 = arith.constant 0 : index
    %c0_86 = arith.constant 0 : index
    %64 = vector.load %arg2[%c0_83, %c2_84, %c0_85, %c0_86] : memref<3x3x4x8xf32, #tpu.memory_space<vmem>>, vector<1x1x4x8xf32>
    %65 = vector.shape_cast %64 : vector<1x1x4x8xf32> to vector<4x8xf32>
    %cst_87 = arith.constant dense<0.000000e+00> : vector<8x8x8xf32>
    %66 = tpu.matmul %63, %65, %cst_87 {dimension_numbers = #tpu.dot_dimension_numbers<[2], [0], [0, 1], [1], [0, 0, 0, 1, 1, 1], [], []>} : vector<8x8x4xf32>, vector<4x8xf32>, vector<8x8x8xf32> -> vector<8x8x8xf32>
    %67 = arith.addf %61, %66 : vector<8x8x8xf32>
    %68 = vector.extract_strided_slice %62 {offsets = [1, 0, 0], sizes = [8, 8, 4], strides = [1, 1, 1]} : vector<10x8x4xf32> to vector<8x8x4xf32>
    %c1_88 = arith.constant 1 : index
    %c2_89 = arith.constant 2 : index
    %c0_90 = arith.constant 0 : index
    %c0_91 = arith.constant 0 : index
    %69 = vector.load %arg2[%c1_88, %c2_89, %c0_90, %c0_91] : memref<3x3x4x8xf32, #tpu.memory_space<vmem>>, vector<1x1x4x8xf32>
    %70 = vector.shape_cast %69 : vector<1x1x4x8xf32> to vector<4x8xf32>
    %cst_92 = arith.constant dense<0.000000e+00> : vector<8x8x8xf32>
    %71 = tpu.matmul %68, %70, %cst_92 {dimension_numbers = #tpu.dot_dimension_numbers<[2], [0], [0, 1], [1], [0, 0, 0, 1, 1, 1], [], []>} : vector<8x8x4xf32>, vector<4x8xf32>, vector<8x8x8xf32> -> vector<8x8x8xf32>
    %72 = arith.addf %67, %71 : vector<8x8x8xf32>
    %73 = vector.extract_strided_slice %62 {offsets = [2, 0, 0], sizes = [8, 8, 4], strides = [1, 1, 1]} : vector<10x8x4xf32> to vector<8x8x4xf32>
    %c2_93 = arith.constant 2 : index
    %c2_94 = arith.constant 2 : index
    %c0_95 = arith.constant 0 : index
    %c0_96 = arith.constant 0 : index
    %74 = vector.load %arg2[%c2_93, %c2_94, %c0_95, %c0_96] : memref<3x3x4x8xf32, #tpu.memory_space<vmem>>, vector<1x1x4x8xf32>
    %75 = vector.shape_cast %74 : vector<1x1x4x8xf32> to vector<4x8xf32>
    %cst_97 = arith.constant dense<0.000000e+00> : vector<8x8x8xf32>
    %76 = tpu.matmul %73, %75, %cst_97 {dimension_numbers = #tpu.dot_dimension_numbers<[2], [0], [0, 1], [1], [0, 0, 0, 1, 1, 1], [], []>} : vector<8x8x4xf32>, vector<4x8xf32>, vector<8x8x8xf32> -> vector<8x8x8xf32>
    %77 = arith.addf %72, %76 : vector<8x8x8xf32>
    %c0_98 = arith.constant 0 : index
    %c0_99 = arith.constant 0 : index
    %78 = vector.load %arg3[%c0_98, %c0_99] : memref<1x8xf32, #tpu.memory_space<vmem>>, vector<1x8xf32>
    %79 = vector.shape_cast %78 : vector<1x8xf32> to vector<8xf32>
    %80 = vector.shape_cast %79 : vector<8xf32> to vector<1x1x8xf32>
    %81 = vector.broadcast %80 : vector<1x1x8xf32> to vector<8x8x8xf32>
    %82 = arith.addf %77, %81 : vector<8x8x8xf32>
    %cst_100 = arith.constant 0.000000e+00 : f32
    %83 = vector.broadcast %cst_100 : f32 to vector<8x8x8xf32>
    %84 = arith.maximumf %82, %83 : vector<8x8x8xf32>
    %c1_101 = arith.constant 1 : index
    %c1_102 = arith.constant 1 : index
    %c0_103 = arith.constant 0 : index
    %85 = vector.load %arg8[%c1_101, %c1_102, %c0_103] : memref<10x10x8xf32, #tpu.memory_space<vmem>>, vector<8x8x8xf32>
    tpu.vector_store %arg8[%c1_101, %c1_102, %c0_103], %84 {strides = array<i32>} : memref<10x10x8xf32, #tpu.memory_space<vmem>>, vector<8x8x8xf32>,
    %c0_104 = arith.constant 0 : index
    %c0_105 = arith.constant 0 : index
    %c0_106 = arith.constant 0 : index
    %86 = vector.load %arg8[%c0_104, %c0_105, %c0_106] : memref<10x10x8xf32, #tpu.memory_space<vmem>>, vector<10x10x8xf32>
    %cst_107 = arith.constant 0.000000e+00 : f32
    %87 = vector.broadcast %cst_107 : f32 to vector<8x8x8xf32>
    %88 = vector.extract_strided_slice %86 {offsets = [0, 0, 0], sizes = [10, 8, 8], strides = [1, 1, 1]} : vector<10x10x8xf32> to vector<10x8x8xf32>
    %89 = vector.extract_strided_slice %88 {offsets = [0, 0, 0], sizes = [8, 8, 8], strides = [1, 1, 1]} : vector<10x8x8xf32> to vector<8x8x8xf32>
    %c0_108 = arith.constant 0 : index
    %c0_109 = arith.constant 0 : index
    %c0_110 = arith.constant 0 : index
    %c0_111 = arith.constant 0 : index
    %90 = vector.load %arg4[%c0_108, %c0_109, %c0_110, %c0_111] : memref<3x3x8x8xf32, #tpu.memory_space<vmem>>, vector<1x1x8x8xf32>
    %91 = vector.shape_cast %90 : vector<1x1x8x8xf32> to vector<8x8xf32>
    %cst_112 = arith.constant dense<0.000000e+00> : vector<8x8x8xf32>
    %92 = tpu.matmul %89, %91, %cst_112 {dimension_numbers = #tpu.dot_dimension_numbers<[2], [0], [0, 1], [1], [0, 0, 0, 1, 1, 1], [], []>} : vector<8x8x8xf32>, vector<8x8xf32>, vector<8x8x8xf32> -> vector<8x8x8xf32>
    %93 = arith.addf %87, %92 : vector<8x8x8xf32>
    %94 = vector.extract_strided_slice %88 {offsets = [1, 0, 0], sizes = [8, 8, 8], strides = [1, 1, 1]} : vector<10x8x8xf32> to vector<8x8x8xf32>
    %c1_113 = arith.constant 1 : index
    %c0_114 = arith.constant 0 : index
    %c0_115 = arith.constant 0 : index
    %c0_116 = arith.constant 0 : index
    %95 = vector.load %arg4[%c1_113, %c0_114, %c0_115, %c0_116] : memref<3x3x8x8xf32, #tpu.memory_space<vmem>>, vector<1x1x8x8xf32>
    %96 = vector.shape_cast %95 : vector<1x1x8x8xf32> to vector<8x8xf32>
    %cst_117 = arith.constant dense<0.000000e+00> : vector<8x8x8xf32>
    %97 = tpu.matmul %94, %96, %cst_117 {dimension_numbers = #tpu.dot_dimension_numbers<[2], [0], [0, 1], [1], [0, 0, 0, 1, 1, 1], [], []>} : vector<8x8x8xf32>, vector<8x8xf32>, vector<8x8x8xf32> -> vector<8x8x8xf32>
    %98 = arith.addf %93, %97 : vector<8x8x8xf32>
    %99 = vector.extract_strided_slice %88 {offsets = [2, 0, 0], sizes = [8, 8, 8], strides = [1, 1, 1]} : vector<10x8x8xf32> to vector<8x8x8xf32>
    %c2_118 = arith.constant 2 : index
    %c0_119 = arith.constant 0 : index
    %c0_120 = arith.constant 0 : index
    %c0_121 = arith.constant 0 : index
    %100 = vector.load %arg4[%c2_118, %c0_119, %c0_120, %c0_121] : memref<3x3x8x8xf32, #tpu.memory_space<vmem>>, vector<1x1x8x8xf32>
    %101 = vector.shape_cast %100 : vector<1x1x8x8xf32> to vector<8x8xf32>
    %cst_122 = arith.constant dense<0.000000e+00> : vector<8x8x8xf32>
    %102 = tpu.matmul %99, %101, %cst_122 {dimension_numbers = #tpu.dot_dimension_numbers<[2], [0], [0, 1], [1], [0, 0, 0, 1, 1, 1], [], []>} : vector<8x8x8xf32>, vector<8x8xf32>, vector<8x8x8xf32> -> vector<8x8x8xf32>
    %103 = arith.addf %98, %102 : vector<8x8x8xf32>
    %104 = vector.extract_strided_slice %86 {offsets = [0, 1, 0], sizes = [10, 8, 8], strides = [1, 1, 1]} : vector<10x10x8xf32> to vector<10x8x8xf32>
    %105 = vector.extract_strided_slice %104 {offsets = [0, 0, 0], sizes = [8, 8, 8], strides = [1, 1, 1]} : vector<10x8x8xf32> to vector<8x8x8xf32>
    %c0_123 = arith.constant 0 : index
    %c1_124 = arith.constant 1 : index
    %c0_125 = arith.constant 0 : index
    %c0_126 = arith.constant 0 : index
    %106 = vector.load %arg4[%c0_123, %c1_124, %c0_125, %c0_126] : memref<3x3x8x8xf32, #tpu.memory_space<vmem>>, vector<1x1x8x8xf32>
    %107 = vector.shape_cast %106 : vector<1x1x8x8xf32> to vector<8x8xf32>
    %cst_127 = arith.constant dense<0.000000e+00> : vector<8x8x8xf32>
    %108 = tpu.matmul %105, %107, %cst_127 {dimension_numbers = #tpu.dot_dimension_numbers<[2], [0], [0, 1], [1], [0, 0, 0, 1, 1, 1], [], []>} : vector<8x8x8xf32>, vector<8x8xf32>, vector<8x8x8xf32> -> vector<8x8x8xf32>
    %109 = arith.addf %103, %108 : vector<8x8x8xf32>
    %110 = vector.extract_strided_slice %104 {offsets = [1, 0, 0], sizes = [8, 8, 8], strides = [1, 1, 1]} : vector<10x8x8xf32> to vector<8x8x8xf32>
    %c1_128 = arith.constant 1 : index
    %c1_129 = arith.constant 1 : index
    %c0_130 = arith.constant 0 : index
    %c0_131 = arith.constant 0 : index
    %111 = vector.load %arg4[%c1_128, %c1_129, %c0_130, %c0_131] : memref<3x3x8x8xf32, #tpu.memory_space<vmem>>, vector<1x1x8x8xf32>
    %112 = vector.shape_cast %111 : vector<1x1x8x8xf32> to vector<8x8xf32>
    %cst_132 = arith.constant dense<0.000000e+00> : vector<8x8x8xf32>
    %113 = tpu.matmul %110, %112, %cst_132 {dimension_numbers = #tpu.dot_dimension_numbers<[2], [0], [0, 1], [1], [0, 0, 0, 1, 1, 1], [], []>} : vector<8x8x8xf32>, vector<8x8xf32>, vector<8x8x8xf32> -> vector<8x8x8xf32>
    %114 = arith.addf %109, %113 : vector<8x8x8xf32>
    %115 = vector.extract_strided_slice %104 {offsets = [2, 0, 0], sizes = [8, 8, 8], strides = [1, 1, 1]} : vector<10x8x8xf32> to vector<8x8x8xf32>
    %c2_133 = arith.constant 2 : index
    %c1_134 = arith.constant 1 : index
    %c0_135 = arith.constant 0 : index
    %c0_136 = arith.constant 0 : index
    %116 = vector.load %arg4[%c2_133, %c1_134, %c0_135, %c0_136] : memref<3x3x8x8xf32, #tpu.memory_space<vmem>>, vector<1x1x8x8xf32>
    %117 = vector.shape_cast %116 : vector<1x1x8x8xf32> to vector<8x8xf32>
    %cst_137 = arith.constant dense<0.000000e+00> : vector<8x8x8xf32>
    %118 = tpu.matmul %115, %117, %cst_137 {dimension_numbers = #tpu.dot_dimension_numbers<[2], [0], [0, 1], [1], [0, 0, 0, 1, 1, 1], [], []>} : vector<8x8x8xf32>, vector<8x8xf32>, vector<8x8x8xf32> -> vector<8x8x8xf32>
    %119 = arith.addf %114, %118 : vector<8x8x8xf32>
    %120 = vector.extract_strided_slice %86 {offsets = [0, 2, 0], sizes = [10, 8, 8], strides = [1, 1, 1]} : vector<10x10x8xf32> to vector<10x8x8xf32>
    %121 = vector.extract_strided_slice %120 {offsets = [0, 0, 0], sizes = [8, 8, 8], strides = [1, 1, 1]} : vector<10x8x8xf32> to vector<8x8x8xf32>
    %c0_138 = arith.constant 0 : index
    %c2_139 = arith.constant 2 : index
    %c0_140 = arith.constant 0 : index
    %c0_141 = arith.constant 0 : index
    %122 = vector.load %arg4[%c0_138, %c2_139, %c0_140, %c0_141] : memref<3x3x8x8xf32, #tpu.memory_space<vmem>>, vector<1x1x8x8xf32>
    %123 = vector.shape_cast %122 : vector<1x1x8x8xf32> to vector<8x8xf32>
    %cst_142 = arith.constant dense<0.000000e+00> : vector<8x8x8xf32>
    %124 = tpu.matmul %121, %123, %cst_142 {dimension_numbers = #tpu.dot_dimension_numbers<[2], [0], [0, 1], [1], [0, 0, 0, 1, 1, 1], [], []>} : vector<8x8x8xf32>, vector<8x8xf32>, vector<8x8x8xf32> -> vector<8x8x8xf32>
    %125 = arith.addf %119, %124 : vector<8x8x8xf32>
    %126 = vector.extract_strided_slice %120 {offsets = [1, 0, 0], sizes = [8, 8, 8], strides = [1, 1, 1]} : vector<10x8x8xf32> to vector<8x8x8xf32>
    %c1_143 = arith.constant 1 : index
    %c2_144 = arith.constant 2 : index
    %c0_145 = arith.constant 0 : index
    %c0_146 = arith.constant 0 : index
    %127 = vector.load %arg4[%c1_143, %c2_144, %c0_145, %c0_146] : memref<3x3x8x8xf32, #tpu.memory_space<vmem>>, vector<1x1x8x8xf32>
    %128 = vector.shape_cast %127 : vector<1x1x8x8xf32> to vector<8x8xf32>
    %cst_147 = arith.constant dense<0.000000e+00> : vector<8x8x8xf32>
    %129 = tpu.matmul %126, %128, %cst_147 {dimension_numbers = #tpu.dot_dimension_numbers<[2], [0], [0, 1], [1], [0, 0, 0, 1, 1, 1], [], []>} : vector<8x8x8xf32>, vector<8x8xf32>, vector<8x8x8xf32> -> vector<8x8x8xf32>
    %130 = arith.addf %125, %129 : vector<8x8x8xf32>
    %131 = vector.extract_strided_slice %120 {offsets = [2, 0, 0], sizes = [8, 8, 8], strides = [1, 1, 1]} : vector<10x8x8xf32> to vector<8x8x8xf32>
    %c2_148 = arith.constant 2 : index
    %c2_149 = arith.constant 2 : index
    %c0_150 = arith.constant 0 : index
    %c0_151 = arith.constant 0 : index
    %132 = vector.load %arg4[%c2_148, %c2_149, %c0_150, %c0_151] : memref<3x3x8x8xf32, #tpu.memory_space<vmem>>, vector<1x1x8x8xf32>
    %133 = vector.shape_cast %132 : vector<1x1x8x8xf32> to vector<8x8xf32>
    %cst_152 = arith.constant dense<0.000000e+00> : vector<8x8x8xf32>
    %134 = tpu.matmul %131, %133, %cst_152 {dimension_numbers = #tpu.dot_dimension_numbers<[2], [0], [0, 1], [1], [0, 0, 0, 1, 1, 1], [], []>} : vector<8x8x8xf32>, vector<8x8xf32>, vector<8x8x8xf32> -> vector<8x8x8xf32>
    %135 = arith.addf %130, %134 : vector<8x8x8xf32>
    %c0_153 = arith.constant 0 : index
    %c0_154 = arith.constant 0 : index
    %136 = vector.load %arg5[%c0_153, %c0_154] : memref<1x8xf32, #tpu.memory_space<vmem>>, vector<1x8xf32>
    %137 = vector.shape_cast %136 : vector<1x8xf32> to vector<8xf32>
    %138 = vector.shape_cast %137 : vector<8xf32> to vector<1x1x8xf32>
    %139 = vector.broadcast %138 : vector<1x1x8xf32> to vector<8x8x8xf32>
    %140 = arith.addf %135, %139 : vector<8x8x8xf32>
    %cst_155 = arith.constant 0.000000e+00 : f32
    %141 = vector.broadcast %cst_155 : f32 to vector<8x8x8xf32>
    %142 = arith.maximumf %140, %141 : vector<8x8x8xf32>
    %c0_156 = arith.constant 0 : index
    %c0_157 = arith.constant 0 : index
    %c0_158 = arith.constant 0 : index
    %c0_159 = arith.constant 0 : index
    %143 = vector.load %arg6[%c0_156, %c0_157, %c0_158, %c0_159] : memref<1x8x8x8xf32, #tpu.memory_space<vmem>>, vector<1x8x8x8xf32>
    %144 = vector.shape_cast %143 : vector<1x8x8x8xf32> to vector<8x8x8xf32>
    %145 = vector.shape_cast %142 : vector<8x8x8xf32> to vector<1x8x8x8xf32>
    tpu.vector_store %arg6[%c0_156, %c0_157, %c0_158, %c0_159], %145 {strides = array<i32>} : memref<1x8x8x8xf32, #tpu.memory_space<vmem>>, vector<1x8x8x8xf32>,
    return
  }
  func.func @transform_0(%arg0: i32) -> (i32, i32, i32, i32, i32) {
    %c0_i32 = arith.constant 0 : i32
    %c0_i32_0 = arith.constant 0 : i32
    %c0_i32_1 = arith.constant 0 : i32
    %c0_i32_2 = arith.constant 0 : i32
    %c0_i32_3 = arith.constant 0 : i32
    return %arg0, %c0_i32, %c0_i32_0, %c0_i32_1, %c0_i32_2 : i32, i32, i32, i32, i32
  }
  func.func @transform_1(%arg0: i32) -> (i32, i32, i32, i32) {
    %c0_i32 = arith.constant 0 : i32
    %c0_i32_0 = arith.constant 0 : i32
    %c0_i32_1 = arith.constant 0 : i32
    %c0_i32_2 = arith.constant 0 : i32
    %c0_i32_3 = arith.constant 0 : i32
    return %c0_i32, %c0_i32_0, %c0_i32_1, %c0_i32_2 : i32, i32, i32, i32
  }
  func.func @transform_2(%arg0: i32) -> (i32, i32) {
    %c0_i32 = arith.constant 0 : i32
    %c0_i32_0 = arith.constant 0 : i32
    %c0_i32_1 = arith.constant 0 : i32
    return %c0_i32, %c0_i32_0 : i32, i32
  }
  func.func @transform_3(%arg0: i32) -> (i32, i32, i32, i32) {
    %c0_i32 = arith.constant 0 : i32
    %c0_i32_0 = arith.constant 0 : i32
    %c0_i32_1 = arith.constant 0 : i32
    %c0_i32_2 = arith.constant 0 : i32
    %c0_i32_3 = arith.constant 0 : i32
    return %c0_i32, %c0_i32_0, %c0_i32_1, %c0_i32_2 : i32, i32, i32, i32
  }
  func.func @transform_4(%arg0: i32) -> (i32, i32) {
    %c0_i32 = arith.constant 0 : i32
    %c0_i32_0 = arith.constant 0 : i32
    %c0_i32_1 = arith.constant 0 : i32
    return %c0_i32, %c0_i32_0 : i32, i32
  }
  func.func @transform_5(%arg0: i32) -> (i32, i32, i32, i32) {
    %c0_i32 = arith.constant 0 : i32
    %c0_i32_0 = arith.constant 0 : i32
    %c0_i32_1 = arith.constant 0 : i32
    %c0_i32_2 = arith.constant 0 : i32
    return %arg0, %c0_i32, %c0_i32_0, %c0_i32_1 : i32, i32, i32, i32
  }
}

</mosaic_0001>

<llo_original>
// kernel: down_forward.1
$region0: #{down_forward.1}
  #allocation0 [shape = 'u32[]', space=smem, size = 0x4, offset = 0x4, fixed_abs, tag = 'smem constant byte address 0x4 - core index']
  #allocation1 [shape = 'u32[144,128]{1,0:T(1,128)}', space=vmem, size = 0x12000, scoped, tag = 'internal scratch']
  #allocation2 [shape = 'f32[10,10,4]{2,1,0:T(8,128)}', space=vmem, size = 0x14000, scoped, tag = 'scratch operand']
  #allocation3 [shape = 'f32[10,10,8]{2,1,0:T(8,128)}', space=vmem, size = 0x14000, scoped, tag = 'scratch operand']
  %s0 = inlined_call_operand.vmem [shape: f32[2,4,8,8,4], index: 0, kind: input, shape index: {}]
  %s1 = inlined_call_operand.vmem [shape: f32[3,3,4,8], index: 1, kind: input, shape index: {}]
  %s2 = inlined_call_operand.vmem [shape: f32[1,8], index: 2, kind: input, shape index: {}]
  %s3 = inlined_call_operand.vmem [shape: f32[3,3,8,8], index: 3, kind: input, shape index: {}]
  %s4 = inlined_call_operand.vmem [shape: f32[1,8], index: 4, kind: input, shape index: {}]
  %s5 = inlined_call_operand.vmem [shape: f32[2,8,8,8], index: 5, kind: output, shape index: {}]
  %s6 = sld [smem:[#allocation0]]
  $region53: #{down_forward.1} parent=0
    _
  %s8 = ssub.s32 1, %s6
  %s9 = scalar_select 0, %s8, %s6
  loop: start=0, step=1, limit=4
  $region2: #{down_forward.1} parent=0 // loop_pre_header
    _
  $region3: #{down_forward.1} parent=0 // loop_header
    %s11 = sphi 0, %s15
    %p12 = scmp.ge.s32.totalorder %s11, 4
    %s21 = sphi 0, %s23
    %s24 = sphi 0, %s21
    %s25 = sphi 0, %s24
    %s41 = sphi 0, %s25
    %s45 = sphi 0, %s45
    %s47 = sphi 0, %s45
    %s48 = sphi 0, %s47
    %s62 = sphi 0, %s48
    %s66 = sphi 0, %s66
    %s68 = sphi 0, %s66
    %s69 = sphi 0, %s68
    %s83 = sphi 0, %s69
    %s87 = sphi 0, %s87
    %s89 = sphi 0, %s87
    %s90 = sphi 0, %s89
    %s104 = sphi 0, %s90
    %s108 = sphi 0, %s108
    %s110 = sphi 0, %s108
    %s111 = sphi 0, %s110
    %s125 = sphi 0, %s111
    %s131 = sphi 0, %s133
    %s134 = sphi 0, %s131
    %s135 = sphi 0, %s134
    %s151 = sphi 0, %s135
  $region4: #{down_forward.1} parent=0 // loop_header_branch
    %14 = sbr.rel (%p12) target = $region8
  $region5: #{down_forward.1} parent=0 // loop_body
    %s16 = ssub.s32 %s11, 1
    %s17 = ssub.s32 %s11, 2
    %s18 = sadd.s32 %s11, 1
    %s19 = ssub.s32 %s11, %s18
    %p20 = scmp.eq.s32.totalorder %s19, 0
    %s22 = sadd.s32 %s21, 1
    %s23 = scalar_select %p20, %s21, %s22
    %p26 = pneg %p20
    %p27 = scmp.eq.s32.totalorder %s11, 1
    %p28 = por %p26, %p27
    %p29 = scmp.ne.s32.totalorder %s21, %s24
    %p30 = scmp.eq.s32.totalorder %s11, 0
    %p31 = por %p29, %p30
    %p32 = scmp.ne.s32.totalorder %s21, %s24
    %p33 = scmp.eq.s32.totalorder %s16, 1
    %p34 = por %p32, %p33
    %p35 = scmp.ne.s32.totalorder %s24, %s25
    %p36 = scmp.eq.s32.totalorder %s16, 0
    %p37 = por %p35, %p36
    %p38 = scmp.ne.s32.totalorder %s24, %s25
    %p39 = scmp.eq.s32.totalorder %s17, 1
    %p40 = por %p38, %p39
    %p42 = scmp.ne.s32.totalorder %s25, %s41
    %p43 = scmp.eq.s32.totalorder %s17, 0
    %p44 = por %p42, %p43
    %s46 = sadd.s32 %s45, 1
    %p49 = scmp.eq.s32.totalorder %s11, 1
    %p50 = scmp.ne.s32.totalorder %s45, %s47
    %p51 = scmp.eq.s32.totalorder %s11, 0
    %p52 = por %p50, %p51
    %p53 = scmp.ne.s32.totalorder %s45, %s47
    %p54 = scmp.eq.s32.totalorder %s16, 1
    %p55 = por %p53, %p54
    %p56 = scmp.ne.s32.totalorder %s47, %s48
    %p57 = scmp.eq.s32.totalorder %s16, 0
    %p58 = por %p56, %p57
    %p59 = scmp.ne.s32.totalorder %s47, %s48
    %p60 = scmp.eq.s32.totalorder %s17, 1
    %p61 = por %p59, %p60
    %p63 = scmp.ne.s32.totalorder %s48, %s62
    %p64 = scmp.eq.s32.totalorder %s17, 0
    %p65 = por %p63, %p64
    %s67 = sadd.s32 %s66, 1
    %p70 = scmp.eq.s32.totalorder %s11, 1
    %p71 = scmp.ne.s32.totalorder %s66, %s68
    %p72 = scmp.eq.s32.totalorder %s11, 0
    %p73 = por %p71, %p72
    %p74 = scmp.ne.s32.totalorder %s66, %s68
    %p75 = scmp.eq.s32.totalorder %s16, 1
    %p76 = por %p74, %p75
    %p77 = scmp.ne.s32.totalorder %s68, %s69
    %p78 = scmp.eq.s32.totalorder %s16, 0
    %p79 = por %p77, %p78
    %p80 = scmp.ne.s32.totalorder %s68, %s69
    %p81 = scmp.eq.s32.totalorder %s17, 1
    %p82 = por %p80, %p81
    %p84 = scmp.ne.s32.totalorder %s69, %s83
    %p85 = scmp.eq.s32.totalorder %s17, 0
    %p86 = por %p84, %p85
    %s88 = sadd.s32 %s87, 1
    %p91 = scmp.eq.s32.totalorder %s11, 1
    %p92 = scmp.ne.s32.totalorder %s87, %s89
    %p93 = scmp.eq.s32.totalorder %s11, 0
    %p94 = por %p92, %p93
    %p95 = scmp.ne.s32.totalorder %s87, %s89
    %p96 = scmp.eq.s32.totalorder %s16, 1
    %p97 = por %p95, %p96
    %p98 = scmp.ne.s32.totalorder %s89, %s90
    %p99 = scmp.eq.s32.totalorder %s16, 0
    %p100 = por %p98, %p99
    %p101 = scmp.ne.s32.totalorder %s89, %s90
    %p102 = scmp.eq.s32.totalorder %s17, 1
    %p103 = por %p101, %p102
    %p105 = scmp.ne.s32.totalorder %s90, %s104
    %p106 = scmp.eq.s32.totalorder %s17, 0
    %p107 = por %p105, %p106
    %s109 = sadd.s32 %s108, 1
    %p112 = scmp.eq.s32.totalorder %s11, 1
    %p113 = scmp.ne.s32.totalorder %s108, %s110
    %p114 = scmp.eq.s32.totalorder %s11, 0
    %p115 = por %p113, %p114
    %p116 = scmp.ne.s32.totalorder %s108, %s110
    %p117 = scmp.eq.s32.totalorder %s16, 1
    %p118 = por %p116, %p117
    %p119 = scmp.ne.s32.totalorder %s110, %s111
    %p120 = scmp.eq.s32.totalorder %s16, 0
    %p121 = por %p119, %p120
    %p122 = scmp.ne.s32.totalorder %s110, %s111
    %p123 = scmp.eq.s32.totalorder %s17, 1
    %p124 = por %p122, %p123
    %p126 = scmp.ne.s32.totalorder %s111, %s125
    %p127 = scmp.eq.s32.totalorder %s17, 0
    %p128 = por %p126, %p127
    %s129 = ssub.s32 %s11, %s18
    %p130 = scmp.eq.s32.totalorder %s129, 0
    %s132 = sadd.s32 %s131, 1
    %s133 = scalar_select %p130, %s131, %s132
    %p136 = pneg %p130
    %p137 = scmp.eq.s32.totalorder %s11, 1
    %p138 = por %p136, %p137
    %p139 = scmp.ne.s32.totalorder %s131, %s134
    %p140 = scmp.eq.s32.totalorder %s11, 0
    %p141 = por %p139, %p140
    %p142 = scmp.ne.s32.totalorder %s131, %s134
    %p143 = scmp.eq.s32.totalorder %s16, 1
    %p144 = por %p142, %p143
    %p145 = scmp.ne.s32.totalorder %s134, %s135
    %p146 = scmp.eq.s32.totalorder %s16, 0
    %p147 = por %p145, %p146
    %p148 = scmp.ne.s32.totalorder %s134, %s135
    %p149 = scmp.eq.s32.totalorder %s17, 1
    %p150 = por %p148, %p149
    %p152 = scmp.ne.s32.totalorder %s135, %s151
    %p153 = scmp.eq.s32.totalorder %s17, 0
    %p154 = por %p152, %p153
    %p155 = scmp.le.s32.totalorder 1, %s11
    %p156 = scmp.lt.s32.totalorder %s11, 3
    %p157 = pnand %p155, %p156
    %p158 = pneg %p157
    // Predicated region
    $region9: #{down_forward.1} parent=5 // pred_check
      _
    $region10: #{down_forward.1} parent=5 // pred_check_branch
      %160 = sbr.rel (%p157) target = $region12
    $region11: #{down_forward.1} parent=5 // pred_region
      %s161 = ssub.s32 %s11, 1
      // Predicated region
      $region13: #{down_forward.1} parent=11 // pred_check
        %p162 = pneg %p58
      $region14: #{down_forward.1} parent=11 // pred_check_branch
        %164 = sbr.rel (%p162) target = $region16
      $region15: #{down_forward.1} parent=11 // pred_region
        _
      $region16: #{down_forward.1} parent=11 // pred_fallthru
        _
      // Predicated region
      $region17: #{down_forward.1} parent=11 // pred_check
        %p165 = pneg %p79
      $region18: #{down_forward.1} parent=11 // pred_check_branch
        %167 = sbr.rel (%p165) target = $region20
      $region19: #{down_forward.1} parent=11 // pred_region
        _
      $region20: #{down_forward.1} parent=11 // pred_fallthru
        _
      // Predicated region
      $region21: #{down_forward.1} parent=11 // pred_check
        %p168 = pneg %p100
      $region22: #{down_forward.1} parent=11 // pred_check_branch
        %170 = sbr.rel (%p168) target = $region24
      $region23: #{down_forward.1} parent=11 // pred_region
        _
      $region24: #{down_forward.1} parent=11 // pred_fallthru
        _
      // Predicated region
      $region25: #{down_forward.1} parent=11 // pred_check
        %p171 = pneg %p121
      $region26: #{down_forward.1} parent=11 // pred_check_branch
        %173 = sbr.rel (%p171) target = $region28
      $region27: #{down_forward.1} parent=11 // pred_region
        _
      $region28: #{down_forward.1} parent=11 // pred_fallthru
        _
    $region12: #{down_forward.1} parent=5 // pred_fallthru
      _
    %p174 = scmp.lt.s32.totalorder %s11, 2
    // Predicated region
    $region29: #{down_forward.1} parent=5 // pred_check
      %p175 = pneg %p174
    $region30: #{down_forward.1} parent=5 // pred_check_branch
      %177 = sbr.rel (%p175) target = $region32
    $region31: #{down_forward.1} parent=5 // pred_region
      // Predicated region
      $region33: #{down_forward.1} parent=31 // pred_check
        %p178 = pneg %p31
      $region34: #{down_forward.1} parent=31 // pred_check_branch
        %180 = sbr.rel (%p178) target = $region36
      $region35: #{down_forward.1} parent=31 // pred_region
        %p181 = scmp.lt.s32.totalorder %s11, 1
        %s182 = scalar_select %p181, %s11, 1
        %s183 = smul.addr %s182, 32
        %s184 = smul.addr %s183, 8
        %s185 = scalar_lea.vmem %s0, %s184
      $region36: #{down_forward.1} parent=31 // pred_fallthru
        _
    $region32: #{down_forward.1} parent=5 // pred_fallthru
      _
    %p186 = scmp.le.s32.totalorder 1, %s11
    %p187 = scmp.lt.s32.totalorder %s11, 3
    %p188 = pnand %p186, %p187
    %p189 = pneg %p188
    // Predicated region
    $region37: #{down_forward.1} parent=5 // pred_check
      _
    $region38: #{down_forward.1} parent=5 // pred_check_branch
      %191 = sbr.rel (%p188) target = $region40
    $region39: #{down_forward.1} parent=5 // pred_region
      %s192 = ssub.s32 %s11, 1
      %p193 = scmp.lt.s32.totalorder %s16, 1
      %s194 = scalar_select %p193, %s16, 1
      %s195 = smul.addr %s194, 32
      %s196 = smul.addr %s195, 8
      %s197 = scalar_lea.vmem %s0, %s196
      %p198 = pneg %p37
      %p199 = pneg %p34
      %p200 = pneg %p58
      %p201 = pneg %p55
      %p202 = pneg %p79
      %p203 = pneg %p76
      %p204 = pneg %p100
      %p205 = pneg %p97
      %p206 = pneg %p121
      %p207 = pneg %p118
      %p208 = pneg %p147
      %p209 = pneg %p144
      %p210 = scmp.lt.s32.totalorder %s16, 1
      %s211 = scalar_select %p210, %s16, 1
      %s212 = smul.addr %s211, 8
      %s213 = smul.addr %s212, 8
      %s214 = scalar_lea.vmem %s5, %s213
      %p215 = scmp.lt.s32.totalorder %s16, 1
      %s216 = scalar_select %p215, %s16, 1
      %s217 = smul.addr %s216, 32
      %s218 = smul.addr %s217, 8
      %s219 = scalar_lea.vmem %s0, %s218
      %p220 = scmp.lt.s32.totalorder %s16, 1
      %s221 = scalar_select %p220, %s16, 1
      %s222 = smul.addr %s221, 8
      %s223 = smul.addr %s222, 8
      %s224 = scalar_lea.vmem %s5, %s223
      %vm225 = vcmask 31744
      %226 = vst.msk [vmem:[#allocation2] sm:$0xff] %vm225, 0.0
      %vm227 = vcmask 25600
      %228 = vst.msk [vmem:[#allocation2 + $0x8] sm:$0x3] %vm227, 0.0
      %s229 = scalar_lea.vmem [#allocation2], 144
      %230 = vst.msk [vmem:[%s229] sm:$0xff] %vm225, 0.0
      %231 = vst.msk [vmem:[%s229 + $0x8] sm:$0x3] %vm227, 0.0
      %vm232 = vcmask 24576
      %233 = vst.msk [vmem:[#allocation2] sm:$0x1] %vm232, 0.0
      %234 = vst.msk [vmem:[#allocation2 + $0x10] sm:$0x1] %vm232, 0.0
      %235 = vst.msk [vmem:[#allocation2 + $0x20] sm:$0x1] %vm232, 0.0
      %236 = vst.msk [vmem:[#allocation2 + $0x30] sm:$0x1] %vm232, 0.0
      %237 = vst.msk [vmem:[#allocation2 + $0x40] sm:$0x1] %vm232, 0.0
      %238 = vst.msk [vmem:[#allocation2 + $0x50] sm:$0x1] %vm232, 0.0
      %239 = vst.msk [vmem:[#allocation2 + $0x60] sm:$0x1] %vm232, 0.0
      %240 = vst.msk [vmem:[#allocation2 + $0x70] sm:$0x1] %vm232, 0.0
      %241 = vst.msk [vmem:[#allocation2 + $0x80] sm:$0x1] %vm232, 0.0
      %242 = vst.msk [vmem:[#allocation2 + $0x90] sm:$0x1] %vm232, 0.0
      %243 = vst.msk [vmem:[#allocation2 + $0x9] sm:$0x1] %vm232, 0.0
      %244 = vst.msk [vmem:[#allocation2 + $0x19] sm:$0x1] %vm232, 0.0
      %245 = vst.msk [vmem:[#allocation2 + $0x29] sm:$0x1] %vm232, 0.0
      %246 = vst.msk [vmem:[#allocation2 + $0x39] sm:$0x1] %vm232, 0.0
      %247 = vst.msk [vmem:[#allocation2 + $0x49] sm:$0x1] %vm232, 0.0
      %248 = vst.msk [vmem:[#allocation2 + $0x59] sm:$0x1] %vm232, 0.0
      %249 = vst.msk [vmem:[#allocation2 + $0x69] sm:$0x1] %vm232, 0.0
      %250 = vst.msk [vmem:[#allocation2 + $0x79] sm:$0x1] %vm232, 0.0
      %251 = vst.msk [vmem:[#allocation2 + $0x89] sm:$0x1] %vm232, 0.0
      %252 = vst.msk [vmem:[#allocation2 + $0x99] sm:$0x1] %vm232, 0.0
      %vm253 = vcmask 64512
      %254 = vst.msk [vmem:[#allocation3] sm:$0xff] %vm253, 0.0
      %vm255 = vcmask 58368
      %256 = vst.msk [vmem:[#allocation3 + $0x8] sm:$0x3] %vm255, 0.0
      %s257 = scalar_lea.vmem [#allocation3], 144
      %258 = vst.msk [vmem:[%s257] sm:$0xff] %vm253, 0.0
      %259 = vst.msk [vmem:[%s257 + $0x8] sm:$0x3] %vm255, 0.0
      %vm260 = vcmask 57344
      %261 = vst.msk [vmem:[#allocation3] sm:$0x1] %vm260, 0.0
      %262 = vst.msk [vmem:[#allocation3 + $0x10] sm:$0x1] %vm260, 0.0
      %263 = vst.msk [vmem:[#allocation3 + $0x20] sm:$0x1] %vm260, 0.0
      %264 = vst.msk [vmem:[#allocation3 + $0x30] sm:$0x1] %vm260, 0.0
      %265 = vst.msk [vmem:[#allocation3 + $0x40] sm:$0x1] %vm260, 0.0
      %266 = vst.msk [vmem:[#allocation3 + $0x50] sm:$0x1] %vm260, 0.0
      %267 = vst.msk [vmem:[#allocation3 + $0x60] sm:$0x1] %vm260, 0.0
      %268 = vst.msk [vmem:[#allocation3 + $0x70] sm:$0x1] %vm260, 0.0
      %269 = vst.msk [vmem:[#allocation3 + $0x80] sm:$0x1] %vm260, 0.0
      %270 = vst.msk [vmem:[#allocation3 + $0x90] sm:$0x1] %vm260, 0.0
      %271 = vst.msk [vmem:[#allocation3 + $0x9] sm:$0x1] %vm260, 0.0
      %272 = vst.msk [vmem:[#allocation3 + $0x19] sm:$0x1] %vm260, 0.0
      %273 = vst.msk [vmem:[#allocation3 + $0x29] sm:$0x1] %vm260, 0.0
      %274 = vst.msk [vmem:[#allocation3 + $0x39] sm:$0x1] %vm260, 0.0
      %275 = vst.msk [vmem:[#allocation3 + $0x49] sm:$0x1] %vm260, 0.0
      %276 = vst.msk [vmem:[#allocation3 + $0x59] sm:$0x1] %vm260, 0.0
      %277 = vst.msk [vmem:[#allocation3 + $0x69] sm:$0x1] %vm260, 0.0
      %278 = vst.msk [vmem:[#allocation3 + $0x79] sm:$0x1] %vm260, 0.0
      %279 = vst.msk [vmem:[#allocation3 + $0x89] sm:$0x1] %vm260, 0.0
      %280 = vst.msk [vmem:[#allocation3 + $0x99] sm:$0x1] %vm260, 0.0
      %v281 = vld [vmem:[%s219] sm:$0xff]
      %v282 = vld [vmem:[%s219 + $0x8] sm:$0xff]
      %v283 = vld [vmem:[%s219 + $0x10] sm:$0xff]
      %v284 = vld [vmem:[%s219 + $0x18] sm:$0xff]
      %v285 = vld [vmem:[%s219 + $0x20] sm:$0xff]
      %v286 = vld [vmem:[%s219 + $0x28] sm:$0xff]
      %v287 = vld [vmem:[%s219 + $0x30] sm:$0xff]
      %v288 = vld [vmem:[%s219 + $0x38] sm:$0xff]
      %s289 = scalar_lea.vmem %s219, 64
      %v290 = vld [vmem:[%s289] sm:$0xff]
      %v291 = vld [vmem:[%s289 + $0x8] sm:$0xff]
      %v292 = vld [vmem:[%s289 + $0x10] sm:$0xff]
      %v293 = vld [vmem:[%s289 + $0x18] sm:$0xff]
      %v294 = vld [vmem:[%s289 + $0x20] sm:$0xff]
      %v295 = vld [vmem:[%s289 + $0x28] sm:$0xff]
      %v296 = vld [vmem:[%s289 + $0x30] sm:$0xff]
      %v297 = vld [vmem:[%s289 + $0x38] sm:$0xff]
      %v298 = vmax.f32 %v281, %v290
      %v299 = vmax.f32 %v282, %v291
      %v300 = vmax.f32 %v283, %v292
      %v301 = vmax.f32 %v284, %v293
      %v302 = vmax.f32 %v285, %v294
      %v303 = vmax.f32 %v286, %v295
      %v304 = vmax.f32 %v287, %v296
      %v305 = vmax.f32 %v288, %v297
      %s306 = scalar_lea.vmem %s219, 128
      %v307 = vld [vmem:[%s306] sm:$0xff]
      %v308 = vld [vmem:[%s306 + $0x8] sm:$0xff]
      %v309 = vld [vmem:[%s306 + $0x10] sm:$0xff]
      %v310 = vld [vmem:[%s306 + $0x18] sm:$0xff]
      %v311 = vld [vmem:[%s306 + $0x20] sm:$0xff]
      %v312 = vld [vmem:[%s306 + $0x28] sm:$0xff]
      %v313 = vld [vmem:[%s306 + $0x30] sm:$0xff]
      %v314 = vld [vmem:[%s306 + $0x38] sm:$0xff]
      %s315 = scalar_lea.vmem %s219, 192
      %v316 = vld [vmem:[%s315] sm:$0xff]
      %v317 = vld [vmem:[%s315 + $0x8] sm:$0xff]
      %v318 = vld [vmem:[%s315 + $0x10] sm:$0xff]
      %v319 = vld [vmem:[%s315 + $0x18] sm:$0xff]
      %v320 = vld [vmem:[%s315 + $0x20] sm:$0xff]
      %v321 = vld [vmem:[%s315 + $0x28] sm:$0xff]
      %v322 = vld [vmem:[%s315 + $0x30] sm:$0xff]
      %v323 = vld [vmem:[%s315 + $0x38] sm:$0xff]
      %v324 = vmax.f32 %v307, %v316
      %v325 = vmax.f32 %v308, %v317
      %v326 = vmax.f32 %v309, %v318
      %v327 = vmax.f32 %v310, %v319
      %v328 = vmax.f32 %v311, %v320
      %v329 = vmax.f32 %v312, %v321
      %v330 = vmax.f32 %v313, %v322
      %v331 = vmax.f32 %v314, %v323
      %v332 = vmax.f32 %v298, %v324
      %v333 = vmax.f32 %v299, %v325
      %v334 = vmax.f32 %v300, %v326
      %v335 = vmax.f32 %v301, %v327
      %v336 = vmax.f32 %v302, %v328
      %v337 = vmax.f32 %v303, %v329
      %v338 = vmax.f32 %v304, %v330
      %v339 = vmax.f32 %v305, %v331
      %s340 = scalar_lea.vmem [#allocation2], 16
      %341 = vst.msk [vmem:[%s340 + $0x1] sm:$0xff] %vm225, %v332
      %342 = vst.msk [vmem:[%s340 + $0x11] sm:$0xff] %vm225, %v333
      %343 = vst.msk [vmem:[%s340 + $0x21] sm:$0xff] %vm225, %v334
      %344 = vst.msk [vmem:[%s340 + $0x31] sm:$0xff] %vm225, %v335
      %345 = vst.msk [vmem:[%s340 + $0x41] sm:$0xff] %vm225, %v336
      %346 = vst.msk [vmem:[%s340 + $0x51] sm:$0xff] %vm225, %v337
      %347 = vst.msk [vmem:[%s340 + $0x61] sm:$0xff] %vm225, %v338
      %348 = vst.msk [vmem:[%s340 + $0x71] sm:$0xff] %vm225, %v339
      %v349 = vld [vmem:[#allocation2] sm:$0xff]
      %v350 = vld [vmem:[#allocation2 + $0x8] sm:$0x3]
      %v351 = vld [vmem:[#allocation2 + $0x10] sm:$0xff]
      %v352 = vld [vmem:[#allocation2 + $0x18] sm:$0x3]
      %v353 = vld [vmem:[#allocation2 + $0x20] sm:$0xff]
      %v354 = vld [vmem:[#allocation2 + $0x28] sm:$0x3]
      %v355 = vld [vmem:[#allocation2 + $0x30] sm:$0xff]
      %v356 = vld [vmem:[#allocation2 + $0x38] sm:$0x3]
      %v357 = vld [vmem:[#allocation2 + $0x40] sm:$0xff]
      %v358 = vld [vmem:[#allocation2 + $0x48] sm:$0x3]
      %v359 = vld [vmem:[#allocation2 + $0x50] sm:$0xff]
      %v360 = vld [vmem:[#allocation2 + $0x58] sm:$0x3]
      %v361 = vld [vmem:[#allocation2 + $0x60] sm:$0xff]
      %v362 = vld [vmem:[#allocation2 + $0x68] sm:$0x3]
      %v363 = vld [vmem:[#allocation2 + $0x70] sm:$0xff]
      %v364 = vld [vmem:[#allocation2 + $0x78] sm:$0x3]
      %v365 = vld [vmem:[#allocation2 + $0x80] sm:$0xff]
      %v366 = vld [vmem:[#allocation2 + $0x88] sm:$0x3]
      %v367 = vld [vmem:[#allocation2 + $0x90] sm:$0xff]
      %v368 = vld [vmem:[#allocation2 + $0x98] sm:$0x3]
      %v369 = vld [vmem:[%s1] sm:$0xf]
      %s370 = scalar_lea.vmem %s1, 12
      %v371 = vld [vmem:[%s370] sm:$0xf]
      %v373 = vsel %vm225, %v351, 0
      %v376 = vsel %vm225, %v353, 0
      %v379 = vsel %vm225, %v355, 0
      %v382 = vsel %vm225, %v357, 0
      %v385 = vsel %vm225, %v359, 0
      %v388 = vsel %vm225, %v361, 0
      %v391 = vsel %vm225, %v363, 0
      %v394 = vsel %vm225, %v365, 0
      %vm396 = vcmask 1043456
      %v398 = vsel %vm396, %v371, 0
      %400 = vmatprep.subr.mxu0 0.0
      %401 = vmatpush1.msra.mxu0 %v398
      %402 = vmatprep.subr.mxu0 0.0
      %403 = vmatpush1.msra.mxu0 0.0
      %404 = vmatprep.subr.mxu0 0.0
      %405 = vmatpush1.msra.mxu0 0.0
      %406 = vmatprep.subr.mxu0 0.0
      %407 = vmatpush1.msra.mxu0 0.0
      %408 = vmatprep.subr.mxu0 0.0
      %409 = vmatpush1.msra.mxu0 0.0
      %410 = vmatprep.subr.mxu0 0.0
      %411 = vmatpush1.msra.mxu0 0.0
      %412 = vmatprep.subr.mxu0 0.0
      %413 = vmatpush1.msra.mxu0 0.0
      %414 = vmatprep.subr.mxu0 0.0
      %415 = vmatpush1.msra.mxu0 0.0
      %416 = vmatprep.subr.mxu0 0.0
      %417 = vmatpush1.msra.mxu0 0.0
      %418 = vmatprep.subr.mxu0 0.0
      %419 = vmatpush1.msra.mxu0 0.0
      %420 = vmatprep.subr.mxu0 0.0
      %421 = vmatpush1.msra.mxu0 0.0
      %422 = vmatprep.subr.mxu0 0.0
      %423 = vmatpush1.msra.mxu0 0.0
      %424 = vmatprep.subr.mxu0 0.0
      %425 = vmatpush1.msra.mxu0 0.0
      %426 = vmatprep.subr.mxu0 0.0
      %427 = vmatpush1.msra.mxu0 0.0
      %428 = vmatprep.subr.mxu0 0.0
      %429 = vmatpush1.msra.mxu0 0.0
      %430 = vmatprep.subr.mxu0 0.0
      %431 = vmatpush1.msra.mxu0 0.0
      %432 = vmatprep.subr.mxu0 0.0
      %433 = vmatpush1.msra.mxu0 0.0
      %434 = vmatprep.subr.mxu0 0.0
      %435 = vmatpush1.msra.mxu0 0.0
      %436 = vmatprep.subr.mxu0 0.0
      %437 = vmatpush1.msra.mxu0 0.0
      %438 = vmatprep.subr.mxu0 0.0
      %439 = vmatpush1.msra.mxu0 0.0
      %440 = vmatprep.subr.mxu0 0.0
      %441 = vmatpush1.msra.mxu0 0.0
      %442 = vmatprep.subr.mxu0 0.0
      %443 = vmatpush1.msra.mxu0 0.0
      %444 = vmatprep.subr.mxu0 0.0
      %445 = vmatpush1.msra.mxu0 0.0
      %446 = vmatprep.subr.mxu0 0.0
      %447 = vmatpush1.msra.mxu0 0.0
      %448 = vmatprep.subr.mxu0 0.0
      %449 = vmatpush1.msra.mxu0 0.0
      %450 = vmatprep.subr.mxu0 0.0
      %451 = vmatpush1.msra.mxu0 0.0
      %452 = vmatprep.subr.mxu0 0.0
      %453 = vmatpush1.msra.mxu0 0.0
      %454 = vmatprep.subr.mxu0 0.0
      %455 = vmatpush1.msra.mxu0 0.0
      %456 = vmatprep.subr.mxu0 0.0
      %457 = vmatpush1.msra.mxu0 0.0
      %458 = vmatprep.subr.mxu0 0.0
      %459 = vmatpush1.msra.mxu0 0.0
      %460 = vmatprep.subr.mxu0 0.0
      %461 = vmatpush1.msra.mxu0 0.0
      %462 = vmatprep.subr.mxu0 0.0
      %463 = vmatpush1.msra.mxu0 0.0
      %464 = vmatprep.mubr.f32.mxu0 0.0
      %465 = vmatmul.mubr.f32.gmra.mrb[0].mxu0 %v373
      %v466 = vpop.f32.mrb[0].mxu0
      %v467 = vadd.f32 0.0, %v466
      %v468 = vpop.f32.mrb[0].mxu0
      %469 = vmatprep.mubr.f32.mxu0 0.0
      %470 = vmatmul.mubr.f32.gmra.mrb[0].mxu0 %v376
      %v471 = vpop.f32.mrb[0].mxu0
      %v472 = vadd.f32 0.0, %v471
      %v473 = vpop.f32.mrb[0].mxu0
      %474 = vmatprep.mubr.f32.mxu0 0.0
      %475 = vmatmul.mubr.f32.gmra.mrb[0].mxu0 %v379
      %v476 = vpop.f32.mrb[0].mxu0
      %v477 = vadd.f32 0.0, %v476
      %v478 = vpop.f32.mrb[0].mxu0
      %479 = vmatprep.mubr.f32.mxu0 0.0
      %480 = vmatmul.mubr.f32.gmra.mrb[0].mxu0 %v382
      %v481 = vpop.f32.mrb[0].mxu0
      %v482 = vadd.f32 0.0, %v481
      %v483 = vpop.f32.mrb[0].mxu0
      %484 = vmatprep.mubr.f32.mxu0 0.0
      %485 = vmatmul.mubr.f32.gmra.mrb[0].mxu0 %v385
      %v486 = vpop.f32.mrb[0].mxu0
      %v487 = vadd.f32 0.0, %v486
      %v488 = vpop.f32.mrb[0].mxu0
      %489 = vmatprep.mubr.f32.mxu0 0.0
      %490 = vmatmul.mubr.f32.gmra.mrb[0].mxu0 %v388
      %v491 = vpop.f32.mrb[0].mxu0
      %v492 = vadd.f32 0.0, %v491
      %v493 = vpop.f32.mrb[0].mxu0
      %494 = vmatprep.mubr.f32.mxu0 0.0
      %495 = vmatmul.mubr.f32.gmra.mrb[0].mxu0 %v391
      %v496 = vpop.f32.mrb[0].mxu0
      %v497 = vadd.f32 0.0, %v496
      %v498 = vpop.f32.mrb[0].mxu0
      %499 = vmatprep.mubr.f32.mxu0 0.0
      %500 = vmatmul.mubr.f32.gmra.mrb[0].mxu0 %v394
      %v501 = vpop.f32.mrb[0].mxu0
      %v502 = vadd.f32 0.0, %v501
      %v503 = vpop.f32.mrb[0].mxu0
      %504 = vdwg.mxu0
      %v506 = vsel %vm225, %v349, 0
      %v509 = vsel %vm396, %v369, 0
      %511 = vmatprep.subr.mxu0 0.0
      %512 = vmatpush1.msra.mxu0 %v509
      %513 = vmatprep.subr.mxu0 0.0
      %514 = vmatpush1.msra.mxu0 0.0
      %515 = vmatprep.subr.mxu0 0.0
      %516 = vmatpush1.msra.mxu0 0.0
      %517 = vmatprep.subr.mxu0 0.0
      %518 = vmatpush1.msra.mxu0 0.0
      %519 = vmatprep.subr.mxu0 0.0
      %520 = vmatpush1.msra.mxu0 0.0
      %521 = vmatprep.subr.mxu0 0.0
      %522 = vmatpush1.msra.mxu0 0.0
      %523 = vmatprep.subr.mxu0 0.0
      %524 = vmatpush1.msra.mxu0 0.0
      %525 = vmatprep.subr.mxu0 0.0
      %526 = vmatpush1.msra.mxu0 0.0
      %527 = vmatprep.subr.mxu0 0.0
      %528 = vmatpush1.msra.mxu0 0.0
      %529 = vmatprep.subr.mxu0 0.0
      %530 = vmatpush1.msra.mxu0 0.0
      %531 = vmatprep.subr.mxu0 0.0
      %532 = vmatpush1.msra.mxu0 0.0
      %533 = vmatprep.subr.mxu0 0.0
      %534 = vmatpush1.msra.mxu0 0.0
      %535 = vmatprep.subr.mxu0 0.0
      %536 = vmatpush1.msra.mxu0 0.0
      %537 = vmatprep.subr.mxu0 0.0
      %538 = vmatpush1.msra.mxu0 0.0
      %539 = vmatprep.subr.mxu0 0.0
      %540 = vmatpush1.msra.mxu0 0.0
      %541 = vmatprep.subr.mxu0 0.0
      %542 = vmatpush1.msra.mxu0 0.0
      %543 = vmatprep.subr.mxu0 0.0
      %544 = vmatpush1.msra.mxu0 0.0
      %545 = vmatprep.subr.mxu0 0.0
      %546 = vmatpush1.msra.mxu0 0.0
      %547 = vmatprep.subr.mxu0 0.0
      %548 = vmatpush1.msra.mxu0 0.0
      %549 = vmatprep.subr.mxu0 0.0
      %550 = vmatpush1.msra.mxu0 0.0
      %551 = vmatprep.subr.mxu0 0.0
      %552 = vmatpush1.msra.mxu0 0.0
      %553 = vmatprep.subr.mxu0 0.0
      %554 = vmatpush1.msra.mxu0 0.0
      %555 = vmatprep.subr.mxu0 0.0
      %556 = vmatpush1.msra.mxu0 0.0
      %557 = vmatprep.subr.mxu0 0.0
      %558 = vmatpush1.msra.mxu0 0.0
      %559 = vmatprep.subr.mxu0 0.0
      %560 = vmatpush1.msra.mxu0 0.0
      %561 = vmatprep.subr.mxu0 0.0
      %562 = vmatpush1.msra.mxu0 0.0
      %563 = vmatprep.subr.mxu0 0.0
      %564 = vmatpush1.msra.mxu0 0.0
      %565 = vmatprep.subr.mxu0 0.0
      %566 = vmatpush1.msra.mxu0 0.0
      %567 = vmatprep.subr.mxu0 0.0
      %568 = vmatpush1.msra.mxu0 0.0
      %569 = vmatprep.subr.mxu0 0.0
      %570 = vmatpush1.msra.mxu0 0.0
      %571 = vmatprep.subr.mxu0 0.0
      %572 = vmatpush1.msra.mxu0 0.0
      %573 = vmatprep.subr.mxu0 0.0
      %574 = vmatpush1.msra.mxu0 0.0
      %575 = vmatprep.mubr.f32.mxu0 0.0
      %576 = vmatmul.mubr.f32.gmra.mrb[0].mxu0 %v506
      %v577 = vpop.f32.mrb[0].mxu0
      %v578 = vadd.f32 %v467, %v577
      %v579 = vpop.f32.mrb[0].mxu0
      %580 = vmatprep.mubr.f32.mxu0 0.0
      %581 = vmatmul.mubr.f32.gmra.mrb[0].mxu0 %v373
      %v582 = vpop.f32.mrb[0].mxu0
      %v583 = vadd.f32 %v472, %v582
      %v584 = vpop.f32.mrb[0].mxu0
      %585 = vmatprep.mubr.f32.mxu0 0.0
      %586 = vmatmul.mubr.f32.gmra.mrb[0].mxu0 %v376
      %v587 = vpop.f32.mrb[0].mxu0
      %v588 = vadd.f32 %v477, %v587
      %v589 = vpop.f32.mrb[0].mxu0
      %590 = vmatprep.mubr.f32.mxu0 0.0
      %591 = vmatmul.mubr.f32.gmra.mrb[0].mxu0 %v379
      %v592 = vpop.f32.mrb[0].mxu0
      %v593 = vadd.f32 %v482, %v592
      %v594 = vpop.f32.mrb[0].mxu0
      %595 = vmatprep.mubr.f32.mxu0 0.0
      %596 = vmatmul.mubr.f32.gmra.mrb[0].mxu0 %v382
      %v597 = vpop.f32.mrb[0].mxu0
      %v598 = vadd.f32 %v487, %v597
      %v599 = vpop.f32.mrb[0].mxu0
      %600 = vmatprep.mubr.f32.mxu0 0.0
      %601 = vmatmul.mubr.f32.gmra.mrb[0].mxu0 %v385
      %v602 = vpop.f32.mrb[0].mxu0
      %v603 = vadd.f32 %v492, %v602
      %v604 = vpop.f32.mrb[0].mxu0
      %605 = vmatprep.mubr.f32.mxu0 0.0
      %606 = vmatmul.mubr.f32.gmra.mrb[0].mxu0 %v388
      %v607 = vpop.f32.mrb[0].mxu0
      %v608 = vadd.f32 %v497, %v607
      %v609 = vpop.f32.mrb[0].mxu0
      %610 = vmatprep.mubr.f32.mxu0 0.0
      %611 = vmatmul.mubr.f32.gmra.mrb[0].mxu0 %v391
      %v612 = vpop.f32.mrb[0].mxu0
      %v613 = vadd.f32 %v502, %v612
      %v614 = vpop.f32.mrb[0].mxu0
      %615 = vdwg.mxu0
      %s616 = scalar_lea.vmem %s1, 24
      %v617 = vld [vmem:[%s616] sm:$0xf]
      %v619 = vsel %vm225, %v367, 0
      %v622 = vsel %vm396, %v617, 0
      %624 = vmatprep.subr.mxu0 0.0
      %625 = vmatpush1.msra.mxu0 %v622
      %626 = vmatprep.subr.mxu0 0.0
      %627 = vmatpush1.msra.mxu0 0.0
      %628 = vmatprep.subr.mxu0 0.0
      %629 = vmatpush1.msra.mxu0 0.0
      %630 = vmatprep.subr.mxu0 0.0
      %631 = vmatpush1.msra.mxu0 0.0
      %632 = vmatprep.subr.mxu0 0.0
      %633 = vmatpush1.msra.mxu0 0.0
      %634 = vmatprep.subr.mxu0 0.0
      %635 = vmatpush1.msra.mxu0 0.0
      %636 = vmatprep.subr.mxu0 0.0
      %637 = vmatpush1.msra.mxu0 0.0
      %638 = vmatprep.subr.mxu0 0.0
      %639 = vmatpush1.msra.mxu0 0.0
      %640 = vmatprep.subr.mxu0 0.0
      %641 = vmatpush1.msra.mxu0 0.0
      %642 = vmatprep.subr.mxu0 0.0
      %643 = vmatpush1.msra.mxu0 0.0
      %644 = vmatprep.subr.mxu0 0.0
      %645 = vmatpush1.msra.mxu0 0.0
      %646 = vmatprep.subr.mxu0 0.0
      %647 = vmatpush1.msra.mxu0 0.0
      %648 = vmatprep.subr.mxu0 0.0
      %649 = vmatpush1.msra.mxu0 0.0
      %650 = vmatprep.subr.mxu0 0.0
      %651 = vmatpush1.msra.mxu0 0.0
      %652 = vmatprep.subr.mxu0 0.0
      %653 = vmatpush1.msra.mxu0 0.0
      %654 = vmatprep.subr.mxu0 0.0
      %655 = vmatpush1.msra.mxu0 0.0
      %656 = vmatprep.subr.mxu0 0.0
      %657 = vmatpush1.msra.mxu0 0.0
      %658 = vmatprep.subr.mxu0 0.0
      %659 = vmatpush1.msra.mxu0 0.0
      %660 = vmatprep.subr.mxu0 0.0
      %661 = vmatpush1.msra.mxu0 0.0
      %662 = vmatprep.subr.mxu0 0.0
      %663 = vmatpush1.msra.mxu0 0.0
      %664 = vmatprep.subr.mxu0 0.0
      %665 = vmatpush1.msra.mxu0 0.0
      %666 = vmatprep.subr.mxu0 0.0
      %667 = vmatpush1.msra.mxu0 0.0
      %668 = vmatprep.subr.mxu0 0.0
      %669 = vmatpush1.msra.mxu0 0.0
      %670 = vmatprep.subr.mxu0 0.0
      %671 = vmatpush1.msra.mxu0 0.0
      %672 = vmatprep.subr.mxu0 0.0
      %673 = vmatpush1.msra.mxu0 0.0
      %674 = vmatprep.subr.mxu0 0.0
      %675 = vmatpush1.msra.mxu0 0.0
      %676 = vmatprep.subr.mxu0 0.0
      %677 = vmatpush1.msra.mxu0 0.0
      %678 = vmatprep.subr.mxu0 0.0
      %679 = vmatpush1.msra.mxu0 0.0
      %680 = vmatprep.subr.mxu0 0.0
      %681 = vmatpush1.msra.mxu0 0.0
      %682 = vmatprep.subr.mxu0 0.0
      %683 = vmatpush1.msra.mxu0 0.0
      %684 = vmatprep.subr.mxu0 0.0
      %685 = vmatpush1.msra.mxu0 0.0
      %686 = vmatprep.subr.mxu0 0.0
      %687 = vmatpush1.msra.mxu0 0.0
      %688 = vmatprep.mubr.f32.mxu0 0.0
      %689 = vmatmul.mubr.f32.gmra.mrb[0].mxu0 %v376
      %v690 = vpop.f32.mrb[0].mxu0
      %v691 = vadd.f32 0.0, %v690
      %v692 = vpop.f32.mrb[0].mxu0
      %693 = vmatprep.mubr.f32.mxu0 0.0
      %694 = vmatmul.mubr.f32.gmra.mrb[0].mxu0 %v379
      %v695 = vpop.f32.mrb[0].mxu0
      %v696 = vadd.f32 0.0, %v695
      %v697 = vpop.f32.mrb[0].mxu0
      %698 = vmatprep.mubr.f32.mxu0 0.0
      %699 = vmatmul.mubr.f32.gmra.mrb[0].mxu0 %v382
      %v700 = vpop.f32.mrb[0].mxu0
      %v701 = vadd.f32 0.0, %v700
      %v702 = vpop.f32.mrb[0].mxu0
      %703 = vmatprep.mubr.f32.mxu0 0.0
      %704 = vmatmul.mubr.f32.gmra.mrb[0].mxu0 %v385
      %v705 = vpop.f32.mrb[0].mxu0
      %v706 = vadd.f32 0.0, %v705
      %v707 = vpop.f32.mrb[0].mxu0
      %708 = vmatprep.mubr.f32.mxu0 0.0
      %709 = vmatmul.mubr.f32.gmra.mrb[0].mxu0 %v388
      %v710 = vpop.f32.mrb[0].mxu0
      %v711 = vadd.f32 0.0, %v710
      %v712 = vpop.f32.mrb[0].mxu0
      %713 = vmatprep.mubr.f32.mxu0 0.0
      %714 = vmatmul.mubr.f32.gmra.mrb[0].mxu0 %v391
      %v715 = vpop.f32.mrb[0].mxu0
      %v716 = vadd.f32 0.0, %v715
      %v717 = vpop.f32.mrb[0].mxu0
      %718 = vmatprep.mubr.f32.mxu0 0.0
      %719 = vmatmul.mubr.f32.gmra.mrb[0].mxu0 %v394
      %v720 = vpop.f32.mrb[0].mxu0
      %v721 = vadd.f32 0.0, %v720
      %v722 = vpop.f32.mrb[0].mxu0
      %723 = vmatprep.mubr.f32.mxu0 0.0
      %724 = vmatmul.mubr.f32.gmra.mrb[0].mxu0 %v619
      %v725 = vpop.f32.mrb[0].mxu0
      %v726 = vadd.f32 0.0, %v725
      %v727 = vpop.f32.mrb[0].mxu0
      %728 = vdwg.mxu0
      %v729 = vadd.f32 %v578, %v691
      %v730 = vadd.f32 %v583, %v696
      %v731 = vadd.f32 %v588, %v701
      %v732 = vadd.f32 %v593, %v706
      %v733 = vadd.f32 %v598, %v711
      %v734 = vadd.f32 %v603, %v716
      %v735 = vadd.f32 %v608, %v721
      %v736 = vadd.f32 %v613, %v726
      %s737 = scalar_lea.vmem %s1, 4
      %v738 = vld [vmem:[%s737] sm:$0xf]
      %vm747 = vcmask 1046528
      %v748 = vrot.slane %v349, 1
      %v749 = vrot.slane %v350, 1
      %v750 = vsel %vm747, %v748, %v749
      %v751 = vrot.slane %v351, 1
      %v752 = vrot.slane %v352, 1
      %v753 = vsel %vm747, %v751, %v752
      %v754 = vrot.slane %v353, 1
      %v755 = vrot.slane %v354, 1
      %v756 = vsel %vm747, %v754, %v755
      %v757 = vrot.slane %v355, 1
      %v758 = vrot.slane %v356, 1
      %v759 = vsel %vm747, %v757, %v758
      %v760 = vrot.slane %v357, 1
      %v761 = vrot.slane %v358, 1
      %v762 = vsel %vm747, %v760, %v761
      %v763 = vrot.slane %v359, 1
      %v764 = vrot.slane %v360, 1
      %v765 = vsel %vm747, %v763, %v764
      %v766 = vrot.slane %v361, 1
      %v767 = vrot.slane %v362, 1
      %v768 = vsel %vm747, %v766, %v767
      %v769 = vrot.slane %v363, 1
      %v770 = vrot.slane %v364, 1
      %v771 = vsel %vm747, %v769, %v770
      %v772 = vsel %vm225, %v750, 0
      %v774 = vsel %vm225, %v753, 0
      %v776 = vsel %vm225, %v756, 0
      %v778 = vsel %vm225, %v759, 0
      %v780 = vsel %vm225, %v762, 0
      %v782 = vsel %vm225, %v765, 0
      %v784 = vsel %vm225, %v768, 0
      %v786 = vsel %vm225, %v771, 0
      %v789 = vsel %vm396, %v738, 0
      %791 = vmatprep.subr.mxu0 0.0
      %792 = vmatpush1.msra.mxu0 %v789
      %793 = vmatprep.subr.mxu0 0.0
      %794 = vmatpush1.msra.mxu0 0.0
      %795 = vmatprep.subr.mxu0 0.0
      %796 = vmatpush1.msra.mxu0 0.0
      %797 = vmatprep.subr.mxu0 0.0
      %798 = vmatpush1.msra.mxu0 0.0
      %799 = vmatprep.subr.mxu0 0.0
      %800 = vmatpush1.msra.mxu0 0.0
      %801 = vmatprep.subr.mxu0 0.0
      %802 = vmatpush1.msra.mxu0 0.0
      %803 = vmatprep.subr.mxu0 0.0
      %804 = vmatpush1.msra.mxu0 0.0
      %805 = vmatprep.subr.mxu0 0.0
      %806 = vmatpush1.msra.mxu0 0.0
      %807 = vmatprep.subr.mxu0 0.0
      %808 = vmatpush1.msra.mxu0 0.0
      %809 = vmatprep.subr.mxu0 0.0
      %810 = vmatpush1.msra.mxu0 0.0
      %811 = vmatprep.subr.mxu0 0.0
      %812 = vmatpush1.msra.mxu0 0.0
      %813 = vmatprep.subr.mxu0 0.0
      %814 = vmatpush1.msra.mxu0 0.0
      %815 = vmatprep.subr.mxu0 0.0
      %816 = vmatpush1.msra.mxu0 0.0
      %817 = vmatprep.subr.mxu0 0.0
      %818 = vmatpush1.msra.mxu0 0.0
      %819 = vmatprep.subr.mxu0 0.0
      %820 = vmatpush1.msra.mxu0 0.0
      %821 = vmatprep.subr.mxu0 0.0
      %822 = vmatpush1.msra.mxu0 0.0
      %823 = vmatprep.subr.mxu0 0.0
      %824 = vmatpush1.msra.mxu0 0.0
      %825 = vmatprep.subr.mxu0 0.0
      %826 = vmatpush1.msra.mxu0 0.0
      %827 = vmatprep.subr.mxu0 0.0
      %828 = vmatpush1.msra.mxu0 0.0
      %829 = vmatprep.subr.mxu0 0.0
      %830 = vmatpush1.msra.mxu0 0.0
      %831 = vmatprep.subr.mxu0 0.0
      %832 = vmatpush1.msra.mxu0 0.0
      %833 = vmatprep.subr.mxu0 0.0
      %834 = vmatpush1.msra.mxu0 0.0
      %835 = vmatprep.subr.mxu0 0.0
      %836 = vmatpush1.msra.mxu0 0.0
      %837 = vmatprep.subr.mxu0 0.0
      %838 = vmatpush1.msra.mxu0 0.0
      %839 = vmatprep.subr.mxu0 0.0
      %840 = vmatpush1.msra.mxu0 0.0
      %841 = vmatprep.subr.mxu0 0.0
      %842 = vmatpush1.msra.mxu0 0.0
      %843 = vmatprep.subr.mxu0 0.0
      %844 = vmatpush1.msra.mxu0 0.0
      %845 = vmatprep.subr.mxu0 0.0
      %846 = vmatpush1.msra.mxu0 0.0
      %847 = vmatprep.subr.mxu0 0.0
      %848 = vmatpush1.msra.mxu0 0.0
      %849 = vmatprep.subr.mxu0 0.0
      %850 = vmatpush1.msra.mxu0 0.0
      %851 = vmatprep.subr.mxu0 0.0
      %852 = vmatpush1.msra.mxu0 0.0
      %853 = vmatprep.subr.mxu0 0.0
      %854 = vmatpush1.msra.mxu0 0.0
      %855 = vmatprep.mubr.f32.mxu0 0.0
      %856 = vmatmul.mubr.f32.gmra.mrb[0].mxu0 %v772
      %v857 = vpop.f32.mrb[0].mxu0
      %v858 = vadd.f32 0.0, %v857
      %v859 = vpop.f32.mrb[0].mxu0
      %860 = vmatprep.mubr.f32.mxu0 0.0
      %861 = vmatmul.mubr.f32.gmra.mrb[0].mxu0 %v774
      %v862 = vpop.f32.mrb[0].mxu0
      %v863 = vadd.f32 0.0, %v862
      %v864 = vpop.f32.mrb[0].mxu0
      %865 = vmatprep.mubr.f32.mxu0 0.0
      %866 = vmatmul.mubr.f32.gmra.mrb[0].mxu0 %v776
      %v867 = vpop.f32.mrb[0].mxu0
      %v868 = vadd.f32 0.0, %v867
      %v869 = vpop.f32.mrb[0].mxu0
      %870 = vmatprep.mubr.f32.mxu0 0.0
      %871 = vmatmul.mubr.f32.gmra.mrb[0].mxu0 %v778
      %v872 = vpop.f32.mrb[0].mxu0
      %v873 = vadd.f32 0.0, %v872
      %v874 = vpop.f32.mrb[0].mxu0
      %875 = vmatprep.mubr.f32.mxu0 0.0
      %876 = vmatmul.mubr.f32.gmra.mrb[0].mxu0 %v780
      %v877 = vpop.f32.mrb[0].mxu0
      %v878 = vadd.f32 0.0, %v877
      %v879 = vpop.f32.mrb[0].mxu0
      %880 = vmatprep.mubr.f32.mxu0 0.0
      %881 = vmatmul.mubr.f32.gmra.mrb[0].mxu0 %v782
      %v882 = vpop.f32.mrb[0].mxu0
      %v883 = vadd.f32 0.0, %v882
      %v884 = vpop.f32.mrb[0].mxu0
      %885 = vmatprep.mubr.f32.mxu0 0.0
      %886 = vmatmul.mubr.f32.gmra.mrb[0].mxu0 %v784
      %v887 = vpop.f32.mrb[0].mxu0
      %v888 = vadd.f32 0.0, %v887
      %v889 = vpop.f32.mrb[0].mxu0
      %890 = vmatprep.mubr.f32.mxu0 0.0
      %891 = vmatmul.mubr.f32.gmra.mrb[0].mxu0 %v786
      %v892 = vpop.f32.mrb[0].mxu0
      %v893 = vadd.f32 0.0, %v892
      %v894 = vpop.f32.mrb[0].mxu0
      %895 = vdwg.mxu0
      %v896 = vadd.f32 %v729, %v858
      %v897 = vadd.f32 %v730, %v863
      %v898 = vadd.f32 %v731, %v868
      %v899 = vadd.f32 %v732, %v873
      %v900 = vadd.f32 %v733, %v878
      %v901 = vadd.f32 %v734, %v883
      %v902 = vadd.f32 %v735, %v888
      %v903 = vadd.f32 %v736, %v893
      %s904 = scalar_lea.vmem %s1, 16
      %v905 = vld [vmem:[%s904] sm:$0xf]
      %v907 = vrot.slane %v365, 1
      %v908 = vrot.slane %v366, 1
      %v909 = vsel %vm747, %v907, %v908
      %v910 = vsel %vm225, %v909, 0
      %v913 = vsel %vm396, %v905, 0
      %915 = vmatprep.subr.mxu0 0.0
      %916 = vmatpush1.msra.mxu0 %v913
      %917 = vmatprep.subr.mxu0 0.0
      %918 = vmatpush1.msra.mxu0 0.0
      %919 = vmatprep.subr.mxu0 0.0
      %920 = vmatpush1.msra.mxu0 0.0
      %921 = vmatprep.subr.mxu0 0.0
      %922 = vmatpush1.msra.mxu0 0.0
      %923 = vmatprep.subr.mxu0 0.0
      %924 = vmatpush1.msra.mxu0 0.0
      %925 = vmatprep.subr.mxu0 0.0
      %926 = vmatpush1.msra.mxu0 0.0
      %927 = vmatprep.subr.mxu0 0.0
      %928 = vmatpush1.msra.mxu0 0.0
      %929 = vmatprep.subr.mxu0 0.0
      %930 = vmatpush1.msra.mxu0 0.0
      %931 = vmatprep.subr.mxu0 0.0
      %932 = vmatpush1.msra.mxu0 0.0
      %933 = vmatprep.subr.mxu0 0.0
      %934 = vmatpush1.msra.mxu0 0.0
      %935 = vmatprep.subr.mxu0 0.0
      %936 = vmatpush1.msra.mxu0 0.0
      %937 = vmatprep.subr.mxu0 0.0
      %938 = vmatpush1.msra.mxu0 0.0
      %939 = vmatprep.subr.mxu0 0.0
      %940 = vmatpush1.msra.mxu0 0.0
      %941 = vmatprep.subr.mxu0 0.0
      %942 = vmatpush1.msra.mxu0 0.0
      %943 = vmatprep.subr.mxu0 0.0
      %944 = vmatpush1.msra.mxu0 0.0
      %945 = vmatprep.subr.mxu0 0.0
      %946 = vmatpush1.msra.mxu0 0.0
      %947 = vmatprep.subr.mxu0 0.0
      %948 = vmatpush1.msra.mxu0 0.0
      %949 = vmatprep.subr.mxu0 0.0
      %950 = vmatpush1.msra.mxu0 0.0
      %951 = vmatprep.subr.mxu0 0.0
      %952 = vmatpush1.msra.mxu0 0.0
      %953 = vmatprep.subr.mxu0 0.0
      %954 = vmatpush1.msra.mxu0 0.0
      %955 = vmatprep.subr.mxu0 0.0
      %956 = vmatpush1.msra.mxu0 0.0
      %957 = vmatprep.subr.mxu0 0.0
      %958 = vmatpush1.msra.mxu0 0.0
      %959 = vmatprep.subr.mxu0 0.0
      %960 = vmatpush1.msra.mxu0 0.0
      %961 = vmatprep.subr.mxu0 0.0
      %962 = vmatpush1.msra.mxu0 0.0
      %963 = vmatprep.subr.mxu0 0.0
      %964 = vmatpush1.msra.mxu0 0.0
      %965 = vmatprep.subr.mxu0 0.0
      %966 = vmatpush1.msra.mxu0 0.0
      %967 = vmatprep.subr.mxu0 0.0
      %968 = vmatpush1.msra.mxu0 0.0
      %969 = vmatprep.subr.mxu0 0.0
      %970 = vmatpush1.msra.mxu0 0.0
      %971 = vmatprep.subr.mxu0 0.0
      %972 = vmatpush1.msra.mxu0 0.0
      %973 = vmatprep.subr.mxu0 0.0
      %974 = vmatpush1.msra.mxu0 0.0
      %975 = vmatprep.subr.mxu0 0.0
      %976 = vmatpush1.msra.mxu0 0.0
      %977 = vmatprep.subr.mxu0 0.0
      %978 = vmatpush1.msra.mxu0 0.0
      %979 = vmatprep.mubr.f32.mxu0 0.0
      %980 = vmatmul.mubr.f32.gmra.mrb[0].mxu0 %v774
      %v981 = vpop.f32.mrb[0].mxu0
      %v982 = vadd.f32 0.0, %v981
      %v983 = vpop.f32.mrb[0].mxu0
      %984 = vmatprep.mubr.f32.mxu0 0.0
      %985 = vmatmul.mubr.f32.gmra.mrb[0].mxu0 %v776
      %v986 = vpop.f32.mrb[0].mxu0
      %v987 = vadd.f32 0.0, %v986
      %v988 = vpop.f32.mrb[0].mxu0
      %989 = vmatprep.mubr.f32.mxu0 0.0
      %990 = vmatmul.mubr.f32.gmra.mrb[0].mxu0 %v778
      %v991 = vpop.f32.mrb[0].mxu0
      %v992 = vadd.f32 0.0, %v991
      %v993 = vpop.f32.mrb[0].mxu0
      %994 = vmatprep.mubr.f32.mxu0 0.0
      %995 = vmatmul.mubr.f32.gmra.mrb[0].mxu0 %v780
      %v996 = vpop.f32.mrb[0].mxu0
      %v997 = vadd.f32 0.0, %v996
      %v998 = vpop.f32.mrb[0].mxu0
      %999 = vmatprep.mubr.f32.mxu0 0.0
      %1000 = vmatmul.mubr.f32.gmra.mrb[0].mxu0 %v782
      %v1001 = vpop.f32.mrb[0].mxu0
      %v1002 = vadd.f32 0.0, %v1001
      %v1003 = vpop.f32.mrb[0].mxu0
      %1004 = vmatprep.mubr.f32.mxu0 0.0
      %1005 = vmatmul.mubr.f32.gmra.mrb[0].mxu0 %v784
      %v1006 = vpop.f32.mrb[0].mxu0
      %v1007 = vadd.f32 0.0, %v1006
      %v1008 = vpop.f32.mrb[0].mxu0
      %1009 = vmatprep.mubr.f32.mxu0 0.0
      %1010 = vmatmul.mubr.f32.gmra.mrb[0].mxu0 %v786
      %v1011 = vpop.f32.mrb[0].mxu0
      %v1012 = vadd.f32 0.0, %v1011
      %v1013 = vpop.f32.mrb[0].mxu0
      %1014 = vmatprep.mubr.f32.mxu0 0.0
      %1015 = vmatmul.mubr.f32.gmra.mrb[0].mxu0 %v910
      %v1016 = vpop.f32.mrb[0].mxu0
      %v1017 = vadd.f32 0.0, %v1016
      %v1018 = vpop.f32.mrb[0].mxu0
      %1019 = vdwg.mxu0
      %v1020 = vadd.f32 %v896, %v982
      %v1021 = vadd.f32 %v897, %v987
      %v1022 = vadd.f32 %v898, %v992
      %v1023 = vadd.f32 %v899, %v997
      %v1024 = vadd.f32 %v900, %v1002
      %v1025 = vadd.f32 %v901, %v1007
      %v1026 = vadd.f32 %v902, %v1012
      %v1027 = vadd.f32 %v903, %v1017
      %s1028 = scalar_lea.vmem %s1, 28
      %v1029 = vld [vmem:[%s1028] sm:$0xf]
      %v1031 = vrot.slane %v367, 1
      %v1032 = vrot.slane %v368, 1
      %v1033 = vsel %vm747, %v1031, %v1032
      %v1034 = vsel %vm225, %v1033, 0
      %v1037 = vsel %vm396, %v1029, 0
      %1039 = vmatprep.subr.mxu0 0.0
      %1040 = vmatpush1.msra.mxu0 %v1037
      %1041 = vmatprep.subr.mxu0 0.0
      %1042 = vmatpush1.msra.mxu0 0.0
      %1043 = vmatprep.subr.mxu0 0.0
      %1044 = vmatpush1.msra.mxu0 0.0
      %1045 = vmatprep.subr.mxu0 0.0
      %1046 = vmatpush1.msra.mxu0 0.0
      %1047 = vmatprep.subr.mxu0 0.0
      %1048 = vmatpush1.msra.mxu0 0.0
      %1049 = vmatprep.subr.mxu0 0.0
      %1050 = vmatpush1.msra.mxu0 0.0
      %1051 = vmatprep.subr.mxu0 0.0
      %1052 = vmatpush1.msra.mxu0 0.0
      %1053 = vmatprep.subr.mxu0 0.0
      %1054 = vmatpush1.msra.mxu0 0.0
      %1055 = vmatprep.subr.mxu0 0.0
      %1056 = vmatpush1.msra.mxu0 0.0
      %1057 = vmatprep.subr.mxu0 0.0
      %1058 = vmatpush1.msra.mxu0 0.0
      %1059 = vmatprep.subr.mxu0 0.0
      %1060 = vmatpush1.msra.mxu0 0.0
      %1061 = vmatprep.subr.mxu0 0.0
      %1062 = vmatpush1.msra.mxu0 0.0
      %1063 = vmatprep.subr.mxu0 0.0
      %1064 = vmatpush1.msra.mxu0 0.0
      %1065 = vmatprep.subr.mxu0 0.0
      %1066 = vmatpush1.msra.mxu0 0.0
      %1067 = vmatprep.subr.mxu0 0.0
      %1068 = vmatpush1.msra.mxu0 0.0
      %1069 = vmatprep.subr.mxu0 0.0
      %1070 = vmatpush1.msra.mxu0 0.0
      %1071 = vmatprep.subr.mxu0 0.0
      %1072 = vmatpush1.msra.mxu0 0.0
      %1073 = vmatprep.subr.mxu0 0.0
      %1074 = vmatpush1.msra.mxu0 0.0
      %1075 = vmatprep.subr.mxu0 0.0
      %1076 = vmatpush1.msra.mxu0 0.0
      %1077 = vmatprep.subr.mxu0 0.0
      %1078 = vmatpush1.msra.mxu0 0.0
      %1079 = vmatprep.subr.mxu0 0.0
      %1080 = vmatpush1.msra.mxu0 0.0
      %1081 = vmatprep.subr.mxu0 0.0
      %1082 = vmatpush1.msra.mxu0 0.0
      %1083 = vmatprep.subr.mxu0 0.0
      %1084 = vmatpush1.msra.mxu0 0.0
      %1085 = vmatprep.subr.mxu0 0.0
      %1086 = vmatpush1.msra.mxu0 0.0
      %1087 = vmatprep.subr.mxu0 0.0
      %1088 = vmatpush1.msra.mxu0 0.0
      %1089 = vmatprep.subr.mxu0 0.0
      %1090 = vmatpush1.msra.mxu0 0.0
      %1091 = vmatprep.subr.mxu0 0.0
      %1092 = vmatpush1.msra.mxu0 0.0
      %1093 = vmatprep.subr.mxu0 0.0
      %1094 = vmatpush1.msra.mxu0 0.0
      %1095 = vmatprep.subr.mxu0 0.0
      %1096 = vmatpush1.msra.mxu0 0.0
      %1097 = vmatprep.subr.mxu0 0.0
      %1098 = vmatpush1.msra.mxu0 0.0
      %1099 = vmatprep.subr.mxu0 0.0
      %1100 = vmatpush1.msra.mxu0 0.0
      %1101 = vmatprep.subr.mxu0 0.0
      %1102 = vmatpush1.msra.mxu0 0.0
      %1103 = vmatprep.mubr.f32.mxu0 0.0
      %1104 = vmatmul.mubr.f32.gmra.mrb[0].mxu0 %v776
      %v1105 = vpop.f32.mrb[0].mxu0
      %v1106 = vadd.f32 0.0, %v1105
      %v1107 = vpop.f32.mrb[0].mxu0
      %1108 = vmatprep.mubr.f32.mxu0 0.0
      %1109 = vmatmul.mubr.f32.gmra.mrb[0].mxu0 %v778
      %v1110 = vpop.f32.mrb[0].mxu0
      %v1111 = vadd.f32 0.0, %v1110
      %v1112 = vpop.f32.mrb[0].mxu0
      %1113 = vmatprep.mubr.f32.mxu0 0.0
      %1114 = vmatmul.mubr.f32.gmra.mrb[0].mxu0 %v780
      %v1115 = vpop.f32.mrb[0].mxu0
      %v1116 = vadd.f32 0.0, %v1115
      %v1117 = vpop.f32.mrb[0].mxu0
      %1118 = vmatprep.mubr.f32.mxu0 0.0
      %1119 = vmatmul.mubr.f32.gmra.mrb[0].mxu0 %v782
      %v1120 = vpop.f32.mrb[0].mxu0
      %v1121 = vadd.f32 0.0, %v1120
      %v1122 = vpop.f32.mrb[0].mxu0
      %1123 = vmatprep.mubr.f32.mxu0 0.0
      %1124 = vmatmul.mubr.f32.gmra.mrb[0].mxu0 %v784
      %v1125 = vpop.f32.mrb[0].mxu0
      %v1126 = vadd.f32 0.0, %v1125
      %v1127 = vpop.f32.mrb[0].mxu0
      %1128 = vmatprep.mubr.f32.mxu0 0.0
      %1129 = vmatmul.mubr.f32.gmra.mrb[0].mxu0 %v786
      %v1130 = vpop.f32.mrb[0].mxu0
      %v1131 = vadd.f32 0.0, %v1130
      %v1132 = vpop.f32.mrb[0].mxu0
      %1133 = vmatprep.mubr.f32.mxu0 0.0
      %1134 = vmatmul.mubr.f32.gmra.mrb[0].mxu0 %v910
      %v1135 = vpop.f32.mrb[0].mxu0
      %v1136 = vadd.f32 0.0, %v1135
      %v1137 = vpop.f32.mrb[0].mxu0
      %1138 = vmatprep.mubr.f32.mxu0 0.0
      %1139 = vmatmul.mubr.f32.gmra.mrb[0].mxu0 %v1034
      %v1140 = vpop.f32.mrb[0].mxu0
      %v1141 = vadd.f32 0.0, %v1140
      %v1142 = vpop.f32.mrb[0].mxu0
      %1143 = vdwg.mxu0
      %v1144 = vadd.f32 %v1020, %v1106
      %v1145 = vadd.f32 %v1021, %v1111
      %v1146 = vadd.f32 %v1022, %v1116
      %v1147 = vadd.f32 %v1023, %v1121
      %v1148 = vadd.f32 %v1024, %v1126
      %v1149 = vadd.f32 %v1025, %v1131
      %v1150 = vadd.f32 %v1026, %v1136
      %v1151 = vadd.f32 %v1027, %v1141
      %s1152 = scalar_lea.vmem %s1, 8
      %v1153 = vld [vmem:[%s1152] sm:$0xf]
      %vm1154 = vcmask 1045504
      %v1155 = vrot.slane %v349, 2
      %v1156 = vrot.slane %v350, 2
      %v1157 = vsel %vm1154, %v1155, %v1156
      %v1158 = vrot.slane %v351, 2
      %v1159 = vrot.slane %v352, 2
      %v1160 = vsel %vm1154, %v1158, %v1159
      %v1161 = vrot.slane %v353, 2
      %v1162 = vrot.slane %v354, 2
      %v1163 = vsel %vm1154, %v1161, %v1162
      %v1164 = vrot.slane %v355, 2
      %v1165 = vrot.slane %v356, 2
      %v1166 = vsel %vm1154, %v1164, %v1165
      %v1167 = vrot.slane %v357, 2
      %v1168 = vrot.slane %v358, 2
      %v1169 = vsel %vm1154, %v1167, %v1168
      %v1170 = vrot.slane %v359, 2
      %v1171 = vrot.slane %v360, 2
      %v1172 = vsel %vm1154, %v1170, %v1171
      %v1173 = vrot.slane %v361, 2
      %v1174 = vrot.slane %v362, 2
      %v1175 = vsel %vm1154, %v1173, %v1174
      %v1176 = vrot.slane %v363, 2
      %v1177 = vrot.slane %v364, 2
      %v1178 = vsel %vm1154, %v1176, %v1177
      %v1179 = vsel %vm225, %v1157, 0
      %v1181 = vsel %vm225, %v1160, 0
      %v1183 = vsel %vm225, %v1163, 0
      %v1185 = vsel %vm225, %v1166, 0
      %v1187 = vsel %vm225, %v1169, 0
      %v1189 = vsel %vm225, %v1172, 0
      %v1191 = vsel %vm225, %v1175, 0
      %v1193 = vsel %vm225, %v1178, 0
      %v1196 = vsel %vm396, %v1153, 0
      %1198 = vmatprep.subr.mxu0 0.0
      %1199 = vmatpush1.msra.mxu0 %v1196
      %1200 = vmatprep.subr.mxu0 0.0
      %1201 = vmatpush1.msra.mxu0 0.0
      %1202 = vmatprep.subr.mxu0 0.0
      %1203 = vmatpush1.msra.mxu0 0.0
      %1204 = vmatprep.subr.mxu0 0.0
      %1205 = vmatpush1.msra.mxu0 0.0
      %1206 = vmatprep.subr.mxu0 0.0
      %1207 = vmatpush1.msra.mxu0 0.0
      %1208 = vmatprep.subr.mxu0 0.0
      %1209 = vmatpush1.msra.mxu0 0.0
      %1210 = vmatprep.subr.mxu0 0.0
      %1211 = vmatpush1.msra.mxu0 0.0
      %1212 = vmatprep.subr.mxu0 0.0
      %1213 = vmatpush1.msra.mxu0 0.0
      %1214 = vmatprep.subr.mxu0 0.0
      %1215 = vmatpush1.msra.mxu0 0.0
      %1216 = vmatprep.subr.mxu0 0.0
      %1217 = vmatpush1.msra.mxu0 0.0
      %1218 = vmatprep.subr.mxu0 0.0
      %1219 = vmatpush1.msra.mxu0 0.0
      %1220 = vmatprep.subr.mxu0 0.0
      %1221 = vmatpush1.msra.mxu0 0.0
      %1222 = vmatprep.subr.mxu0 0.0
      %1223 = vmatpush1.msra.mxu0 0.0
      %1224 = vmatprep.subr.mxu0 0.0
      %1225 = vmatpush1.msra.mxu0 0.0
      %1226 = vmatprep.subr.mxu0 0.0
      %1227 = vmatpush1.msra.mxu0 0.0
      %1228 = vmatprep.subr.mxu0 0.0
      %1229 = vmatpush1.msra.mxu0 0.0
      %1230 = vmatprep.subr.mxu0 0.0
      %1231 = vmatpush1.msra.mxu0 0.0
      %1232 = vmatprep.subr.mxu0 0.0
      %1233 = vmatpush1.msra.mxu0 0.0
      %1234 = vmatprep.subr.mxu0 0.0
      %1235 = vmatpush1.msra.mxu0 0.0
      %1236 = vmatprep.subr.mxu0 0.0
      %1237 = vmatpush1.msra.mxu0 0.0
      %1238 = vmatprep.subr.mxu0 0.0
      %1239 = vmatpush1.msra.mxu0 0.0
      %1240 = vmatprep.subr.mxu0 0.0
      %1241 = vmatpush1.msra.mxu0 0.0
      %1242 = vmatprep.subr.mxu0 0.0
      %1243 = vmatpush1.msra.mxu0 0.0
      %1244 = vmatprep.subr.mxu0 0.0
      %1245 = vmatpush1.msra.mxu0 0.0
      %1246 = vmatprep.subr.mxu0 0.0
      %1247 = vmatpush1.msra.mxu0 0.0
      %1248 = vmatprep.subr.mxu0 0.0
      %1249 = vmatpush1.msra.mxu0 0.0
      %1250 = vmatprep.subr.mxu0 0.0
      %1251 = vmatpush1.msra.mxu0 0.0
      %1252 = vmatprep.subr.mxu0 0.0
      %1253 = vmatpush1.msra.mxu0 0.0
      %1254 = vmatprep.subr.mxu0 0.0
      %1255 = vmatpush1.msra.mxu0 0.0
      %1256 = vmatprep.subr.mxu0 0.0
      %1257 = vmatpush1.msra.mxu0 0.0
      %1258 = vmatprep.subr.mxu0 0.0
      %1259 = vmatpush1.msra.mxu0 0.0
      %1260 = vmatprep.subr.mxu0 0.0
      %1261 = vmatpush1.msra.mxu0 0.0
      %1262 = vmatprep.mubr.f32.mxu0 0.0
      %1263 = vmatmul.mubr.f32.gmra.mrb[0].mxu0 %v1179
      %v1264 = vpop.f32.mrb[0].mxu0
      %v1265 = vadd.f32 0.0, %v1264
      %v1266 = vpop.f32.mrb[0].mxu0
      %1267 = vmatprep.mubr.f32.mxu0 0.0
      %1268 = vmatmul.mubr.f32.gmra.mrb[0].mxu0 %v1181
      %v1269 = vpop.f32.mrb[0].mxu0
      %v1270 = vadd.f32 0.0, %v1269
      %v1271 = vpop.f32.mrb[0].mxu0
      %1272 = vmatprep.mubr.f32.mxu0 0.0
      %1273 = vmatmul.mubr.f32.gmra.mrb[0].mxu0 %v1183
      %v1274 = vpop.f32.mrb[0].mxu0
      %v1275 = vadd.f32 0.0, %v1274
      %v1276 = vpop.f32.mrb[0].mxu0
      %1277 = vmatprep.mubr.f32.mxu0 0.0
      %1278 = vmatmul.mubr.f32.gmra.mrb[0].mxu0 %v1185
      %v1279 = vpop.f32.mrb[0].mxu0
      %v1280 = vadd.f32 0.0, %v1279
      %v1281 = vpop.f32.mrb[0].mxu0
      %1282 = vmatprep.mubr.f32.mxu0 0.0
      %1283 = vmatmul.mubr.f32.gmra.mrb[0].mxu0 %v1187
      %v1284 = vpop.f32.mrb[0].mxu0
      %v1285 = vadd.f32 0.0, %v1284
      %v1286 = vpop.f32.mrb[0].mxu0
      %1287 = vmatprep.mubr.f32.mxu0 0.0
      %1288 = vmatmul.mubr.f32.gmra.mrb[0].mxu0 %v1189
      %v1289 = vpop.f32.mrb[0].mxu0
      %v1290 = vadd.f32 0.0, %v1289
      %v1291 = vpop.f32.mrb[0].mxu0
      %1292 = vmatprep.mubr.f32.mxu0 0.0
      %1293 = vmatmul.mubr.f32.gmra.mrb[0].mxu0 %v1191
      %v1294 = vpop.f32.mrb[0].mxu0
      %v1295 = vadd.f32 0.0, %v1294
      %v1296 = vpop.f32.mrb[0].mxu0
      %1297 = vmatprep.mubr.f32.mxu0 0.0
      %1298 = vmatmul.mubr.f32.gmra.mrb[0].mxu0 %v1193
      %v1299 = vpop.f32.mrb[0].mxu0
      %v1300 = vadd.f32 0.0, %v1299
      %v1301 = vpop.f32.mrb[0].mxu0
      %1302 = vdwg.mxu0
      %v1303 = vadd.f32 %v1144, %v1265
      %v1304 = vadd.f32 %v1145, %v1270
      %v1305 = vadd.f32 %v1146, %v1275
      %v1306 = vadd.f32 %v1147, %v1280
      %v1307 = vadd.f32 %v1148, %v1285
      %v1308 = vadd.f32 %v1149, %v1290
      %v1309 = vadd.f32 %v1150, %v1295
      %v1310 = vadd.f32 %v1151, %v1300
      %s1311 = scalar_lea.vmem %s1, 20
      %v1312 = vld [vmem:[%s1311] sm:$0xf]
      %v1313 = vrot.slane %v365, 2
      %v1314 = vrot.slane %v366, 2
      %v1315 = vsel %vm1154, %v1313, %v1314
      %v1316 = vsel %vm225, %v1315, 0
      %v1319 = vsel %vm396, %v1312, 0
      %1321 = vmatprep.subr.mxu0 0.0
      %1322 = vmatpush1.msra.mxu0 %v1319
      %1323 = vmatprep.subr.mxu0 0.0
      %1324 = vmatpush1.msra.mxu0 0.0
      %1325 = vmatprep.subr.mxu0 0.0
      %1326 = vmatpush1.msra.mxu0 0.0
      %1327 = vmatprep.subr.mxu0 0.0
      %1328 = vmatpush1.msra.mxu0 0.0
      %1329 = vmatprep.subr.mxu0 0.0
      %1330 = vmatpush1.msra.mxu0 0.0
      %1331 = vmatprep.subr.mxu0 0.0
      %1332 = vmatpush1.msra.mxu0 0.0
      %1333 = vmatprep.subr.mxu0 0.0
      %1334 = vmatpush1.msra.mxu0 0.0
      %1335 = vmatprep.subr.mxu0 0.0
      %1336 = vmatpush1.msra.mxu0 0.0
      %1337 = vmatprep.subr.mxu0 0.0
      %1338 = vmatpush1.msra.mxu0 0.0
      %1339 = vmatprep.subr.mxu0 0.0
      %1340 = vmatpush1.msra.mxu0 0.0
      %1341 = vmatprep.subr.mxu0 0.0
      %1342 = vmatpush1.msra.mxu0 0.0
      %1343 = vmatprep.subr.mxu0 0.0
      %1344 = vmatpush1.msra.mxu0 0.0
      %1345 = vmatprep.subr.mxu0 0.0
      %1346 = vmatpush1.msra.mxu0 0.0
      %1347 = vmatprep.subr.mxu0 0.0
      %1348 = vmatpush1.msra.mxu0 0.0
      %1349 = vmatprep.subr.mxu0 0.0
      %1350 = vmatpush1.msra.mxu0 0.0
      %1351 = vmatprep.subr.mxu0 0.0
      %1352 = vmatpush1.msra.mxu0 0.0
      %1353 = vmatprep.subr.mxu0 0.0
      %1354 = vmatpush1.msra.mxu0 0.0
      %1355 = vmatprep.subr.mxu0 0.0
      %1356 = vmatpush1.msra.mxu0 0.0
      %1357 = vmatprep.subr.mxu0 0.0
      %1358 = vmatpush1.msra.mxu0 0.0
      %1359 = vmatprep.subr.mxu0 0.0
      %1360 = vmatpush1.msra.mxu0 0.0
      %1361 = vmatprep.subr.mxu0 0.0
      %1362 = vmatpush1.msra.mxu0 0.0
      %1363 = vmatprep.subr.mxu0 0.0
      %1364 = vmatpush1.msra.mxu0 0.0
      %1365 = vmatprep.subr.mxu0 0.0
      %1366 = vmatpush1.msra.mxu0 0.0
      %1367 = vmatprep.subr.mxu0 0.0
      %1368 = vmatpush1.msra.mxu0 0.0
      %1369 = vmatprep.subr.mxu0 0.0
      %1370 = vmatpush1.msra.mxu0 0.0
      %1371 = vmatprep.subr.mxu0 0.0
      %1372 = vmatpush1.msra.mxu0 0.0
      %1373 = vmatprep.subr.mxu0 0.0
      %1374 = vmatpush1.msra.mxu0 0.0
      %1375 = vmatprep.subr.mxu0 0.0
      %1376 = vmatpush1.msra.mxu0 0.0
      %1377 = vmatprep.subr.mxu0 0.0
      %1378 = vmatpush1.msra.mxu0 0.0
      %1379 = vmatprep.subr.mxu0 0.0
      %1380 = vmatpush1.msra.mxu0 0.0
      %1381 = vmatprep.subr.mxu0 0.0
      %1382 = vmatpush1.msra.mxu0 0.0
      %1383 = vmatprep.subr.mxu0 0.0
      %1384 = vmatpush1.msra.mxu0 0.0
      %1385 = vmatprep.mubr.f32.mxu0 0.0
      %1386 = vmatmul.mubr.f32.gmra.mrb[0].mxu0 %v1181
      %v1387 = vpop.f32.mrb[0].mxu0
      %v1388 = vadd.f32 0.0, %v1387
      %v1389 = vpop.f32.mrb[0].mxu0
      %1390 = vmatprep.mubr.f32.mxu0 0.0
      %1391 = vmatmul.mubr.f32.gmra.mrb[0].mxu0 %v1183
      %v1392 = vpop.f32.mrb[0].mxu0
      %v1393 = vadd.f32 0.0, %v1392
      %v1394 = vpop.f32.mrb[0].mxu0
      %1395 = vmatprep.mubr.f32.mxu0 0.0
      %1396 = vmatmul.mubr.f32.gmra.mrb[0].mxu0 %v1185
      %v1397 = vpop.f32.mrb[0].mxu0
      %v1398 = vadd.f32 0.0, %v1397
      %v1399 = vpop.f32.mrb[0].mxu0
      %1400 = vmatprep.mubr.f32.mxu0 0.0
      %1401 = vmatmul.mubr.f32.gmra.mrb[0].mxu0 %v1187
      %v1402 = vpop.f32.mrb[0].mxu0
      %v1403 = vadd.f32 0.0, %v1402
      %v1404 = vpop.f32.mrb[0].mxu0
      %1405 = vmatprep.mubr.f32.mxu0 0.0
      %1406 = vmatmul.mubr.f32.gmra.mrb[0].mxu0 %v1189
      %v1407 = vpop.f32.mrb[0].mxu0
      %v1408 = vadd.f32 0.0, %v1407
      %v1409 = vpop.f32.mrb[0].mxu0
      %1410 = vmatprep.mubr.f32.mxu0 0.0
      %1411 = vmatmul.mubr.f32.gmra.mrb[0].mxu0 %v1191
      %v1412 = vpop.f32.mrb[0].mxu0
      %v1413 = vadd.f32 0.0, %v1412
      %v1414 = vpop.f32.mrb[0].mxu0
      %1415 = vmatprep.mubr.f32.mxu0 0.0
      %1416 = vmatmul.mubr.f32.gmra.mrb[0].mxu0 %v1193
      %v1417 = vpop.f32.mrb[0].mxu0
      %v1418 = vadd.f32 0.0, %v1417
      %v1419 = vpop.f32.mrb[0].mxu0
      %1420 = vmatprep.mubr.f32.mxu0 0.0
      %1421 = vmatmul.mubr.f32.gmra.mrb[0].mxu0 %v1316
      %v1422 = vpop.f32.mrb[0].mxu0
      %v1423 = vadd.f32 0.0, %v1422
      %v1424 = vpop.f32.mrb[0].mxu0
      %1425 = vdwg.mxu0
      %v1426 = vadd.f32 %v1303, %v1388
      %v1427 = vadd.f32 %v1304, %v1393
      %v1428 = vadd.f32 %v1305, %v1398
      %v1429 = vadd.f32 %v1306, %v1403
      %v1430 = vadd.f32 %v1307, %v1408
      %v1431 = vadd.f32 %v1308, %v1413
      %v1432 = vadd.f32 %v1309, %v1418
      %v1433 = vadd.f32 %v1310, %v1423
      %s1434 = scalar_lea.vmem %s1, 32
      %v1435 = vld [vmem:[%s1434] sm:$0xf]
      %v1436 = vrot.slane %v367, 2
      %v1437 = vrot.slane %v368, 2
      %v1438 = vsel %vm1154, %v1436, %v1437
      %v1439 = vsel %vm225, %v1438, 0
      %v1442 = vsel %vm396, %v1435, 0
      %1444 = vmatprep.subr.mxu0 0.0
      %1445 = vmatpush1.msra.mxu0 %v1442
      %1446 = vmatprep.subr.mxu0 0.0
      %1447 = vmatpush1.msra.mxu0 0.0
      %1448 = vmatprep.subr.mxu0 0.0
      %1449 = vmatpush1.msra.mxu0 0.0
      %1450 = vmatprep.subr.mxu0 0.0
      %1451 = vmatpush1.msra.mxu0 0.0
      %1452 = vmatprep.subr.mxu0 0.0
      %1453 = vmatpush1.msra.mxu0 0.0
      %1454 = vmatprep.subr.mxu0 0.0
      %1455 = vmatpush1.msra.mxu0 0.0
      %1456 = vmatprep.subr.mxu0 0.0
      %1457 = vmatpush1.msra.mxu0 0.0
      %1458 = vmatprep.subr.mxu0 0.0
      %1459 = vmatpush1.msra.mxu0 0.0
      %1460 = vmatprep.subr.mxu0 0.0
      %1461 = vmatpush1.msra.mxu0 0.0
      %1462 = vmatprep.subr.mxu0 0.0
      %1463 = vmatpush1.msra.mxu0 0.0
      %1464 = vmatprep.subr.mxu0 0.0
      %1465 = vmatpush1.msra.mxu0 0.0
      %1466 = vmatprep.subr.mxu0 0.0
      %1467 = vmatpush1.msra.mxu0 0.0
      %1468 = vmatprep.subr.mxu0 0.0
      %1469 = vmatpush1.msra.mxu0 0.0
      %1470 = vmatprep.subr.mxu0 0.0
      %1471 = vmatpush1.msra.mxu0 0.0
      %1472 = vmatprep.subr.mxu0 0.0
      %1473 = vmatpush1.msra.mxu0 0.0
      %1474 = vmatprep.subr.mxu0 0.0
      %1475 = vmatpush1.msra.mxu0 0.0
      %1476 = vmatprep.subr.mxu0 0.0
      %1477 = vmatpush1.msra.mxu0 0.0
      %1478 = vmatprep.subr.mxu0 0.0
      %1479 = vmatpush1.msra.mxu0 0.0
      %1480 = vmatprep.subr.mxu0 0.0
      %1481 = vmatpush1.msra.mxu0 0.0
      %1482 = vmatprep.subr.mxu0 0.0
      %1483 = vmatpush1.msra.mxu0 0.0
      %1484 = vmatprep.subr.mxu0 0.0
      %1485 = vmatpush1.msra.mxu0 0.0
      %1486 = vmatprep.subr.mxu0 0.0
      %1487 = vmatpush1.msra.mxu0 0.0
      %1488 = vmatprep.subr.mxu0 0.0
      %1489 = vmatpush1.msra.mxu0 0.0
      %1490 = vmatprep.subr.mxu0 0.0
      %1491 = vmatpush1.msra.mxu0 0.0
      %1492 = vmatprep.subr.mxu0 0.0
      %1493 = vmatpush1.msra.mxu0 0.0
      %1494 = vmatprep.subr.mxu0 0.0
      %1495 = vmatpush1.msra.mxu0 0.0
      %1496 = vmatprep.subr.mxu0 0.0
      %1497 = vmatpush1.msra.mxu0 0.0
      %1498 = vmatprep.subr.mxu0 0.0
      %1499 = vmatpush1.msra.mxu0 0.0
      %1500 = vmatprep.subr.mxu0 0.0
      %1501 = vmatpush1.msra.mxu0 0.0
      %1502 = vmatprep.subr.mxu0 0.0
      %1503 = vmatpush1.msra.mxu0 0.0
      %1504 = vmatprep.subr.mxu0 0.0
      %1505 = vmatpush1.msra.mxu0 0.0
      %1506 = vmatprep.subr.mxu0 0.0
      %1507 = vmatpush1.msra.mxu0 0.0
      %1508 = vmatprep.mubr.f32.mxu0 0.0
      %1509 = vmatmul.mubr.f32.gmra.mrb[0].mxu0 %v1183
      %v1510 = vpop.f32.mrb[0].mxu0
      %v1511 = vadd.f32 0.0, %v1510
      %v1512 = vpop.f32.mrb[0].mxu0
      %1513 = vmatprep.mubr.f32.mxu0 0.0
      %1514 = vmatmul.mubr.f32.gmra.mrb[0].mxu0 %v1185
      %v1515 = vpop.f32.mrb[0].mxu0
      %v1516 = vadd.f32 0.0, %v1515
      %v1517 = vpop.f32.mrb[0].mxu0
      %1518 = vmatprep.mubr.f32.mxu0 0.0
      %1519 = vmatmul.mubr.f32.gmra.mrb[0].mxu0 %v1187
      %v1520 = vpop.f32.mrb[0].mxu0
      %v1521 = vadd.f32 0.0, %v1520
      %v1522 = vpop.f32.mrb[0].mxu0
      %1523 = vmatprep.mubr.f32.mxu0 0.0
      %1524 = vmatmul.mubr.f32.gmra.mrb[0].mxu0 %v1189
      %v1525 = vpop.f32.mrb[0].mxu0
      %v1526 = vadd.f32 0.0, %v1525
      %v1527 = vpop.f32.mrb[0].mxu0
      %1528 = vmatprep.mubr.f32.mxu0 0.0
      %1529 = vmatmul.mubr.f32.gmra.mrb[0].mxu0 %v1191
      %v1530 = vpop.f32.mrb[0].mxu0
      %v1531 = vadd.f32 0.0, %v1530
      %v1532 = vpop.f32.mrb[0].mxu0
      %1533 = vmatprep.mubr.f32.mxu0 0.0
      %1534 = vmatmul.mubr.f32.gmra.mrb[0].mxu0 %v1193
      %v1535 = vpop.f32.mrb[0].mxu0
      %v1536 = vadd.f32 0.0, %v1535
      %v1537 = vpop.f32.mrb[0].mxu0
      %1538 = vmatprep.mubr.f32.mxu0 0.0
      %1539 = vmatmul.mubr.f32.gmra.mrb[0].mxu0 %v1316
      %v1540 = vpop.f32.mrb[0].mxu0
      %v1541 = vadd.f32 0.0, %v1540
      %v1542 = vpop.f32.mrb[0].mxu0
      %1543 = vmatprep.mubr.f32.mxu0 0.0
      %1544 = vmatmul.mubr.f32.gmra.mrb[0].mxu0 %v1439
      %v1545 = vpop.f32.mrb[0].mxu0
      %v1546 = vadd.f32 0.0, %v1545
      %v1547 = vpop.f32.mrb[0].mxu0
      %1548 = vdwg.mxu0
      %v1549 = vadd.f32 %v1426, %v1511
      %v1550 = vadd.f32 %v1427, %v1516
      %v1551 = vadd.f32 %v1428, %v1521
      %v1552 = vadd.f32 %v1429, %v1526
      %v1553 = vadd.f32 %v1430, %v1531
      %v1554 = vadd.f32 %v1431, %v1536
      %v1555 = vadd.f32 %v1432, %v1541
      %v1556 = vadd.f32 %v1433, %v1546
      %v1557 = vld [vmem:[%s2] sm:$0x1]
      %v1559 = vlaneseq
      %v1560 = vshrl.u32 %v1559, 7
      %v1561 = vsub.s32 0, %v1560
      %v1562 = vrot.slane %v1557, %v1561
      %v1564 = vadd.f32 %v1549, %v1562
      %v1565 = vadd.f32 %v1550, %v1562
      %v1566 = vadd.f32 %v1551, %v1562
      %v1567 = vadd.f32 %v1552, %v1562
      %v1568 = vadd.f32 %v1553, %v1562
      %v1569 = vadd.f32 %v1554, %v1562
      %v1570 = vadd.f32 %v1555, %v1562
      %v1571 = vadd.f32 %v1556, %v1562
      %v1572 = vmax.f32 %v1564, 0.0
      %v1573 = vmax.f32 %v1565, 0.0
      %v1574 = vmax.f32 %v1566, 0.0
      %v1575 = vmax.f32 %v1567, 0.0
      %v1576 = vmax.f32 %v1568, 0.0
      %v1577 = vmax.f32 %v1569, 0.0
      %v1578 = vmax.f32 %v1570, 0.0
      %v1579 = vmax.f32 %v1571, 0.0
      %s1580 = scalar_lea.vmem [#allocation3], 16
      %1581 = vst.msk [vmem:[%s1580 + $0x1] sm:$0xff] %vm253, %v1572
      %1582 = vst.msk [vmem:[%s1580 + $0x11] sm:$0xff] %vm253, %v1573
      %1583 = vst.msk [vmem:[%s1580 + $0x21] sm:$0xff] %vm253, %v1574
      %1584 = vst.msk [vmem:[%s1580 + $0x31] sm:$0xff] %vm253, %v1575
      %1585 = vst.msk [vmem:[%s1580 + $0x41] sm:$0xff] %vm253, %v1576
      %1586 = vst.msk [vmem:[%s1580 + $0x51] sm:$0xff] %vm253, %v1577
      %1587 = vst.msk [vmem:[%s1580 + $0x61] sm:$0xff] %vm253, %v1578
      %1588 = vst.msk [vmem:[%s1580 + $0x71] sm:$0xff] %vm253, %v1579
      %v1589 = vld [vmem:[#allocation3] sm:$0xff]
      %v1590 = vld [vmem:[#allocation3 + $0x8] sm:$0x3]
      %v1591 = vld [vmem:[#allocation3 + $0x10] sm:$0xff]
      %v1592 = vld [vmem:[#allocation3 + $0x18] sm:$0x3]
      %v1593 = vld [vmem:[#allocation3 + $0x20] sm:$0xff]
      %v1594 = vld [vmem:[#allocation3 + $0x28] sm:$0x3]
      %v1595 = vld [vmem:[#allocation3 + $0x30] sm:$0xff]
      %v1596 = vld [vmem:[#allocation3 + $0x38] sm:$0x3]
      %v1597 = vld [vmem:[#allocation3 + $0x40] sm:$0xff]
      %v1598 = vld [vmem:[#allocation3 + $0x48] sm:$0x3]
      %v1599 = vld [vmem:[#allocation3 + $0x50] sm:$0xff]
      %v1600 = vld [vmem:[#allocation3 + $0x58] sm:$0x3]
      %v1601 = vld [vmem:[#allocation3 + $0x60] sm:$0xff]
      %v1602 = vld [vmem:[#allocation3 + $0x68] sm:$0x3]
      %v1603 = vld [vmem:[#allocation3 + $0x70] sm:$0xff]
      %v1604 = vld [vmem:[#allocation3 + $0x78] sm:$0x3]
      %v1605 = vld [vmem:[#allocation3 + $0x80] sm:$0xff]
      %v1606 = vld [vmem:[#allocation3 + $0x88] sm:$0x3]
      %v1607 = vld [vmem:[#allocation3 + $0x90] sm:$0xff]
      %v1608 = vld [vmem:[#allocation3 + $0x98] sm:$0x3]
      %v1609 = vld [vmem:[%s3] sm:$0xff]
      %s1610 = scalar_lea.vmem %s3, 24
      %v1611 = vld [vmem:[%s1610] sm:$0xff]
      %v1613 = vsel %vm253, %v1591, 0
      %v1616 = vsel %vm253, %v1593, 0
      %v1619 = vsel %vm253, %v1595, 0
      %v1622 = vsel %vm253, %v1597, 0
      %v1625 = vsel %vm253, %v1599, 0
      %v1628 = vsel %vm253, %v1601, 0
      %v1631 = vsel %vm253, %v1603, 0
      %v1634 = vsel %vm253, %v1605, 0
      %1636 = vmatprep.subr.mxu0 0.0
      %1637 = vmatpush1.msra.mxu0 %v1611
      %1638 = vmatprep.subr.mxu0 0.0
      %1639 = vmatpush1.msra.mxu0 0.0
      %1640 = vmatprep.subr.mxu0 0.0
      %1641 = vmatpush1.msra.mxu0 0.0
      %1642 = vmatprep.subr.mxu0 0.0
      %1643 = vmatpush1.msra.mxu0 0.0
      %1644 = vmatprep.subr.mxu0 0.0
      %1645 = vmatpush1.msra.mxu0 0.0
      %1646 = vmatprep.subr.mxu0 0.0
      %1647 = vmatpush1.msra.mxu0 0.0
      %1648 = vmatprep.subr.mxu0 0.0
      %1649 = vmatpush1.msra.mxu0 0.0
      %1650 = vmatprep.subr.mxu0 0.0
      %1651 = vmatpush1.msra.mxu0 0.0
      %1652 = vmatprep.subr.mxu0 0.0
      %1653 = vmatpush1.msra.mxu0 0.0
      %1654 = vmatprep.subr.mxu0 0.0
      %1655 = vmatpush1.msra.mxu0 0.0
      %1656 = vmatprep.subr.mxu0 0.0
      %1657 = vmatpush1.msra.mxu0 0.0
      %1658 = vmatprep.subr.mxu0 0.0
      %1659 = vmatpush1.msra.mxu0 0.0
      %1660 = vmatprep.subr.mxu0 0.0
      %1661 = vmatpush1.msra.mxu0 0.0
      %1662 = vmatprep.subr.mxu0 0.0
      %1663 = vmatpush1.msra.mxu0 0.0
      %1664 = vmatprep.subr.mxu0 0.0
      %1665 = vmatpush1.msra.mxu0 0.0
      %1666 = vmatprep.subr.mxu0 0.0
      %1667 = vmatpush1.msra.mxu0 0.0
      %1668 = vmatprep.subr.mxu0 0.0
      %1669 = vmatpush1.msra.mxu0 0.0
      %1670 = vmatprep.subr.mxu0 0.0
      %1671 = vmatpush1.msra.mxu0 0.0
      %1672 = vmatprep.subr.mxu0 0.0
      %1673 = vmatpush1.msra.mxu0 0.0
      %1674 = vmatprep.subr.mxu0 0.0
      %1675 = vmatpush1.msra.mxu0 0.0
      %1676 = vmatprep.subr.mxu0 0.0
      %1677 = vmatpush1.msra.mxu0 0.0
      %1678 = vmatprep.subr.mxu0 0.0
      %1679 = vmatpush1.msra.mxu0 0.0
      %1680 = vmatprep.subr.mxu0 0.0
      %1681 = vmatpush1.msra.mxu0 0.0
      %1682 = vmatprep.subr.mxu0 0.0
      %1683 = vmatpush1.msra.mxu0 0.0
      %1684 = vmatprep.subr.mxu0 0.0
      %1685 = vmatpush1.msra.mxu0 0.0
      %1686 = vmatprep.subr.mxu0 0.0
      %1687 = vmatpush1.msra.mxu0 0.0
      %1688 = vmatprep.subr.mxu0 0.0
      %1689 = vmatpush1.msra.mxu0 0.0
      %1690 = vmatprep.subr.mxu0 0.0
      %1691 = vmatpush1.msra.mxu0 0.0
      %1692 = vmatprep.subr.mxu0 0.0
      %1693 = vmatpush1.msra.mxu0 0.0
      %1694 = vmatprep.subr.mxu0 0.0
      %1695 = vmatpush1.msra.mxu0 0.0
      %1696 = vmatprep.subr.mxu0 0.0
      %1697 = vmatpush1.msra.mxu0 0.0
      %1698 = vmatprep.subr.mxu0 0.0
      %1699 = vmatpush1.msra.mxu0 0.0
      %1700 = vmatprep.mubr.f32.mxu0 0.0
      %1701 = vmatmul.mubr.f32.gmra.mrb[0].mxu0 %v1613
      %v1702 = vpop.f32.mrb[0].mxu0
      %v1703 = vadd.f32 0.0, %v1702
      %v1704 = vpop.f32.mrb[0].mxu0
      %1705 = vmatprep.mubr.f32.mxu0 0.0
      %1706 = vmatmul.mubr.f32.gmra.mrb[0].mxu0 %v1616
      %v1707 = vpop.f32.mrb[0].mxu0
      %v1708 = vadd.f32 0.0, %v1707
      %v1709 = vpop.f32.mrb[0].mxu0
      %1710 = vmatprep.mubr.f32.mxu0 0.0
      %1711 = vmatmul.mubr.f32.gmra.mrb[0].mxu0 %v1619
      %v1712 = vpop.f32.mrb[0].mxu0
      %v1713 = vadd.f32 0.0, %v1712
      %v1714 = vpop.f32.mrb[0].mxu0
      %1715 = vmatprep.mubr.f32.mxu0 0.0
      %1716 = vmatmul.mubr.f32.gmra.mrb[0].mxu0 %v1622
      %v1717 = vpop.f32.mrb[0].mxu0
      %v1718 = vadd.f32 0.0, %v1717
      %v1719 = vpop.f32.mrb[0].mxu0
      %1720 = vmatprep.mubr.f32.mxu0 0.0
      %1721 = vmatmul.mubr.f32.gmra.mrb[0].mxu0 %v1625
      %v1722 = vpop.f32.mrb[0].mxu0
      %v1723 = vadd.f32 0.0, %v1722
      %v1724 = vpop.f32.mrb[0].mxu0
      %1725 = vmatprep.mubr.f32.mxu0 0.0
      %1726 = vmatmul.mubr.f32.gmra.mrb[0].mxu0 %v1628
      %v1727 = vpop.f32.mrb[0].mxu0
      %v1728 = vadd.f32 0.0, %v1727
      %v1729 = vpop.f32.mrb[0].mxu0
      %1730 = vmatprep.mubr.f32.mxu0 0.0
      %1731 = vmatmul.mubr.f32.gmra.mrb[0].mxu0 %v1631
      %v1732 = vpop.f32.mrb[0].mxu0
      %v1733 = vadd.f32 0.0, %v1732
      %v1734 = vpop.f32.mrb[0].mxu0
      %1735 = vmatprep.mubr.f32.mxu0 0.0
      %1736 = vmatmul.mubr.f32.gmra.mrb[0].mxu0 %v1634
      %v1737 = vpop.f32.mrb[0].mxu0
      %v1738 = vadd.f32 0.0, %v1737
      %v1739 = vpop.f32.mrb[0].mxu0
      %1740 = vdwg.mxu0
      %v1742 = vsel %vm253, %v1589, 0
      %1744 = vmatprep.subr.mxu0 0.0
      %1745 = vmatpush1.msra.mxu0 %v1609
      %1746 = vmatprep.subr.mxu0 0.0
      %1747 = vmatpush1.msra.mxu0 0.0
      %1748 = vmatprep.subr.mxu0 0.0
      %1749 = vmatpush1.msra.mxu0 0.0
      %1750 = vmatprep.subr.mxu0 0.0
      %1751 = vmatpush1.msra.mxu0 0.0
      %1752 = vmatprep.subr.mxu0 0.0
      %1753 = vmatpush1.msra.mxu0 0.0
      %1754 = vmatprep.subr.mxu0 0.0
      %1755 = vmatpush1.msra.mxu0 0.0
      %1756 = vmatprep.subr.mxu0 0.0
      %1757 = vmatpush1.msra.mxu0 0.0
      %1758 = vmatprep.subr.mxu0 0.0
      %1759 = vmatpush1.msra.mxu0 0.0
      %1760 = vmatprep.subr.mxu0 0.0
      %1761 = vmatpush1.msra.mxu0 0.0
      %1762 = vmatprep.subr.mxu0 0.0
      %1763 = vmatpush1.msra.mxu0 0.0
      %1764 = vmatprep.subr.mxu0 0.0
      %1765 = vmatpush1.msra.mxu0 0.0
      %1766 = vmatprep.subr.mxu0 0.0
      %1767 = vmatpush1.msra.mxu0 0.0
      %1768 = vmatprep.subr.mxu0 0.0
      %1769 = vmatpush1.msra.mxu0 0.0
      %1770 = vmatprep.subr.mxu0 0.0
      %1771 = vmatpush1.msra.mxu0 0.0
      %1772 = vmatprep.subr.mxu0 0.0
      %1773 = vmatpush1.msra.mxu0 0.0
      %1774 = vmatprep.subr.mxu0 0.0
      %1775 = vmatpush1.msra.mxu0 0.0
      %1776 = vmatprep.subr.mxu0 0.0
      %1777 = vmatpush1.msra.mxu0 0.0
      %1778 = vmatprep.subr.mxu0 0.0
      %1779 = vmatpush1.msra.mxu0 0.0
      %1780 = vmatprep.subr.mxu0 0.0
      %1781 = vmatpush1.msra.mxu0 0.0
      %1782 = vmatprep.subr.mxu0 0.0
      %1783 = vmatpush1.msra.mxu0 0.0
      %1784 = vmatprep.subr.mxu0 0.0
      %1785 = vmatpush1.msra.mxu0 0.0
      %1786 = vmatprep.subr.mxu0 0.0
      %1787 = vmatpush1.msra.mxu0 0.0
      %1788 = vmatprep.subr.mxu0 0.0
      %1789 = vmatpush1.msra.mxu0 0.0
      %1790 = vmatprep.subr.mxu0 0.0
      %1791 = vmatpush1.msra.mxu0 0.0
      %1792 = vmatprep.subr.mxu0 0.0
      %1793 = vmatpush1.msra.mxu0 0.0
      %1794 = vmatprep.subr.mxu0 0.0
      %1795 = vmatpush1.msra.mxu0 0.0
      %1796 = vmatprep.subr.mxu0 0.0
      %1797 = vmatpush1.msra.mxu0 0.0
      %1798 = vmatprep.subr.mxu0 0.0
      %1799 = vmatpush1.msra.mxu0 0.0
      %1800 = vmatprep.subr.mxu0 0.0
      %1801 = vmatpush1.msra.mxu0 0.0
      %1802 = vmatprep.subr.mxu0 0.0
      %1803 = vmatpush1.msra.mxu0 0.0
      %1804 = vmatprep.subr.mxu0 0.0
      %1805 = vmatpush1.msra.mxu0 0.0
      %1806 = vmatprep.subr.mxu0 0.0
      %1807 = vmatpush1.msra.mxu0 0.0
      %1808 = vmatprep.mubr.f32.mxu0 0.0
      %1809 = vmatmul.mubr.f32.gmra.mrb[0].mxu0 %v1742
      %v1810 = vpop.f32.mrb[0].mxu0
      %v1811 = vadd.f32 %v1703, %v1810
      %v1812 = vpop.f32.mrb[0].mxu0
      %1813 = vmatprep.mubr.f32.mxu0 0.0
      %1814 = vmatmul.mubr.f32.gmra.mrb[0].mxu0 %v1613
      %v1815 = vpop.f32.mrb[0].mxu0
      %v1816 = vadd.f32 %v1708, %v1815
      %v1817 = vpop.f32.mrb[0].mxu0
      %1818 = vmatprep.mubr.f32.mxu0 0.0
      %1819 = vmatmul.mubr.f32.gmra.mrb[0].mxu0 %v1616
      %v1820 = vpop.f32.mrb[0].mxu0
      %v1821 = vadd.f32 %v1713, %v1820
      %v1822 = vpop.f32.mrb[0].mxu0
      %1823 = vmatprep.mubr.f32.mxu0 0.0
      %1824 = vmatmul.mubr.f32.gmra.mrb[0].mxu0 %v1619
      %v1825 = vpop.f32.mrb[0].mxu0
      %v1826 = vadd.f32 %v1718, %v1825
      %v1827 = vpop.f32.mrb[0].mxu0
      %1828 = vmatprep.mubr.f32.mxu0 0.0
      %1829 = vmatmul.mubr.f32.gmra.mrb[0].mxu0 %v1622
      %v1830 = vpop.f32.mrb[0].mxu0
      %v1831 = vadd.f32 %v1723, %v1830
      %v1832 = vpop.f32.mrb[0].mxu0
      %1833 = vmatprep.mubr.f32.mxu0 0.0
      %1834 = vmatmul.mubr.f32.gmra.mrb[0].mxu0 %v1625
      %v1835 = vpop.f32.mrb[0].mxu0
      %v1836 = vadd.f32 %v1728, %v1835
      %v1837 = vpop.f32.mrb[0].mxu0
      %1838 = vmatprep.mubr.f32.mxu0 0.0
      %1839 = vmatmul.mubr.f32.gmra.mrb[0].mxu0 %v1628
      %v1840 = vpop.f32.mrb[0].mxu0
      %v1841 = vadd.f32 %v1733, %v1840
      %v1842 = vpop.f32.mrb[0].mxu0
      %1843 = vmatprep.mubr.f32.mxu0 0.0
      %1844 = vmatmul.mubr.f32.gmra.mrb[0].mxu0 %v1631
      %v1845 = vpop.f32.mrb[0].mxu0
      %v1846 = vadd.f32 %v1738, %v1845
      %v1847 = vpop.f32.mrb[0].mxu0
      %1848 = vdwg.mxu0
      %s1849 = scalar_lea.vmem %s3, 48
      %v1850 = vld [vmem:[%s1849] sm:$0xff]
      %v1852 = vsel %vm253, %v1607, 0
      %1854 = vmatprep.subr.mxu0 0.0
      %1855 = vmatpush1.msra.mxu0 %v1850
      %1856 = vmatprep.subr.mxu0 0.0
      %1857 = vmatpush1.msra.mxu0 0.0
      %1858 = vmatprep.subr.mxu0 0.0
      %1859 = vmatpush1.msra.mxu0 0.0
      %1860 = vmatprep.subr.mxu0 0.0
      %1861 = vmatpush1.msra.mxu0 0.0
      %1862 = vmatprep.subr.mxu0 0.0
      %1863 = vmatpush1.msra.mxu0 0.0
      %1864 = vmatprep.subr.mxu0 0.0
      %1865 = vmatpush1.msra.mxu0 0.0
      %1866 = vmatprep.subr.mxu0 0.0
      %1867 = vmatpush1.msra.mxu0 0.0
      %1868 = vmatprep.subr.mxu0 0.0
      %1869 = vmatpush1.msra.mxu0 0.0
      %1870 = vmatprep.subr.mxu0 0.0
      %1871 = vmatpush1.msra.mxu0 0.0
      %1872 = vmatprep.subr.mxu0 0.0
      %1873 = vmatpush1.msra.mxu0 0.0
      %1874 = vmatprep.subr.mxu0 0.0
      %1875 = vmatpush1.msra.mxu0 0.0
      %1876 = vmatprep.subr.mxu0 0.0
      %1877 = vmatpush1.msra.mxu0 0.0
      %1878 = vmatprep.subr.mxu0 0.0
      %1879 = vmatpush1.msra.mxu0 0.0
      %1880 = vmatprep.subr.mxu0 0.0
      %1881 = vmatpush1.msra.mxu0 0.0
      %1882 = vmatprep.subr.mxu0 0.0
      %1883 = vmatpush1.msra.mxu0 0.0
      %1884 = vmatprep.subr.mxu0 0.0
      %1885 = vmatpush1.msra.mxu0 0.0
      %1886 = vmatprep.subr.mxu0 0.0
      %1887 = vmatpush1.msra.mxu0 0.0
      %1888 = vmatprep.subr.mxu0 0.0
      %1889 = vmatpush1.msra.mxu0 0.0
      %1890 = vmatprep.subr.mxu0 0.0
      %1891 = vmatpush1.msra.mxu0 0.0
      %1892 = vmatprep.subr.mxu0 0.0
      %1893 = vmatpush1.msra.mxu0 0.0
      %1894 = vmatprep.subr.mxu0 0.0
      %1895 = vmatpush1.msra.mxu0 0.0
      %1896 = vmatprep.subr.mxu0 0.0
      %1897 = vmatpush1.msra.mxu0 0.0
      %1898 = vmatprep.subr.mxu0 0.0
      %1899 = vmatpush1.msra.mxu0 0.0
      %1900 = vmatprep.subr.mxu0 0.0
      %1901 = vmatpush1.msra.mxu0 0.0
      %1902 = vmatprep.subr.mxu0 0.0
      %1903 = vmatpush1.msra.mxu0 0.0
      %1904 = vmatprep.subr.mxu0 0.0
      %1905 = vmatpush1.msra.mxu0 0.0
      %1906 = vmatprep.subr.mxu0 0.0
      %1907 = vmatpush1.msra.mxu0 0.0
      %1908 = vmatprep.subr.mxu0 0.0
      %1909 = vmatpush1.msra.mxu0 0.0
      %1910 = vmatprep.subr.mxu0 0.0
      %1911 = vmatpush1.msra.mxu0 0.0
      %1912 = vmatprep.subr.mxu0 0.0
      %1913 = vmatpush1.msra.mxu0 0.0
      %1914 = vmatprep.subr.mxu0 0.0
      %1915 = vmatpush1.msra.mxu0 0.0
      %1916 = vmatprep.subr.mxu0 0.0
      %1917 = vmatpush1.msra.mxu0 0.0
      %1918 = vmatprep.mubr.f32.mxu0 0.0
      %1919 = vmatmul.mubr.f32.gmra.mrb[0].mxu0 %v1616
      %v1920 = vpop.f32.mrb[0].mxu0
      %v1921 = vadd.f32 0.0, %v1920
      %v1922 = vpop.f32.mrb[0].mxu0
      %1923 = vmatprep.mubr.f32.mxu0 0.0
      %1924 = vmatmul.mubr.f32.gmra.mrb[0].mxu0 %v1619
      %v1925 = vpop.f32.mrb[0].mxu0
      %v1926 = vadd.f32 0.0, %v1925
      %v1927 = vpop.f32.mrb[0].mxu0
      %1928 = vmatprep.mubr.f32.mxu0 0.0
      %1929 = vmatmul.mubr.f32.gmra.mrb[0].mxu0 %v1622
      %v1930 = vpop.f32.mrb[0].mxu0
      %v1931 = vadd.f32 0.0, %v1930
      %v1932 = vpop.f32.mrb[0].mxu0
      %1933 = vmatprep.mubr.f32.mxu0 0.0
      %1934 = vmatmul.mubr.f32.gmra.mrb[0].mxu0 %v1625
      %v1935 = vpop.f32.mrb[0].mxu0
      %v1936 = vadd.f32 0.0, %v1935
      %v1937 = vpop.f32.mrb[0].mxu0
      %1938 = vmatprep.mubr.f32.mxu0 0.0
      %1939 = vmatmul.mubr.f32.gmra.mrb[0].mxu0 %v1628
      %v1940 = vpop.f32.mrb[0].mxu0
      %v1941 = vadd.f32 0.0, %v1940
      %v1942 = vpop.f32.mrb[0].mxu0
      %1943 = vmatprep.mubr.f32.mxu0 0.0
      %1944 = vmatmul.mubr.f32.gmra.mrb[0].mxu0 %v1631
      %v1945 = vpop.f32.mrb[0].mxu0
      %v1946 = vadd.f32 0.0, %v1945
      %v1947 = vpop.f32.mrb[0].mxu0
      %1948 = vmatprep.mubr.f32.mxu0 0.0
      %1949 = vmatmul.mubr.f32.gmra.mrb[0].mxu0 %v1634
      %v1950 = vpop.f32.mrb[0].mxu0
      %v1951 = vadd.f32 0.0, %v1950
      %v1952 = vpop.f32.mrb[0].mxu0
      %1953 = vmatprep.mubr.f32.mxu0 0.0
      %1954 = vmatmul.mubr.f32.gmra.mrb[0].mxu0 %v1852
      %v1955 = vpop.f32.mrb[0].mxu0
      %v1956 = vadd.f32 0.0, %v1955
      %v1957 = vpop.f32.mrb[0].mxu0
      %1958 = vdwg.mxu0
      %v1959 = vadd.f32 %v1811, %v1921
      %v1960 = vadd.f32 %v1816, %v1926
      %v1961 = vadd.f32 %v1821, %v1931
      %v1962 = vadd.f32 %v1826, %v1936
      %v1963 = vadd.f32 %v1831, %v1941
      %v1964 = vadd.f32 %v1836, %v1946
      %v1965 = vadd.f32 %v1841, %v1951
      %v1966 = vadd.f32 %v1846, %v1956
      %s1967 = scalar_lea.vmem %s3, 8
      %v1968 = vld [vmem:[%s1967] sm:$0xff]
      %v1977 = vrot.slane %v1589, 1
      %v1978 = vrot.slane %v1590, 1
      %v1979 = vsel %vm747, %v1977, %v1978
      %v1980 = vrot.slane %v1591, 1
      %v1981 = vrot.slane %v1592, 1
      %v1982 = vsel %vm747, %v1980, %v1981
      %v1983 = vrot.slane %v1593, 1
      %v1984 = vrot.slane %v1594, 1
      %v1985 = vsel %vm747, %v1983, %v1984
      %v1986 = vrot.slane %v1595, 1
      %v1987 = vrot.slane %v1596, 1
      %v1988 = vsel %vm747, %v1986, %v1987
      %v1989 = vrot.slane %v1597, 1
      %v1990 = vrot.slane %v1598, 1
      %v1991 = vsel %vm747, %v1989, %v1990
      %v1992 = vrot.slane %v1599, 1
      %v1993 = vrot.slane %v1600, 1
      %v1994 = vsel %vm747, %v1992, %v1993
      %v1995 = vrot.slane %v1601, 1
      %v1996 = vrot.slane %v1602, 1
      %v1997 = vsel %vm747, %v1995, %v1996
      %v1998 = vrot.slane %v1603, 1
      %v1999 = vrot.slane %v1604, 1
      %v2000 = vsel %vm747, %v1998, %v1999
      %v2001 = vsel %vm253, %v1979, 0
      %v2003 = vsel %vm253, %v1982, 0
      %v2005 = vsel %vm253, %v1985, 0
      %v2007 = vsel %vm253, %v1988, 0
      %v2009 = vsel %vm253, %v1991, 0
      %v2011 = vsel %vm253, %v1994, 0
      %v2013 = vsel %vm253, %v1997, 0
      %v2015 = vsel %vm253, %v2000, 0
      %2017 = vmatprep.subr.mxu0 0.0
      %2018 = vmatpush1.msra.mxu0 %v1968
      %2019 = vmatprep.subr.mxu0 0.0
      %2020 = vmatpush1.msra.mxu0 0.0
      %2021 = vmatprep.subr.mxu0 0.0
      %2022 = vmatpush1.msra.mxu0 0.0
      %2023 = vmatprep.subr.mxu0 0.0
      %2024 = vmatpush1.msra.mxu0 0.0
      %2025 = vmatprep.subr.mxu0 0.0
      %2026 = vmatpush1.msra.mxu0 0.0
      %2027 = vmatprep.subr.mxu0 0.0
      %2028 = vmatpush1.msra.mxu0 0.0
      %2029 = vmatprep.subr.mxu0 0.0
      %2030 = vmatpush1.msra.mxu0 0.0
      %2031 = vmatprep.subr.mxu0 0.0
      %2032 = vmatpush1.msra.mxu0 0.0
      %2033 = vmatprep.subr.mxu0 0.0
      %2034 = vmatpush1.msra.mxu0 0.0
      %2035 = vmatprep.subr.mxu0 0.0
      %2036 = vmatpush1.msra.mxu0 0.0
      %2037 = vmatprep.subr.mxu0 0.0
      %2038 = vmatpush1.msra.mxu0 0.0
      %2039 = vmatprep.subr.mxu0 0.0
      %2040 = vmatpush1.msra.mxu0 0.0
      %2041 = vmatprep.subr.mxu0 0.0
      %2042 = vmatpush1.msra.mxu0 0.0
      %2043 = vmatprep.subr.mxu0 0.0
      %2044 = vmatpush1.msra.mxu0 0.0
      %2045 = vmatprep.subr.mxu0 0.0
      %2046 = vmatpush1.msra.mxu0 0.0
      %2047 = vmatprep.subr.mxu0 0.0
      %2048 = vmatpush1.msra.mxu0 0.0
      %2049 = vmatprep.subr.mxu0 0.0
      %2050 = vmatpush1.msra.mxu0 0.0
      %2051 = vmatprep.subr.mxu0 0.0
      %2052 = vmatpush1.msra.mxu0 0.0
      %2053 = vmatprep.subr.mxu0 0.0
      %2054 = vmatpush1.msra.mxu0 0.0
      %2055 = vmatprep.subr.mxu0 0.0
      %2056 = vmatpush1.msra.mxu0 0.0
      %2057 = vmatprep.subr.mxu0 0.0
      %2058 = vmatpush1.msra.mxu0 0.0
      %2059 = vmatprep.subr.mxu0 0.0
      %2060 = vmatpush1.msra.mxu0 0.0
      %2061 = vmatprep.subr.mxu0 0.0
      %2062 = vmatpush1.msra.mxu0 0.0
      %2063 = vmatprep.subr.mxu0 0.0
      %2064 = vmatpush1.msra.mxu0 0.0
      %2065 = vmatprep.subr.mxu0 0.0
      %2066 = vmatpush1.msra.mxu0 0.0
      %2067 = vmatprep.subr.mxu0 0.0
      %2068 = vmatpush1.msra.mxu0 0.0
      %2069 = vmatprep.subr.mxu0 0.0
      %2070 = vmatpush1.msra.mxu0 0.0
      %2071 = vmatprep.subr.mxu0 0.0
      %2072 = vmatpush1.msra.mxu0 0.0
      %2073 = vmatprep.subr.mxu0 0.0
      %2074 = vmatpush1.msra.mxu0 0.0
      %2075 = vmatprep.subr.mxu0 0.0
      %2076 = vmatpush1.msra.mxu0 0.0
      %2077 = vmatprep.subr.mxu0 0.0
      %2078 = vmatpush1.msra.mxu0 0.0
      %2079 = vmatprep.subr.mxu0 0.0
      %2080 = vmatpush1.msra.mxu0 0.0
      %2081 = vmatprep.mubr.f32.mxu0 0.0
      %2082 = vmatmul.mubr.f32.gmra.mrb[0].mxu0 %v2001
      %v2083 = vpop.f32.mrb[0].mxu0
      %v2084 = vadd.f32 0.0, %v2083
      %v2085 = vpop.f32.mrb[0].mxu0
      %2086 = vmatprep.mubr.f32.mxu0 0.0
      %2087 = vmatmul.mubr.f32.gmra.mrb[0].mxu0 %v2003
      %v2088 = vpop.f32.mrb[0].mxu0
      %v2089 = vadd.f32 0.0, %v2088
      %v2090 = vpop.f32.mrb[0].mxu0
      %2091 = vmatprep.mubr.f32.mxu0 0.0
      %2092 = vmatmul.mubr.f32.gmra.mrb[0].mxu0 %v2005
      %v2093 = vpop.f32.mrb[0].mxu0
      %v2094 = vadd.f32 0.0, %v2093
      %v2095 = vpop.f32.mrb[0].mxu0
      %2096 = vmatprep.mubr.f32.mxu0 0.0
      %2097 = vmatmul.mubr.f32.gmra.mrb[0].mxu0 %v2007
      %v2098 = vpop.f32.mrb[0].mxu0
      %v2099 = vadd.f32 0.0, %v2098
      %v2100 = vpop.f32.mrb[0].mxu0
      %2101 = vmatprep.mubr.f32.mxu0 0.0
      %2102 = vmatmul.mubr.f32.gmra.mrb[0].mxu0 %v2009
      %v2103 = vpop.f32.mrb[0].mxu0
      %v2104 = vadd.f32 0.0, %v2103
      %v2105 = vpop.f32.mrb[0].mxu0
      %2106 = vmatprep.mubr.f32.mxu0 0.0
      %2107 = vmatmul.mubr.f32.gmra.mrb[0].mxu0 %v2011
      %v2108 = vpop.f32.mrb[0].mxu0
      %v2109 = vadd.f32 0.0, %v2108
      %v2110 = vpop.f32.mrb[0].mxu0
      %2111 = vmatprep.mubr.f32.mxu0 0.0
      %2112 = vmatmul.mubr.f32.gmra.mrb[0].mxu0 %v2013
      %v2113 = vpop.f32.mrb[0].mxu0
      %v2114 = vadd.f32 0.0, %v2113
      %v2115 = vpop.f32.mrb[0].mxu0
      %2116 = vmatprep.mubr.f32.mxu0 0.0
      %2117 = vmatmul.mubr.f32.gmra.mrb[0].mxu0 %v2015
      %v2118 = vpop.f32.mrb[0].mxu0
      %v2119 = vadd.f32 0.0, %v2118
      %v2120 = vpop.f32.mrb[0].mxu0
      %2121 = vdwg.mxu0
      %v2122 = vadd.f32 %v1959, %v2084
      %v2123 = vadd.f32 %v1960, %v2089
      %v2124 = vadd.f32 %v1961, %v2094
      %v2125 = vadd.f32 %v1962, %v2099
      %v2126 = vadd.f32 %v1963, %v2104
      %v2127 = vadd.f32 %v1964, %v2109
      %v2128 = vadd.f32 %v1965, %v2114
      %v2129 = vadd.f32 %v1966, %v2119
      %s2130 = scalar_lea.vmem %s3, 32
      %v2131 = vld [vmem:[%s2130] sm:$0xff]
      %v2133 = vrot.slane %v1605, 1
      %v2134 = vrot.slane %v1606, 1
      %v2135 = vsel %vm747, %v2133, %v2134
      %v2136 = vsel %vm253, %v2135, 0
      %2138 = vmatprep.subr.mxu0 0.0
      %2139 = vmatpush1.msra.mxu0 %v2131
      %2140 = vmatprep.subr.mxu0 0.0
      %2141 = vmatpush1.msra.mxu0 0.0
      %2142 = vmatprep.subr.mxu0 0.0
      %2143 = vmatpush1.msra.mxu0 0.0
      %2144 = vmatprep.subr.mxu0 0.0
      %2145 = vmatpush1.msra.mxu0 0.0
      %2146 = vmatprep.subr.mxu0 0.0
      %2147 = vmatpush1.msra.mxu0 0.0
      %2148 = vmatprep.subr.mxu0 0.0
      %2149 = vmatpush1.msra.mxu0 0.0
      %2150 = vmatprep.subr.mxu0 0.0
      %2151 = vmatpush1.msra.mxu0 0.0
      %2152 = vmatprep.subr.mxu0 0.0
      %2153 = vmatpush1.msra.mxu0 0.0
      %2154 = vmatprep.subr.mxu0 0.0
      %2155 = vmatpush1.msra.mxu0 0.0
      %2156 = vmatprep.subr.mxu0 0.0
      %2157 = vmatpush1.msra.mxu0 0.0
      %2158 = vmatprep.subr.mxu0 0.0
      %2159 = vmatpush1.msra.mxu0 0.0
      %2160 = vmatprep.subr.mxu0 0.0
      %2161 = vmatpush1.msra.mxu0 0.0
      %2162 = vmatprep.subr.mxu0 0.0
      %2163 = vmatpush1.msra.mxu0 0.0
      %2164 = vmatprep.subr.mxu0 0.0
      %2165 = vmatpush1.msra.mxu0 0.0
      %2166 = vmatprep.subr.mxu0 0.0
      %2167 = vmatpush1.msra.mxu0 0.0
      %2168 = vmatprep.subr.mxu0 0.0
      %2169 = vmatpush1.msra.mxu0 0.0
      %2170 = vmatprep.subr.mxu0 0.0
      %2171 = vmatpush1.msra.mxu0 0.0
      %2172 = vmatprep.subr.mxu0 0.0
      %2173 = vmatpush1.msra.mxu0 0.0
      %2174 = vmatprep.subr.mxu0 0.0
      %2175 = vmatpush1.msra.mxu0 0.0
      %2176 = vmatprep.subr.mxu0 0.0
      %2177 = vmatpush1.msra.mxu0 0.0
      %2178 = vmatprep.subr.mxu0 0.0
      %2179 = vmatpush1.msra.mxu0 0.0
      %2180 = vmatprep.subr.mxu0 0.0
      %2181 = vmatpush1.msra.mxu0 0.0
      %2182 = vmatprep.subr.mxu0 0.0
      %2183 = vmatpush1.msra.mxu0 0.0
      %2184 = vmatprep.subr.mxu0 0.0
      %2185 = vmatpush1.msra.mxu0 0.0
      %2186 = vmatprep.subr.mxu0 0.0
      %2187 = vmatpush1.msra.mxu0 0.0
      %2188 = vmatprep.subr.mxu0 0.0
      %2189 = vmatpush1.msra.mxu0 0.0
      %2190 = vmatprep.subr.mxu0 0.0
      %2191 = vmatpush1.msra.mxu0 0.0
      %2192 = vmatprep.subr.mxu0 0.0
      %2193 = vmatpush1.msra.mxu0 0.0
      %2194 = vmatprep.subr.mxu0 0.0
      %2195 = vmatpush1.msra.mxu0 0.0
      %2196 = vmatprep.subr.mxu0 0.0
      %2197 = vmatpush1.msra.mxu0 0.0
      %2198 = vmatprep.subr.mxu0 0.0
      %2199 = vmatpush1.msra.mxu0 0.0
      %2200 = vmatprep.subr.mxu0 0.0
      %2201 = vmatpush1.msra.mxu0 0.0
      %2202 = vmatprep.mubr.f32.mxu0 0.0
      %2203 = vmatmul.mubr.f32.gmra.mrb[0].mxu0 %v2003
      %v2204 = vpop.f32.mrb[0].mxu0
      %v2205 = vadd.f32 0.0, %v2204
      %v2206 = vpop.f32.mrb[0].mxu0
      %2207 = vmatprep.mubr.f32.mxu0 0.0
      %2208 = vmatmul.mubr.f32.gmra.mrb[0].mxu0 %v2005
      %v2209 = vpop.f32.mrb[0].mxu0
      %v2210 = vadd.f32 0.0, %v2209
      %v2211 = vpop.f32.mrb[0].mxu0
      %2212 = vmatprep.mubr.f32.mxu0 0.0
      %2213 = vmatmul.mubr.f32.gmra.mrb[0].mxu0 %v2007
      %v2214 = vpop.f32.mrb[0].mxu0
      %v2215 = vadd.f32 0.0, %v2214
      %v2216 = vpop.f32.mrb[0].mxu0
      %2217 = vmatprep.mubr.f32.mxu0 0.0
      %2218 = vmatmul.mubr.f32.gmra.mrb[0].mxu0 %v2009
      %v2219 = vpop.f32.mrb[0].mxu0
      %v2220 = vadd.f32 0.0, %v2219
      %v2221 = vpop.f32.mrb[0].mxu0
      %2222 = vmatprep.mubr.f32.mxu0 0.0
      %2223 = vmatmul.mubr.f32.gmra.mrb[0].mxu0 %v2011
      %v2224 = vpop.f32.mrb[0].mxu0
      %v2225 = vadd.f32 0.0, %v2224
      %v2226 = vpop.f32.mrb[0].mxu0
      %2227 = vmatprep.mubr.f32.mxu0 0.0
      %2228 = vmatmul.mubr.f32.gmra.mrb[0].mxu0 %v2013
      %v2229 = vpop.f32.mrb[0].mxu0
      %v2230 = vadd.f32 0.0, %v2229
      %v2231 = vpop.f32.mrb[0].mxu0
      %2232 = vmatprep.mubr.f32.mxu0 0.0
      %2233 = vmatmul.mubr.f32.gmra.mrb[0].mxu0 %v2015
      %v2234 = vpop.f32.mrb[0].mxu0
      %v2235 = vadd.f32 0.0, %v2234
      %v2236 = vpop.f32.mrb[0].mxu0
      %2237 = vmatprep.mubr.f32.mxu0 0.0
      %2238 = vmatmul.mubr.f32.gmra.mrb[0].mxu0 %v2136
      %v2239 = vpop.f32.mrb[0].mxu0
      %v2240 = vadd.f32 0.0, %v2239
      %v2241 = vpop.f32.mrb[0].mxu0
      %2242 = vdwg.mxu0
      %v2243 = vadd.f32 %v2122, %v2205
      %v2244 = vadd.f32 %v2123, %v2210
      %v2245 = vadd.f32 %v2124, %v2215
      %v2246 = vadd.f32 %v2125, %v2220
      %v2247 = vadd.f32 %v2126, %v2225
      %v2248 = vadd.f32 %v2127, %v2230
      %v2249 = vadd.f32 %v2128, %v2235
      %v2250 = vadd.f32 %v2129, %v2240
      %s2251 = scalar_lea.vmem %s3, 56
      %v2252 = vld [vmem:[%s2251] sm:$0xff]
      %v2254 = vrot.slane %v1607, 1
      %v2255 = vrot.slane %v1608, 1
      %v2256 = vsel %vm747, %v2254, %v2255
      %v2257 = vsel %vm253, %v2256, 0
      %2259 = vmatprep.subr.mxu0 0.0
      %2260 = vmatpush1.msra.mxu0 %v2252
      %2261 = vmatprep.subr.mxu0 0.0
      %2262 = vmatpush1.msra.mxu0 0.0
      %2263 = vmatprep.subr.mxu0 0.0
      %2264 = vmatpush1.msra.mxu0 0.0
      %2265 = vmatprep.subr.mxu0 0.0
      %2266 = vmatpush1.msra.mxu0 0.0
      %2267 = vmatprep.subr.mxu0 0.0
      %2268 = vmatpush1.msra.mxu0 0.0
      %2269 = vmatprep.subr.mxu0 0.0
      %2270 = vmatpush1.msra.mxu0 0.0
      %2271 = vmatprep.subr.mxu0 0.0
      %2272 = vmatpush1.msra.mxu0 0.0
      %2273 = vmatprep.subr.mxu0 0.0
      %2274 = vmatpush1.msra.mxu0 0.0
      %2275 = vmatprep.subr.mxu0 0.0
      %2276 = vmatpush1.msra.mxu0 0.0
      %2277 = vmatprep.subr.mxu0 0.0
      %2278 = vmatpush1.msra.mxu0 0.0
      %2279 = vmatprep.subr.mxu0 0.0
      %2280 = vmatpush1.msra.mxu0 0.0
      %2281 = vmatprep.subr.mxu0 0.0
      %2282 = vmatpush1.msra.mxu0 0.0
      %2283 = vmatprep.subr.mxu0 0.0
      %2284 = vmatpush1.msra.mxu0 0.0
      %2285 = vmatprep.subr.mxu0 0.0
      %2286 = vmatpush1.msra.mxu0 0.0
      %2287 = vmatprep.subr.mxu0 0.0
      %2288 = vmatpush1.msra.mxu0 0.0
      %2289 = vmatprep.subr.mxu0 0.0
      %2290 = vmatpush1.msra.mxu0 0.0
      %2291 = vmatprep.subr.mxu0 0.0
      %2292 = vmatpush1.msra.mxu0 0.0
      %2293 = vmatprep.subr.mxu0 0.0
      %2294 = vmatpush1.msra.mxu0 0.0
      %2295 = vmatprep.subr.mxu0 0.0
      %2296 = vmatpush1.msra.mxu0 0.0
      %2297 = vmatprep.subr.mxu0 0.0
      %2298 = vmatpush1.msra.mxu0 0.0
      %2299 = vmatprep.subr.mxu0 0.0
      %2300 = vmatpush1.msra.mxu0 0.0
      %2301 = vmatprep.subr.mxu0 0.0
      %2302 = vmatpush1.msra.mxu0 0.0
      %2303 = vmatprep.subr.mxu0 0.0
      %2304 = vmatpush1.msra.mxu0 0.0
      %2305 = vmatprep.subr.mxu0 0.0
      %2306 = vmatpush1.msra.mxu0 0.0
      %2307 = vmatprep.subr.mxu0 0.0
      %2308 = vmatpush1.msra.mxu0 0.0
      %2309 = vmatprep.subr.mxu0 0.0
      %2310 = vmatpush1.msra.mxu0 0.0
      %2311 = vmatprep.subr.mxu0 0.0
      %2312 = vmatpush1.msra.mxu0 0.0
      %2313 = vmatprep.subr.mxu0 0.0
      %2314 = vmatpush1.msra.mxu0 0.0
      %2315 = vmatprep.subr.mxu0 0.0
      %2316 = vmatpush1.msra.mxu0 0.0
      %2317 = vmatprep.subr.mxu0 0.0
      %2318 = vmatpush1.msra.mxu0 0.0
      %2319 = vmatprep.subr.mxu0 0.0
      %2320 = vmatpush1.msra.mxu0 0.0
      %2321 = vmatprep.subr.mxu0 0.0
      %2322 = vmatpush1.msra.mxu0 0.0
      %2323 = vmatprep.mubr.f32.mxu0 0.0
      %2324 = vmatmul.mubr.f32.gmra.mrb[0].mxu0 %v2005
      %v2325 = vpop.f32.mrb[0].mxu0
      %v2326 = vadd.f32 0.0, %v2325
      %v2327 = vpop.f32.mrb[0].mxu0
      %2328 = vmatprep.mubr.f32.mxu0 0.0
      %2329 = vmatmul.mubr.f32.gmra.mrb[0].mxu0 %v2007
      %v2330 = vpop.f32.mrb[0].mxu0
      %v2331 = vadd.f32 0.0, %v2330
      %v2332 = vpop.f32.mrb[0].mxu0
      %2333 = vmatprep.mubr.f32.mxu0 0.0
      %2334 = vmatmul.mubr.f32.gmra.mrb[0].mxu0 %v2009
      %v2335 = vpop.f32.mrb[0].mxu0
      %v2336 = vadd.f32 0.0, %v2335
      %v2337 = vpop.f32.mrb[0].mxu0
      %2338 = vmatprep.mubr.f32.mxu0 0.0
      %2339 = vmatmul.mubr.f32.gmra.mrb[0].mxu0 %v2011
      %v2340 = vpop.f32.mrb[0].mxu0
      %v2341 = vadd.f32 0.0, %v2340
      %v2342 = vpop.f32.mrb[0].mxu0
      %2343 = vmatprep.mubr.f32.mxu0 0.0
      %2344 = vmatmul.mubr.f32.gmra.mrb[0].mxu0 %v2013
      %v2345 = vpop.f32.mrb[0].mxu0
      %v2346 = vadd.f32 0.0, %v2345
      %v2347 = vpop.f32.mrb[0].mxu0
      %2348 = vmatprep.mubr.f32.mxu0 0.0
      %2349 = vmatmul.mubr.f32.gmra.mrb[0].mxu0 %v2015
      %v2350 = vpop.f32.mrb[0].mxu0
      %v2351 = vadd.f32 0.0, %v2350
      %v2352 = vpop.f32.mrb[0].mxu0
      %2353 = vmatprep.mubr.f32.mxu0 0.0
      %2354 = vmatmul.mubr.f32.gmra.mrb[0].mxu0 %v2136
      %v2355 = vpop.f32.mrb[0].mxu0
      %v2356 = vadd.f32 0.0, %v2355
      %v2357 = vpop.f32.mrb[0].mxu0
      %2358 = vmatprep.mubr.f32.mxu0 0.0
      %2359 = vmatmul.mubr.f32.gmra.mrb[0].mxu0 %v2257
      %v2360 = vpop.f32.mrb[0].mxu0
      %v2361 = vadd.f32 0.0, %v2360
      %v2362 = vpop.f32.mrb[0].mxu0
      %2363 = vdwg.mxu0
      %v2364 = vadd.f32 %v2243, %v2326
      %v2365 = vadd.f32 %v2244, %v2331
      %v2366 = vadd.f32 %v2245, %v2336
      %v2367 = vadd.f32 %v2246, %v2341
      %v2368 = vadd.f32 %v2247, %v2346
      %v2369 = vadd.f32 %v2248, %v2351
      %v2370 = vadd.f32 %v2249, %v2356
      %v2371 = vadd.f32 %v2250, %v2361
      %s2372 = scalar_lea.vmem %s3, 16
      %v2373 = vld [vmem:[%s2372] sm:$0xff]
      %v2374 = vrot.slane %v1589, 2
      %v2375 = vrot.slane %v1590, 2
      %v2376 = vsel %vm1154, %v2374, %v2375
      %v2377 = vrot.slane %v1591, 2
      %v2378 = vrot.slane %v1592, 2
      %v2379 = vsel %vm1154, %v2377, %v2378
      %v2380 = vrot.slane %v1593, 2
      %v2381 = vrot.slane %v1594, 2
      %v2382 = vsel %vm1154, %v2380, %v2381
      %v2383 = vrot.slane %v1595, 2
      %v2384 = vrot.slane %v1596, 2
      %v2385 = vsel %vm1154, %v2383, %v2384
      %v2386 = vrot.slane %v1597, 2
      %v2387 = vrot.slane %v1598, 2
      %v2388 = vsel %vm1154, %v2386, %v2387
      %v2389 = vrot.slane %v1599, 2
      %v2390 = vrot.slane %v1600, 2
      %v2391 = vsel %vm1154, %v2389, %v2390
      %v2392 = vrot.slane %v1601, 2
      %v2393 = vrot.slane %v1602, 2
      %v2394 = vsel %vm1154, %v2392, %v2393
      %v2395 = vrot.slane %v1603, 2
      %v2396 = vrot.slane %v1604, 2
      %v2397 = vsel %vm1154, %v2395, %v2396
      %v2398 = vsel %vm253, %v2376, 0
      %v2400 = vsel %vm253, %v2379, 0
      %v2402 = vsel %vm253, %v2382, 0
      %v2404 = vsel %vm253, %v2385, 0
      %v2406 = vsel %vm253, %v2388, 0
      %v2408 = vsel %vm253, %v2391, 0
      %v2410 = vsel %vm253, %v2394, 0
      %v2412 = vsel %vm253, %v2397, 0
      %2414 = vmatprep.subr.mxu0 0.0
      %2415 = vmatpush1.msra.mxu0 %v2373
      %2416 = vmatprep.subr.mxu0 0.0
      %2417 = vmatpush1.msra.mxu0 0.0
      %2418 = vmatprep.subr.mxu0 0.0
      %2419 = vmatpush1.msra.mxu0 0.0
      %2420 = vmatprep.subr.mxu0 0.0
      %2421 = vmatpush1.msra.mxu0 0.0
      %2422 = vmatprep.subr.mxu0 0.0
      %2423 = vmatpush1.msra.mxu0 0.0
      %2424 = vmatprep.subr.mxu0 0.0
      %2425 = vmatpush1.msra.mxu0 0.0
      %2426 = vmatprep.subr.mxu0 0.0
      %2427 = vmatpush1.msra.mxu0 0.0
      %2428 = vmatprep.subr.mxu0 0.0
      %2429 = vmatpush1.msra.mxu0 0.0
      %2430 = vmatprep.subr.mxu0 0.0
      %2431 = vmatpush1.msra.mxu0 0.0
      %2432 = vmatprep.subr.mxu0 0.0
      %2433 = vmatpush1.msra.mxu0 0.0
      %2434 = vmatprep.subr.mxu0 0.0
      %2435 = vmatpush1.msra.mxu0 0.0
      %2436 = vmatprep.subr.mxu0 0.0
      %2437 = vmatpush1.msra.mxu0 0.0
      %2438 = vmatprep.subr.mxu0 0.0
      %2439 = vmatpush1.msra.mxu0 0.0
      %2440 = vmatprep.subr.mxu0 0.0
      %2441 = vmatpush1.msra.mxu0 0.0
      %2442 = vmatprep.subr.mxu0 0.0
      %2443 = vmatpush1.msra.mxu0 0.0
      %2444 = vmatprep.subr.mxu0 0.0
      %2445 = vmatpush1.msra.mxu0 0.0
      %2446 = vmatprep.subr.mxu0 0.0
      %2447 = vmatpush1.msra.mxu0 0.0
      %2448 = vmatprep.subr.mxu0 0.0
      %2449 = vmatpush1.msra.mxu0 0.0
      %2450 = vmatprep.subr.mxu0 0.0
      %2451 = vmatpush1.msra.mxu0 0.0
      %2452 = vmatprep.subr.mxu0 0.0
      %2453 = vmatpush1.msra.mxu0 0.0
      %2454 = vmatprep.subr.mxu0 0.0
      %2455 = vmatpush1.msra.mxu0 0.0
      %2456 = vmatprep.subr.mxu0 0.0
      %2457 = vmatpush1.msra.mxu0 0.0
      %2458 = vmatprep.subr.mxu0 0.0
      %2459 = vmatpush1.msra.mxu0 0.0
      %2460 = vmatprep.subr.mxu0 0.0
      %2461 = vmatpush1.msra.mxu0 0.0
      %2462 = vmatprep.subr.mxu0 0.0
      %2463 = vmatpush1.msra.mxu0 0.0
      %2464 = vmatprep.subr.mxu0 0.0
      %2465 = vmatpush1.msra.mxu0 0.0
      %2466 = vmatprep.subr.mxu0 0.0
      %2467 = vmatpush1.msra.mxu0 0.0
      %2468 = vmatprep.subr.mxu0 0.0
      %2469 = vmatpush1.msra.mxu0 0.0
      %2470 = vmatprep.subr.mxu0 0.0
      %2471 = vmatpush1.msra.mxu0 0.0
      %2472 = vmatprep.subr.mxu0 0.0
      %2473 = vmatpush1.msra.mxu0 0.0
      %2474 = vmatprep.subr.mxu0 0.0
      %2475 = vmatpush1.msra.mxu0 0.0
      %2476 = vmatprep.subr.mxu0 0.0
      %2477 = vmatpush1.msra.mxu0 0.0
      %2478 = vmatprep.mubr.f32.mxu0 0.0
      %2479 = vmatmul.mubr.f32.gmra.mrb[0].mxu0 %v2398
      %v2480 = vpop.f32.mrb[0].mxu0
      %v2481 = vadd.f32 0.0, %v2480
      %v2482 = vpop.f32.mrb[0].mxu0
      %2483 = vmatprep.mubr.f32.mxu0 0.0
      %2484 = vmatmul.mubr.f32.gmra.mrb[0].mxu0 %v2400
      %v2485 = vpop.f32.mrb[0].mxu0
      %v2486 = vadd.f32 0.0, %v2485
      %v2487 = vpop.f32.mrb[0].mxu0
      %2488 = vmatprep.mubr.f32.mxu0 0.0
      %2489 = vmatmul.mubr.f32.gmra.mrb[0].mxu0 %v2402
      %v2490 = vpop.f32.mrb[0].mxu0
      %v2491 = vadd.f32 0.0, %v2490
      %v2492 = vpop.f32.mrb[0].mxu0
      %2493 = vmatprep.mubr.f32.mxu0 0.0
      %2494 = vmatmul.mubr.f32.gmra.mrb[0].mxu0 %v2404
      %v2495 = vpop.f32.mrb[0].mxu0
      %v2496 = vadd.f32 0.0, %v2495
      %v2497 = vpop.f32.mrb[0].mxu0
      %2498 = vmatprep.mubr.f32.mxu0 0.0
      %2499 = vmatmul.mubr.f32.gmra.mrb[0].mxu0 %v2406
      %v2500 = vpop.f32.mrb[0].mxu0
      %v2501 = vadd.f32 0.0, %v2500
      %v2502 = vpop.f32.mrb[0].mxu0
      %2503 = vmatprep.mubr.f32.mxu0 0.0
      %2504 = vmatmul.mubr.f32.gmra.mrb[0].mxu0 %v2408
      %v2505 = vpop.f32.mrb[0].mxu0
      %v2506 = vadd.f32 0.0, %v2505
      %v2507 = vpop.f32.mrb[0].mxu0
      %2508 = vmatprep.mubr.f32.mxu0 0.0
      %2509 = vmatmul.mubr.f32.gmra.mrb[0].mxu0 %v2410
      %v2510 = vpop.f32.mrb[0].mxu0
      %v2511 = vadd.f32 0.0, %v2510
      %v2512 = vpop.f32.mrb[0].mxu0
      %2513 = vmatprep.mubr.f32.mxu0 0.0
      %2514 = vmatmul.mubr.f32.gmra.mrb[0].mxu0 %v2412
      %v2515 = vpop.f32.mrb[0].mxu0
      %v2516 = vadd.f32 0.0, %v2515
      %v2517 = vpop.f32.mrb[0].mxu0
      %2518 = vdwg.mxu0
      %v2519 = vadd.f32 %v2364, %v2481
      %v2520 = vadd.f32 %v2365, %v2486
      %v2521 = vadd.f32 %v2366, %v2491
      %v2522 = vadd.f32 %v2367, %v2496
      %v2523 = vadd.f32 %v2368, %v2501
      %v2524 = vadd.f32 %v2369, %v2506
      %v2525 = vadd.f32 %v2370, %v2511
      %v2526 = vadd.f32 %v2371, %v2516
      %s2527 = scalar_lea.vmem %s3, 40
      %v2528 = vld [vmem:[%s2527] sm:$0xff]
      %v2529 = vrot.slane %v1605, 2
      %v2530 = vrot.slane %v1606, 2
      %v2531 = vsel %vm1154, %v2529, %v2530
      %v2532 = vsel %vm253, %v2531, 0
      %2534 = vmatprep.subr.mxu0 0.0
      %2535 = vmatpush1.msra.mxu0 %v2528
      %2536 = vmatprep.subr.mxu0 0.0
      %2537 = vmatpush1.msra.mxu0 0.0
      %2538 = vmatprep.subr.mxu0 0.0
      %2539 = vmatpush1.msra.mxu0 0.0
      %2540 = vmatprep.subr.mxu0 0.0
      %2541 = vmatpush1.msra.mxu0 0.0
      %2542 = vmatprep.subr.mxu0 0.0
      %2543 = vmatpush1.msra.mxu0 0.0
      %2544 = vmatprep.subr.mxu0 0.0
      %2545 = vmatpush1.msra.mxu0 0.0
      %2546 = vmatprep.subr.mxu0 0.0
      %2547 = vmatpush1.msra.mxu0 0.0
      %2548 = vmatprep.subr.mxu0 0.0
      %2549 = vmatpush1.msra.mxu0 0.0
      %2550 = vmatprep.subr.mxu0 0.0
      %2551 = vmatpush1.msra.mxu0 0.0
      %2552 = vmatprep.subr.mxu0 0.0
      %2553 = vmatpush1.msra.mxu0 0.0
      %2554 = vmatprep.subr.mxu0 0.0
      %2555 = vmatpush1.msra.mxu0 0.0
      %2556 = vmatprep.subr.mxu0 0.0
      %2557 = vmatpush1.msra.mxu0 0.0
      %2558 = vmatprep.subr.mxu0 0.0
      %2559 = vmatpush1.msra.mxu0 0.0
      %2560 = vmatprep.subr.mxu0 0.0
      %2561 = vmatpush1.msra.mxu0 0.0
      %2562 = vmatprep.subr.mxu0 0.0
      %2563 = vmatpush1.msra.mxu0 0.0
      %2564 = vmatprep.subr.mxu0 0.0
      %2565 = vmatpush1.msra.mxu0 0.0
      %2566 = vmatprep.subr.mxu0 0.0
      %2567 = vmatpush1.msra.mxu0 0.0
      %2568 = vmatprep.subr.mxu0 0.0
      %2569 = vmatpush1.msra.mxu0 0.0
      %2570 = vmatprep.subr.mxu0 0.0
      %2571 = vmatpush1.msra.mxu0 0.0
      %2572 = vmatprep.subr.mxu0 0.0
      %2573 = vmatpush1.msra.mxu0 0.0
      %2574 = vmatprep.subr.mxu0 0.0
      %2575 = vmatpush1.msra.mxu0 0.0
      %2576 = vmatprep.subr.mxu0 0.0
      %2577 = vmatpush1.msra.mxu0 0.0
      %2578 = vmatprep.subr.mxu0 0.0
      %2579 = vmatpush1.msra.mxu0 0.0
      %2580 = vmatprep.subr.mxu0 0.0
      %2581 = vmatpush1.msra.mxu0 0.0
      %2582 = vmatprep.subr.mxu0 0.0
      %2583 = vmatpush1.msra.mxu0 0.0
      %2584 = vmatprep.subr.mxu0 0.0
      %2585 = vmatpush1.msra.mxu0 0.0
      %2586 = vmatprep.subr.mxu0 0.0
      %2587 = vmatpush1.msra.mxu0 0.0
      %2588 = vmatprep.subr.mxu0 0.0
      %2589 = vmatpush1.msra.mxu0 0.0
      %2590 = vmatprep.subr.mxu0 0.0
      %2591 = vmatpush1.msra.mxu0 0.0
      %2592 = vmatprep.subr.mxu0 0.0
      %2593 = vmatpush1.msra.mxu0 0.0
      %2594 = vmatprep.subr.mxu0 0.0
      %2595 = vmatpush1.msra.mxu0 0.0
      %2596 = vmatprep.subr.mxu0 0.0
      %2597 = vmatpush1.msra.mxu0 0.0
      %2598 = vmatprep.mubr.f32.mxu0 0.0
      %2599 = vmatmul.mubr.f32.gmra.mrb[0].mxu0 %v2400
      %v2600 = vpop.f32.mrb[0].mxu0
      %v2601 = vadd.f32 0.0, %v2600
      %v2602 = vpop.f32.mrb[0].mxu0
      %2603 = vmatprep.mubr.f32.mxu0 0.0
      %2604 = vmatmul.mubr.f32.gmra.mrb[0].mxu0 %v2402
      %v2605 = vpop.f32.mrb[0].mxu0
      %v2606 = vadd.f32 0.0, %v2605
      %v2607 = vpop.f32.mrb[0].mxu0
      %2608 = vmatprep.mubr.f32.mxu0 0.0
      %2609 = vmatmul.mubr.f32.gmra.mrb[0].mxu0 %v2404
      %v2610 = vpop.f32.mrb[0].mxu0
      %v2611 = vadd.f32 0.0, %v2610
      %v2612 = vpop.f32.mrb[0].mxu0
      %2613 = vmatprep.mubr.f32.mxu0 0.0
      %2614 = vmatmul.mubr.f32.gmra.mrb[0].mxu0 %v2406
      %v2615 = vpop.f32.mrb[0].mxu0
      %v2616 = vadd.f32 0.0, %v2615
      %v2617 = vpop.f32.mrb[0].mxu0
      %2618 = vmatprep.mubr.f32.mxu0 0.0
      %2619 = vmatmul.mubr.f32.gmra.mrb[0].mxu0 %v2408
      %v2620 = vpop.f32.mrb[0].mxu0
      %v2621 = vadd.f32 0.0, %v2620
      %v2622 = vpop.f32.mrb[0].mxu0
      %2623 = vmatprep.mubr.f32.mxu0 0.0
      %2624 = vmatmul.mubr.f32.gmra.mrb[0].mxu0 %v2410
      %v2625 = vpop.f32.mrb[0].mxu0
      %v2626 = vadd.f32 0.0, %v2625
      %v2627 = vpop.f32.mrb[0].mxu0
      %2628 = vmatprep.mubr.f32.mxu0 0.0
      %2629 = vmatmul.mubr.f32.gmra.mrb[0].mxu0 %v2412
      %v2630 = vpop.f32.mrb[0].mxu0
      %v2631 = vadd.f32 0.0, %v2630
      %v2632 = vpop.f32.mrb[0].mxu0
      %2633 = vmatprep.mubr.f32.mxu0 0.0
      %2634 = vmatmul.mubr.f32.gmra.mrb[0].mxu0 %v2532
      %v2635 = vpop.f32.mrb[0].mxu0
      %v2636 = vadd.f32 0.0, %v2635
      %v2637 = vpop.f32.mrb[0].mxu0
      %2638 = vdwg.mxu0
      %v2639 = vadd.f32 %v2519, %v2601
      %v2640 = vadd.f32 %v2520, %v2606
      %v2641 = vadd.f32 %v2521, %v2611
      %v2642 = vadd.f32 %v2522, %v2616
      %v2643 = vadd.f32 %v2523, %v2621
      %v2644 = vadd.f32 %v2524, %v2626
      %v2645 = vadd.f32 %v2525, %v2631
      %v2646 = vadd.f32 %v2526, %v2636
      %s2647 = scalar_lea.vmem %s3, 64
      %v2648 = vld [vmem:[%s2647] sm:$0xff]
      %v2649 = vrot.slane %v1607, 2
      %v2650 = vrot.slane %v1608, 2
      %v2651 = vsel %vm1154, %v2649, %v2650
      %v2652 = vsel %vm253, %v2651, 0
      %2654 = vmatprep.subr.mxu0 0.0
      %2655 = vmatpush1.msra.mxu0 %v2648
      %2656 = vmatprep.subr.mxu0 0.0
      %2657 = vmatpush1.msra.mxu0 0.0
      %2658 = vmatprep.subr.mxu0 0.0
      %2659 = vmatpush1.msra.mxu0 0.0
      %2660 = vmatprep.subr.mxu0 0.0
      %2661 = vmatpush1.msra.mxu0 0.0
      %2662 = vmatprep.subr.mxu0 0.0
      %2663 = vmatpush1.msra.mxu0 0.0
      %2664 = vmatprep.subr.mxu0 0.0
      %2665 = vmatpush1.msra.mxu0 0.0
      %2666 = vmatprep.subr.mxu0 0.0
      %2667 = vmatpush1.msra.mxu0 0.0
      %2668 = vmatprep.subr.mxu0 0.0
      %2669 = vmatpush1.msra.mxu0 0.0
      %2670 = vmatprep.subr.mxu0 0.0
      %2671 = vmatpush1.msra.mxu0 0.0
      %2672 = vmatprep.subr.mxu0 0.0
      %2673 = vmatpush1.msra.mxu0 0.0
      %2674 = vmatprep.subr.mxu0 0.0
      %2675 = vmatpush1.msra.mxu0 0.0
      %2676 = vmatprep.subr.mxu0 0.0
      %2677 = vmatpush1.msra.mxu0 0.0
      %2678 = vmatprep.subr.mxu0 0.0
      %2679 = vmatpush1.msra.mxu0 0.0
      %2680 = vmatprep.subr.mxu0 0.0
      %2681 = vmatpush1.msra.mxu0 0.0
      %2682 = vmatprep.subr.mxu0 0.0
      %2683 = vmatpush1.msra.mxu0 0.0
      %2684 = vmatprep.subr.mxu0 0.0
      %2685 = vmatpush1.msra.mxu0 0.0
      %2686 = vmatprep.subr.mxu0 0.0
      %2687 = vmatpush1.msra.mxu0 0.0
      %2688 = vmatprep.subr.mxu0 0.0
      %2689 = vmatpush1.msra.mxu0 0.0
      %2690 = vmatprep.subr.mxu0 0.0
      %2691 = vmatpush1.msra.mxu0 0.0
      %2692 = vmatprep.subr.mxu0 0.0
      %2693 = vmatpush1.msra.mxu0 0.0
      %2694 = vmatprep.subr.mxu0 0.0
      %2695 = vmatpush1.msra.mxu0 0.0
      %2696 = vmatprep.subr.mxu0 0.0
      %2697 = vmatpush1.msra.mxu0 0.0
      %2698 = vmatprep.subr.mxu0 0.0
      %2699 = vmatpush1.msra.mxu0 0.0
      %2700 = vmatprep.subr.mxu0 0.0
      %2701 = vmatpush1.msra.mxu0 0.0
      %2702 = vmatprep.subr.mxu0 0.0
      %2703 = vmatpush1.msra.mxu0 0.0
      %2704 = vmatprep.subr.mxu0 0.0
      %2705 = vmatpush1.msra.mxu0 0.0
      %2706 = vmatprep.subr.mxu0 0.0
      %2707 = vmatpush1.msra.mxu0 0.0
      %2708 = vmatprep.subr.mxu0 0.0
      %2709 = vmatpush1.msra.mxu0 0.0
      %2710 = vmatprep.subr.mxu0 0.0
      %2711 = vmatpush1.msra.mxu0 0.0
      %2712 = vmatprep.subr.mxu0 0.0
      %2713 = vmatpush1.msra.mxu0 0.0
      %2714 = vmatprep.subr.mxu0 0.0
      %2715 = vmatpush1.msra.mxu0 0.0
      %2716 = vmatprep.subr.mxu0 0.0
      %2717 = vmatpush1.msra.mxu0 0.0
      %2718 = vmatprep.mubr.f32.mxu0 0.0
      %2719 = vmatmul.mubr.f32.gmra.mrb[0].mxu0 %v2402
      %v2720 = vpop.f32.mrb[0].mxu0
      %v2721 = vadd.f32 0.0, %v2720
      %v2722 = vpop.f32.mrb[0].mxu0
      %2723 = vmatprep.mubr.f32.mxu0 0.0
      %2724 = vmatmul.mubr.f32.gmra.mrb[0].mxu0 %v2404
      %v2725 = vpop.f32.mrb[0].mxu0
      %v2726 = vadd.f32 0.0, %v2725
      %v2727 = vpop.f32.mrb[0].mxu0
      %2728 = vmatprep.mubr.f32.mxu0 0.0
      %2729 = vmatmul.mubr.f32.gmra.mrb[0].mxu0 %v2406
      %v2730 = vpop.f32.mrb[0].mxu0
      %v2731 = vadd.f32 0.0, %v2730
      %v2732 = vpop.f32.mrb[0].mxu0
      %2733 = vmatprep.mubr.f32.mxu0 0.0
      %2734 = vmatmul.mubr.f32.gmra.mrb[0].mxu0 %v2408
      %v2735 = vpop.f32.mrb[0].mxu0
      %v2736 = vadd.f32 0.0, %v2735
      %v2737 = vpop.f32.mrb[0].mxu0
      %2738 = vmatprep.mubr.f32.mxu0 0.0
      %2739 = vmatmul.mubr.f32.gmra.mrb[0].mxu0 %v2410
      %v2740 = vpop.f32.mrb[0].mxu0
      %v2741 = vadd.f32 0.0, %v2740
      %v2742 = vpop.f32.mrb[0].mxu0
      %2743 = vmatprep.mubr.f32.mxu0 0.0
      %2744 = vmatmul.mubr.f32.gmra.mrb[0].mxu0 %v2412
      %v2745 = vpop.f32.mrb[0].mxu0
      %v2746 = vadd.f32 0.0, %v2745
      %v2747 = vpop.f32.mrb[0].mxu0
      %2748 = vmatprep.mubr.f32.mxu0 0.0
      %2749 = vmatmul.mubr.f32.gmra.mrb[0].mxu0 %v2532
      %v2750 = vpop.f32.mrb[0].mxu0
      %v2751 = vadd.f32 0.0, %v2750
      %v2752 = vpop.f32.mrb[0].mxu0
      %2753 = vmatprep.mubr.f32.mxu0 0.0
      %2754 = vmatmul.mubr.f32.gmra.mrb[0].mxu0 %v2652
      %v2755 = vpop.f32.mrb[0].mxu0
      %v2756 = vadd.f32 0.0, %v2755
      %v2757 = vpop.f32.mrb[0].mxu0
      %2758 = vdwg.mxu0
      %v2759 = vadd.f32 %v2639, %v2721
      %v2760 = vadd.f32 %v2640, %v2726
      %v2761 = vadd.f32 %v2641, %v2731
      %v2762 = vadd.f32 %v2642, %v2736
      %v2763 = vadd.f32 %v2643, %v2741
      %v2764 = vadd.f32 %v2644, %v2746
      %v2765 = vadd.f32 %v2645, %v2751
      %v2766 = vadd.f32 %v2646, %v2756
      %v2767 = vld [vmem:[%s4] sm:$0x1]
      %v2769 = vlaneseq
      %v2770 = vshrl.u32 %v2769, 7
      %v2771 = vsub.s32 0, %v2770
      %v2772 = vrot.slane %v2767, %v2771
      %v2774 = vadd.f32 %v2759, %v2772
      %v2775 = vadd.f32 %v2760, %v2772
      %v2776 = vadd.f32 %v2761, %v2772
      %v2777 = vadd.f32 %v2762, %v2772
      %v2778 = vadd.f32 %v2763, %v2772
      %v2779 = vadd.f32 %v2764, %v2772
      %v2780 = vadd.f32 %v2765, %v2772
      %v2781 = vadd.f32 %v2766, %v2772
      %v2782 = vmax.f32 %v2774, 0.0
      %v2783 = vmax.f32 %v2775, 0.0
      %v2784 = vmax.f32 %v2776, 0.0
      %v2785 = vmax.f32 %v2777, 0.0
      %v2786 = vmax.f32 %v2778, 0.0
      %v2787 = vmax.f32 %v2779, 0.0
      %v2788 = vmax.f32 %v2780, 0.0
      %v2789 = vmax.f32 %v2781, 0.0
      %2790 = vst.msk [vmem:[%s224] sm:$0xff] %vm253, %v2782
      %2791 = vst.msk [vmem:[%s224 + $0x8] sm:$0xff] %vm253, %v2783
      %2792 = vst.msk [vmem:[%s224 + $0x10] sm:$0xff] %vm253, %v2784
      %2793 = vst.msk [vmem:[%s224 + $0x18] sm:$0xff] %vm253, %v2785
      %2794 = vst.msk [vmem:[%s224 + $0x20] sm:$0xff] %vm253, %v2786
      %2795 = vst.msk [vmem:[%s224 + $0x28] sm:$0xff] %vm253, %v2787
      %2796 = vst.msk [vmem:[%s224 + $0x30] sm:$0xff] %vm253, %v2788
      %2797 = vst.msk [vmem:[%s224 + $0x38] sm:$0xff] %vm253, %v2789
      %p2798 = scmp.lt.s32.totalorder %s16, 1
      %s2799 = scalar_select %p2798, %s16, 1
      %s2800 = smul.addr %s2799, 8
      %s2801 = smul.addr %s2800, 8
      %s2802 = scalar_lea.vmem %s5, %s2801
      // Predicated region
      $region41: #{down_forward.1} parent=39 // pred_check
        %p2803 = pneg %p144
      $region42: #{down_forward.1} parent=39 // pred_check_branch
        %2805 = sbr.rel (%p2803) target = $region44
      $region43: #{down_forward.1} parent=39 // pred_region
        _
      $region44: #{down_forward.1} parent=39 // pred_fallthru
        _
    $region40: #{down_forward.1} parent=5 // pred_fallthru
      _
    %p2806 = scmp.le.s32.totalorder 2, %s11
    // Predicated region
    $region45: #{down_forward.1} parent=5 // pred_check
      %p2807 = pneg %p2806
    $region46: #{down_forward.1} parent=5 // pred_check_branch
      %2809 = sbr.rel (%p2807) target = $region48
    $region47: #{down_forward.1} parent=5 // pred_region
      %s2810 = ssub.s32 %s11, 2
      // Predicated region
      $region49: #{down_forward.1} parent=47 // pred_check
        %p2811 = pneg %p150
      $region50: #{down_forward.1} parent=47 // pred_check_branch
        %2813 = sbr.rel (%p2811) target = $region52
      $region51: #{down_forward.1} parent=47 // pred_region
        %p2814 = scmp.lt.s32.totalorder %s17, 1
        %s2815 = scalar_select %p2814, %s17, 1
        %s2816 = smul.addr %s2815, 8
        %s2817 = smul.addr %s2816, 8
        %s2818 = scalar_lea.vmem %s5, %s2817
      $region52: #{down_forward.1} parent=47 // pred_fallthru
        _
    $region48: #{down_forward.1} parent=5 // pred_fallthru
      _
  $region6: #{down_forward.1} parent=0 // loop_footer
    %s15 = sadd.s32 1, %s11
  $region7: #{down_forward.1} parent=0 // loop_footer_branch
    %10 = sbr.rel target = $region3
  $region8: #{down_forward.1} parent=0 // loop_exit
    _

</llo_original>
